<compile_context>
chip_gen: v6e
topology: v6e:2x2x1
jax: 0.10.0
libtpu: 0.0.40
codegen_flags: <defaults>
</compile_context>

<pallas_src>
import numpy as np
import jax
import jax.numpy as jnp
from jax.experimental import pallas as pl
from jax.experimental.pallas import tpu as pltpu

_PI = np.float32(np.pi)
_HALF_PI = np.float32(np.pi / 2.0)
_QUARTER_PI = np.float32(np.pi / 4.0)
_INV_PI = np.float32(1.0 / np.pi)
_NEG_TWO_OVER_PI = np.float32(-2.0 / np.pi)
_TAN_3PI_8 = np.float32(2.414213562373095)   # tan(3*pi/8)
_TAN_PI_8 = np.float32(0.4142135623730951)   # tan(pi/8)


def _atan_ratio_f32(n, d, den_nonneg=False):
    """Elementwise atan(n / d) for float32 (Cephes atanf polynomial).

    The Cephes range reduction is folded into a numerator/denominator select,
    so only ONE reciprocal is issued per call.  The reciprocal goes through
    the EUP (approx) + one Newton step on the VALU, which is cheaper than the
    full-precision divide and accurate to ~1 ulp-ish (far inside the 1e-4
    tolerance).  `den_nonneg=True` skips abs/sign handling of d (valid when d
    is known >= 0, e.g. d = sqrt(...)).
    """
    an = jnp.abs(n)
    ad = d if den_nonneg else jnp.abs(d)
    big = an > _TAN_3PI_8 * ad          # |n/d| > tan(3pi/8)
    mid = an > _TAN_PI_8 * ad           # |n/d| > tan(pi/8)
    num = jnp.where(big, -ad, jnp.where(mid, an - ad, an))
    den = jnp.where(big, an, jnp.where(mid, an + ad, ad))
    # Approx reciprocal (EUP slot, idle in this kernel) + 1 Newton refinement.
    r = pl.reciprocal(den, approx=True)
    r = r * (np.float32(2.0) - den * r)
    xr = num * r
    yr = jnp.where(big, _HALF_PI, jnp.where(mid, _QUARTER_PI, np.float32(0.0)))
    z2 = xr * xr
    p = ((np.float32(8.05374449538e-2) * z2 - np.float32(1.38776856032e-1)) * z2
         + np.float32(1.99777106478e-1)) * z2 - np.float32(3.33329491539e-1)
    res = yr + (p * z2 * xr + xr)
    if den_nonneg:
        neg = n < 0.0
    else:
        neg = jnp.logical_xor(n < 0.0, d < 0.0)
    return jnp.where(neg, -res, res)


def _theta_phi(d, gx, gy, gz, t0, t1, cr, sr):
    """Hot-path math shared by both kernel variants.  (rows, W) f32 tiles."""
    x_ = gx * d + t0
    y_ = gy * d + t1
    z = gz * d

    # cr = cos(rot*pi), sr = sin(rot*pi): per-batch scalars from SMEM.
    x = x_ * cr - y_ * sr
    y = x_ * sr + y_ * cr

    xy2 = x * x + y * y
    rs = jnp.sqrt(xy2 + z * z)                      # |(x,y,z)|
    # r = rs + 1e-5 ;  acos(z/r) = pi/2 - atan(z / sqrt(r^2 - z^2))
    # r^2 - z^2 == xy2 + 2e-5*rs + 1e-10   (exact expansion, no cancellation)
    d_ac = jnp.sqrt(xy2 + np.float32(2e-5) * rs + np.float32(1e-10))
    # theta = acos(z/r)/(pi/2) - 1  ==  -(2/pi) * atan(z / d_ac);   d_ac > 0.
    theta = _atan_ratio_f32(z, d_ac, den_nonneg=True) * _NEG_TWO_OVER_PI

    at = _atan_ratio_f32(y, x + np.float32(1e-5))
    quad = jnp.where(x < 0.0, jnp.where(y >= 0.0, _PI, -_PI), np.float32(0.0))
    phi = (at + quad) * _INV_PI
    return theta, phi


def _make_kernel(row_block, width, fused):
    def kernel(t0_ref, t1_ref, cr_ref, sr_ref,       # scalar prefetch (SMEM)
               d_ref, gx_ref, gy_ref, gz_ref,         # VMEM inputs
               *out_refs):                            # VMEM output(s)
        b = pl.program_id(1)
        theta, phi = _theta_phi(
            d_ref[0], gx_ref[...], gy_ref[...], gz_ref[...],
            t0_ref[b], t1_ref[b], cr_ref[b], sr_ref[b])
        if fused:
            # Per-pixel interleave: out[:, 2w] = theta[:, w], out[:, 2w+1] = phi[:, w]
            inter = jnp.stack([theta, phi], axis=-1).reshape(row_block, 2 * width)
            out_refs[0][0] = inter
        else:
            out_refs[0][0] = theta
            out_refs[1][0] = phi
    return kernel


def _vmem_limit_bytes():
    """Per-generation VMEM limit: ~3/4 of physical capacity, capped at 100 MiB."""
    cap = 64 * 1024 * 1024                     # conservative default (v7x)
    try:
        info = pltpu.get_tpu_info()
        cap = int(getattr(info, "vmem_capacity_bytes", cap) or cap)
    except Exception:
        pass
    return min((cap * 3) // 4, 100 * 1024 * 1024)


def _pick_row_block(H, W, B, vmem_limit_bytes):
    """Byte-budgeted row-block size (multiple of 8 unless full-extent)."""
    # Per-block-row VMEM estimate: depth(x2 buffers) + gx/gy/gz(x2 each)
    # + 2W-wide output(x2) + ~8 f32 tile temporaries for the math.
    per_row = 4 * W * (2 + 6 + 4 + 8)          # = 80 * W bytes / row
    th = max(8, vmem_limit_bytes // per_row)
    th = min(th, 2048, H)
    if th >= H:
        th = H                                 # full-extent block is always legal
    else:
        th = max(8, (th // 8) * 8)             # (8,128) block-shape rule
        # Prefer a full last block if achievable without shrinking much.
        lo = max(8, (2 * th) // 3)
        for t in range(th, lo - 1, -8):
            if H % t == 0:
                th = t
                break
    # v7x has 2 TensorCores: expose >= 2 parallel blocks when batch can't.
    if B < 2 and pl.cdiv(H, th) < 2 and H >= 16:
        th = max(8, (((H + 1) // 2 + 7) // 8) * 8)
    return th


def _pallas_forward(d, trans0, trans1, cr, sr, gx, gy, gz, *, fused):
    B, H, W = d.shape
    vmem_limit = _vmem_limit_bytes()
    TH = _pick_row_block(H, W, B, vmem_limit)
    HB = pl.cdiv(H, TH)

    def dmap(h, b, t0, t1, c, s):        # depth / output blocks
        return (b, h, 0)

    def gmap(h, b, t0, t1, c, s):        # constant basis grids: batch-invariant
        return (h, 0)

    in_specs = [
        pl.BlockSpec((1, TH, W), dmap),  # depth
        pl.BlockSpec((TH, W), gmap),     # gx
        pl.BlockSpec((TH, W), gmap),     # gy
        pl.BlockSpec((TH, W), gmap),     # gz
    ]
    if fused:
        out_specs = pl.BlockSpec((1, TH, 2 * W), dmap)
        out_shape = jax.ShapeDtypeStruct((B, H, 2 * W), jnp.float32)
    else:
        out_specs = [pl.BlockSpec((1, TH, W), dmap),
                     pl.BlockSpec((1, TH, W), dmap)]
        out_shape = (jax.ShapeDtypeStruct((B, H, W), jnp.float32),
                     jax.ShapeDtypeStruct((B, H, W), jnp.float32))

    grid_spec = pltpu.PrefetchScalarGridSpec(
        num_scalar_prefetch=4,
        grid=(HB, B),
        in_specs=in_specs,
        out_specs=out_specs,
    )

    n_elem = B * H * W
    cost = pl.CostEstimate(flops=90 * n_elem,
                           transcendentals=4 * n_elem,        # 2 sqrt + 2 recip
                           bytes_accessed=24 * n_elem)

    out = pl.pallas_call(
        _make_kernel(TH, W, fused),
        out_shape=out_shape,
        grid_spec=grid_spec,
        compiler_params=pltpu.CompilerParams(
            dimension_semantics=("parallel", "parallel"),
            vmem_limit_bytes=vmem_limit),
        cost_estimate=cost,
    )(trans0, trans1, cr, sr, d, gx, gy, gz)

    if fused:
        return out.reshape(B, H, W, 2)            # free reshape (minor-dim split)
    theta, phi = out
    return jnp.stack([theta, phi], axis=-1)


def depth3d_grid_gen(depth, trans0, trans1, rotate, gx, gy, gz, *, fused=True):
    """depth: (B, H, W, 1) f32; trans0/trans1/rotate: (B,) f32 -> (B, H, W, 2)."""
    B, H, W, _ = depth.shape
    d = depth[..., 0].astype(jnp.float32)
    rot = rotate.astype(jnp.float32)
    # Hoisted per-batch rotation transcendentals (scalar prefetch, SMEM).
    cr = jnp.cos(rot * _PI)
    sr = jnp.sin(rot * _PI)
    t0 = trans0.astype(jnp.float32)
    t1 = trans1.astype(jnp.float32)
    if fused:
        try:
            # Primary: fused interleaved output (no extra HBM pass for the concat).
            return _pallas_forward(d, t0, t1, cr, sr, gx, gy, gz, fused=True)
        except Exception:
            # In-library fallback (only triggers if the interleave fails to
            # lower on this Mosaic build, when called eagerly).
            pass
    return _pallas_forward(d, t0, t1, cr, sr, gx, gy, gz, fused=False)


def make_basis_grid(H, W):
    """Replicates the numpy/__init__ setup of the PyTorch module (glue)."""
    g0 = np.repeat((-1.0 + (2.0 / H) * np.arange(H))[:, None], W, axis=1)
    g1 = np.repeat((-1.0 + (2.0 / W) * np.arange(W))[None, :], H, axis=0)
    theta_g = g0.astype(np.float32) * np.pi / 2.0 + np.pi / 2.0
    phi_g = g1.astype(np.float32) * np.pi
    gx = np.sin(theta_g) * np.cos(phi_g)
    gy = np.sin(theta_g) * np.sin(phi_g)
    gz = np.cos(theta_g)
    return (gx.astype(np.float32), gy.astype(np.float32), gz.astype(np.float32))


def reference(depth, trans0, trans1, rotate, gx, gy, gz):
    """Pure-JAX reference mirroring the PyTorch forward."""
    d = depth[..., 0]
    x_ = gx[None] * d + trans0[:, None, None]
    y_ = gy[None] * d + trans1[:, None, None]
    z = gz[None] * d
    rz = rotate[:, None, None] * np.pi * jnp.ones_like(d)
    x = x_ * jnp.cos(rz) - y_ * jnp.sin(rz)
    y = x_ * jnp.sin(rz) + y_ * jnp.cos(rz)
    r = jnp.sqrt(x * x + y * y + z * z) + 1e-05
    theta = jnp.arccos(z / r) / (np.pi / 2.0) - 1.0
    phi = jnp.arctan(y / (x + 1e-05)) + np.pi * (x < 0).astype(jnp.float32) * (
        (y >= 0).astype(jnp.float32) - (y < 0).astype(jnp.float32))
    phi = phi / np.pi
    return jnp.stack([theta, phi], axis=-1)


if __name__ == "__main__":
    B, H, W = 2, 8, 128

    key = jax.random.PRNGKey(0)
    k1, k2, k3, k4 = jax.random.split(key, 4)
    depth = jax.random.uniform(k1, (B, H, W, 1), jnp.float32, 0.1, 2.0)
    trans0 = jax.random.uniform(k2, (B,), jnp.float32, -0.5, 0.5)
    trans1 = jax.random.uniform(k3, (B,), jnp.float32, -0.5, 0.5)
    rotate = jax.random.uniform(k4, (B,), jnp.float32, -1.0, 1.0)

    gx, gy, gz = make_basis_grid(H, W)
    gx, gy, gz = jnp.asarray(gx), jnp.asarray(gy), jnp.asarray(gz)

    ref = reference(depth, trans0, trans1, rotate, gx, gy, gz)

    out = depth3d_grid_gen(depth, trans0, trans1, rotate, gx, gy, gz)
    out = jax.block_until_ready(out)

    np.testing.assert_allclose(np.asarray(out), np.asarray(ref),
                               atol=1e-4, rtol=1e-4)
    assert out.shape == (B, H, W, 2) and out.dtype == jnp.float32
    print("KERNEL_OK")
</pallas_src>

<mosaic_0001>
module attributes {stable_mosaic.version = 11 : i64} {
  func.func @kernel(%arg0: i32, %arg1: i32, %arg2: memref<2xf32, #tpu.memory_space<smem>>, %arg3: memref<2xf32, #tpu.memory_space<smem>>, %arg4: memref<2xf32, #tpu.memory_space<smem>>, %arg5: memref<2xf32, #tpu.memory_space<smem>>, %arg6: memref<1x8x128xf32, #tpu.memory_space<vmem>>, %arg7: memref<8x128xf32, #tpu.memory_space<vmem>>, %arg8: memref<8x128xf32, #tpu.memory_space<vmem>>, %arg9: memref<8x128xf32, #tpu.memory_space<vmem>>, %arg10: memref<1x8x256xf32, #tpu.memory_space<vmem>>) attributes {dimension_semantics = [#tpu.dimension_semantics<parallel>, #tpu.dimension_semantics<parallel>], iteration_bounds = array<i64: 1, 2>, scalar_prefetch = 4 : i64, scratch_operands = 0 : i64, tpu.core_type = #tpu.core_type<tc>, window_params = [{transform_indices = @transform_0, window_bounds = array<i64: 1, 8, 128>}, {transform_indices = @transform_1, window_bounds = array<i64: 8, 128>}, {transform_indices = @transform_2, window_bounds = array<i64: 8, 128>}, {transform_indices = @transform_3, window_bounds = array<i64: 8, 128>}, {transform_indices = @transform_4, window_bounds = array<i64: 1, 8, 256>}]} {
    %c0 = arith.constant 0 : index
    %c0_0 = arith.constant 0 : index
    %c0_1 = arith.constant 0 : index
    %0 = vector.load %arg6[%c0, %c0_0, %c0_1] : memref<1x8x128xf32, #tpu.memory_space<vmem>>, vector<1x8x128xf32>
    %1 = vector.shape_cast %0 : vector<1x8x128xf32> to vector<8x128xf32>
    %c0_2 = arith.constant 0 : index
    %c0_3 = arith.constant 0 : index
    %2 = vector.load %arg7[%c0_2, %c0_3] : memref<8x128xf32, #tpu.memory_space<vmem>>, vector<8x128xf32>
    %c0_4 = arith.constant 0 : index
    %c0_5 = arith.constant 0 : index
    %3 = vector.load %arg8[%c0_4, %c0_5] : memref<8x128xf32, #tpu.memory_space<vmem>>, vector<8x128xf32>
    %c0_6 = arith.constant 0 : index
    %c0_7 = arith.constant 0 : index
    %4 = vector.load %arg9[%c0_6, %c0_7] : memref<8x128xf32, #tpu.memory_space<vmem>>, vector<8x128xf32>
    %5 = arith.index_cast %arg1 : i32 to index
    %6 = memref.load %arg2[%5] : memref<2xf32, #tpu.memory_space<smem>>
    %7 = arith.index_cast %arg1 : i32 to index
    %8 = memref.load %arg3[%7] : memref<2xf32, #tpu.memory_space<smem>>
    %9 = arith.index_cast %arg1 : i32 to index
    %10 = memref.load %arg4[%9] : memref<2xf32, #tpu.memory_space<smem>>
    %11 = arith.index_cast %arg1 : i32 to index
    %12 = memref.load %arg5[%11] : memref<2xf32, #tpu.memory_space<smem>>
    %13 = arith.mulf %2, %1 : vector<8x128xf32>
    %14 = vector.broadcast %6 : f32 to vector<8x128xf32>
    %15 = arith.addf %13, %14 : vector<8x128xf32>
    %16 = arith.mulf %3, %1 : vector<8x128xf32>
    %17 = vector.broadcast %8 : f32 to vector<8x128xf32>
    %18 = arith.addf %16, %17 : vector<8x128xf32>
    %19 = arith.mulf %4, %1 : vector<8x128xf32>
    %20 = vector.broadcast %10 : f32 to vector<8x128xf32>
    %21 = arith.mulf %15, %20 : vector<8x128xf32>
    %22 = vector.broadcast %12 : f32 to vector<8x128xf32>
    %23 = arith.mulf %18, %22 : vector<8x128xf32>
    %24 = arith.subf %21, %23 : vector<8x128xf32>
    %25 = vector.broadcast %12 : f32 to vector<8x128xf32>
    %26 = arith.mulf %15, %25 : vector<8x128xf32>
    %27 = vector.broadcast %10 : f32 to vector<8x128xf32>
    %28 = arith.mulf %18, %27 : vector<8x128xf32>
    %29 = arith.addf %26, %28 : vector<8x128xf32>
    %30 = arith.mulf %24, %24 : vector<8x128xf32>
    %31 = arith.mulf %29, %29 : vector<8x128xf32>
    %32 = arith.addf %30, %31 : vector<8x128xf32>
    %33 = arith.mulf %19, %19 : vector<8x128xf32>
    %34 = arith.addf %32, %33 : vector<8x128xf32>
    %35 = math.sqrt %34 : vector<8x128xf32>
    %cst = arith.constant 2.000000e-05 : f32
    %36 = vector.broadcast %cst : f32 to vector<8x128xf32>
    %37 = arith.mulf %36, %35 : vector<8x128xf32>
    %38 = arith.addf %32, %37 : vector<8x128xf32>
    %cst_8 = arith.constant 1.000000e-10 : f32
    %39 = vector.broadcast %cst_8 : f32 to vector<8x128xf32>
    %40 = arith.addf %38, %39 : vector<8x128xf32>
    %41 = math.sqrt %40 : vector<8x128xf32>
    %42 = math.absf %19 : vector<8x128xf32>
    %cst_9 = arith.constant 2.41421366 : f32
    %43 = vector.broadcast %cst_9 : f32 to vector<8x128xf32>
    %44 = arith.mulf %43, %41 : vector<8x128xf32>
    %45 = arith.cmpf ogt, %42, %44 : vector<8x128xf32>
    %cst_10 = arith.constant 0.414213568 : f32
    %46 = vector.broadcast %cst_10 : f32 to vector<8x128xf32>
    %47 = arith.mulf %46, %41 : vector<8x128xf32>
    %48 = arith.cmpf ogt, %42, %47 : vector<8x128xf32>
    %cst_11 = arith.constant 0.000000e+00 : f32
    %49 = vector.broadcast %cst_11 : f32 to vector<8x128xf32>
    %50 = arith.subf %49, %41 : vector<8x128xf32>
    %51 = arith.subf %42, %41 : vector<8x128xf32>
    %52 = arith.select %48, %51, %42 : vector<8x128xi1>, vector<8x128xf32>
    %53 = arith.select %45, %50, %52 : vector<8x128xi1>, vector<8x128xf32>
    %54 = arith.addf %42, %41 : vector<8x128xf32>
    %55 = arith.select %48, %54, %41 : vector<8x128xi1>, vector<8x128xf32>
    %56 = arith.select %45, %42, %55 : vector<8x128xi1>, vector<8x128xf32>
    %57 = tpu.reciprocal %56 {approx = true} : vector<8x128xf32> -> vector<8x128xf32>
    %58 = arith.mulf %56, %57 : vector<8x128xf32>
    %cst_12 = arith.constant 2.000000e+00 : f32
    %59 = vector.broadcast %cst_12 : f32 to vector<8x128xf32>
    %60 = arith.subf %59, %58 : vector<8x128xf32>
    %61 = arith.mulf %57, %60 : vector<8x128xf32>
    %62 = arith.mulf %53, %61 : vector<8x128xf32>
    %cst_13 = arith.constant 0.785398185 : f32
    %cst_14 = arith.constant 0.000000e+00 : f32
    %63 = vector.broadcast %cst_13 : f32 to vector<8x128xf32>
    %64 = vector.broadcast %cst_14 : f32 to vector<8x128xf32>
    %65 = arith.select %48, %63, %64 : vector<8x128xi1>, vector<8x128xf32>
    %cst_15 = arith.constant 1.57079637 : f32
    %66 = vector.broadcast %cst_15 : f32 to vector<8x128xf32>
    %67 = arith.select %45, %66, %65 : vector<8x128xi1>, vector<8x128xf32>
    %68 = arith.mulf %62, %62 : vector<8x128xf32>
    %cst_16 = arith.constant 0.0805374458 : f32
    %69 = vector.broadcast %cst_16 : f32 to vector<8x128xf32>
    %70 = arith.mulf %69, %68 : vector<8x128xf32>
    %cst_17 = arith.constant 0.138776854 : f32
    %71 = vector.broadcast %cst_17 : f32 to vector<8x128xf32>
    %72 = arith.subf %70, %71 : vector<8x128xf32>
    %73 = arith.mulf %72, %68 : vector<8x128xf32>
    %cst_18 = arith.constant 0.199777111 : f32
    %74 = vector.broadcast %cst_18 : f32 to vector<8x128xf32>
    %75 = arith.addf %73, %74 : vector<8x128xf32>
    %76 = arith.mulf %75, %68 : vector<8x128xf32>
    %cst_19 = arith.constant 0.333329499 : f32
    %77 = vector.broadcast %cst_19 : f32 to vector<8x128xf32>
    %78 = arith.subf %76, %77 : vector<8x128xf32>
    %79 = arith.mulf %78, %68 : vector<8x128xf32>
    %80 = arith.mulf %79, %62 : vector<8x128xf32>
    %81 = arith.addf %80, %62 : vector<8x128xf32>
    %82 = arith.addf %67, %81 : vector<8x128xf32>
    %cst_20 = arith.constant 0.000000e+00 : f32
    %83 = vector.broadcast %cst_20 : f32 to vector<8x128xf32>
    %84 = arith.cmpf olt, %19, %83 : vector<8x128xf32>
    %cst_21 = arith.constant 0.000000e+00 : f32
    %85 = vector.broadcast %cst_21 : f32 to vector<8x128xf32>
    %86 = arith.subf %85, %82 : vector<8x128xf32>
    %87 = arith.select %84, %86, %82 : vector<8x128xi1>, vector<8x128xf32>
    %cst_22 = arith.constant -0.636619746 : f32
    %88 = vector.broadcast %cst_22 : f32 to vector<8x128xf32>
    %89 = arith.mulf %87, %88 : vector<8x128xf32>
    %cst_23 = arith.constant 9.99999974E-6 : f32
    %90 = vector.broadcast %cst_23 : f32 to vector<8x128xf32>
    %91 = arith.addf %24, %90 : vector<8x128xf32>
    %92 = math.absf %29 : vector<8x128xf32>
    %93 = math.absf %91 : vector<8x128xf32>
    %cst_24 = arith.constant 2.41421366 : f32
    %94 = vector.broadcast %cst_24 : f32 to vector<8x128xf32>
    %95 = arith.mulf %94, %93 : vector<8x128xf32>
    %96 = arith.cmpf ogt, %92, %95 : vector<8x128xf32>
    %cst_25 = arith.constant 0.414213568 : f32
    %97 = vector.broadcast %cst_25 : f32 to vector<8x128xf32>
    %98 = arith.mulf %97, %93 : vector<8x128xf32>
    %99 = arith.cmpf ogt, %92, %98 : vector<8x128xf32>
    %cst_26 = arith.constant 0.000000e+00 : f32
    %100 = vector.broadcast %cst_26 : f32 to vector<8x128xf32>
    %101 = arith.subf %100, %93 : vector<8x128xf32>
    %102 = arith.subf %92, %93 : vector<8x128xf32>
    %103 = arith.select %99, %102, %92 : vector<8x128xi1>, vector<8x128xf32>
    %104 = arith.select %96, %101, %103 : vector<8x128xi1>, vector<8x128xf32>
    %105 = arith.addf %92, %93 : vector<8x128xf32>
    %106 = arith.select %99, %105, %93 : vector<8x128xi1>, vector<8x128xf32>
    %107 = arith.select %96, %92, %106 : vector<8x128xi1>, vector<8x128xf32>
    %108 = tpu.reciprocal %107 {approx = true} : vector<8x128xf32> -> vector<8x128xf32>
    %109 = arith.mulf %107, %108 : vector<8x128xf32>
    %cst_27 = arith.constant 2.000000e+00 : f32
    %110 = vector.broadcast %cst_27 : f32 to vector<8x128xf32>
    %111 = arith.subf %110, %109 : vector<8x128xf32>
    %112 = arith.mulf %108, %111 : vector<8x128xf32>
    %113 = arith.mulf %104, %112 : vector<8x128xf32>
    %cst_28 = arith.constant 0.785398185 : f32
    %cst_29 = arith.constant 0.000000e+00 : f32
    %114 = vector.broadcast %cst_28 : f32 to vector<8x128xf32>
    %115 = vector.broadcast %cst_29 : f32 to vector<8x128xf32>
    %116 = arith.select %99, %114, %115 : vector<8x128xi1>, vector<8x128xf32>
    %cst_30 = arith.constant 1.57079637 : f32
    %117 = vector.broadcast %cst_30 : f32 to vector<8x128xf32>
    %118 = arith.select %96, %117, %116 : vector<8x128xi1>, vector<8x128xf32>
    %119 = arith.mulf %113, %113 : vector<8x128xf32>
    %cst_31 = arith.constant 0.0805374458 : f32
    %120 = vector.broadcast %cst_31 : f32 to vector<8x128xf32>
    %121 = arith.mulf %120, %119 : vector<8x128xf32>
    %cst_32 = arith.constant 0.138776854 : f32
    %122 = vector.broadcast %cst_32 : f32 to vector<8x128xf32>
    %123 = arith.subf %121, %122 : vector<8x128xf32>
    %124 = arith.mulf %123, %119 : vector<8x128xf32>
    %cst_33 = arith.constant 0.199777111 : f32
    %125 = vector.broadcast %cst_33 : f32 to vector<8x128xf32>
    %126 = arith.addf %124, %125 : vector<8x128xf32>
    %127 = arith.mulf %126, %119 : vector<8x128xf32>
    %cst_34 = arith.constant 0.333329499 : f32
    %128 = vector.broadcast %cst_34 : f32 to vector<8x128xf32>
    %129 = arith.subf %127, %128 : vector<8x128xf32>
    %130 = arith.mulf %129, %119 : vector<8x128xf32>
    %131 = arith.mulf %130, %113 : vector<8x128xf32>
    %132 = arith.addf %131, %113 : vector<8x128xf32>
    %133 = arith.addf %118, %132 : vector<8x128xf32>
    %cst_35 = arith.constant 0.000000e+00 : f32
    %134 = vector.broadcast %cst_35 : f32 to vector<8x128xf32>
    %135 = arith.cmpf olt, %29, %134 : vector<8x128xf32>
    %cst_36 = arith.constant 0.000000e+00 : f32
    %136 = vector.broadcast %cst_36 : f32 to vector<8x128xf32>
    %137 = arith.cmpf olt, %91, %136 : vector<8x128xf32>
    %138 = arith.xori %135, %137 : vector<8x128xi1>
    %cst_37 = arith.constant 0.000000e+00 : f32
    %139 = vector.broadcast %cst_37 : f32 to vector<8x128xf32>
    %140 = arith.subf %139, %133 : vector<8x128xf32>
    %141 = arith.select %138, %140, %133 : vector<8x128xi1>, vector<8x128xf32>
    %cst_38 = arith.constant 0.000000e+00 : f32
    %142 = vector.broadcast %cst_38 : f32 to vector<8x128xf32>
    %143 = arith.cmpf olt, %24, %142 : vector<8x128xf32>
    %cst_39 = arith.constant 0.000000e+00 : f32
    %144 = vector.broadcast %cst_39 : f32 to vector<8x128xf32>
    %145 = arith.cmpf oge, %29, %144 : vector<8x128xf32>
    %cst_40 = arith.constant 3.14159274 : f32
    %cst_41 = arith.constant -3.14159274 : f32
    %146 = vector.broadcast %cst_40 : f32 to vector<8x128xf32>
    %147 = vector.broadcast %cst_41 : f32 to vector<8x128xf32>
    %148 = arith.select %145, %146, %147 : vector<8x128xi1>, vector<8x128xf32>
    %cst_42 = arith.constant 0.000000e+00 : f32
    %149 = vector.broadcast %cst_42 : f32 to vector<8x128xf32>
    %150 = arith.select %143, %148, %149 : vector<8x128xi1>, vector<8x128xf32>
    %151 = arith.addf %141, %150 : vector<8x128xf32>
    %cst_43 = arith.constant 0.318309873 : f32
    %152 = vector.broadcast %cst_43 : f32 to vector<8x128xf32>
    %153 = arith.mulf %151, %152 : vector<8x128xf32>
    %154 = vector.shape_cast %89 : vector<8x128xf32> to vector<8x128x1xf32>
    %155 = vector.shape_cast %153 : vector<8x128xf32> to vector<8x128x1xf32>
    %156 = tpu.concatenate %154, %155 in 2 : vector<8x128x1xf32>, vector<8x128x1xf32> -> vector<8x128x2xf32>
    %157 = vector.shape_cast %156 : vector<8x128x2xf32> to vector<8x256xf32>
    %c0_44 = arith.constant 0 : index
    %c0_45 = arith.constant 0 : index
    %c0_46 = arith.constant 0 : index
    %158 = vector.load %arg10[%c0_44, %c0_45, %c0_46] : memref<1x8x256xf32, #tpu.memory_space<vmem>>, vector<1x8x256xf32>
    %159 = vector.shape_cast %158 : vector<1x8x256xf32> to vector<8x256xf32>
    %160 = vector.shape_cast %157 : vector<8x256xf32> to vector<1x8x256xf32>
    tpu.vector_store %arg10[%c0_44, %c0_45, %c0_46], %160 {strides = array<i32>} : memref<1x8x256xf32, #tpu.memory_space<vmem>>, vector<1x8x256xf32>,
    return
  }
  func.func @transform_0(%arg0: i32, %arg1: i32, %arg2: memref<2xf32, #tpu.memory_space<smem>>, %arg3: memref<2xf32, #tpu.memory_space<smem>>, %arg4: memref<2xf32, #tpu.memory_space<smem>>, %arg5: memref<2xf32, #tpu.memory_space<smem>>) -> (i32, i32, i32) {
    %c0_i32 = arith.constant 0 : i32
    %c0_i32_0 = arith.constant 0 : i32
    return %arg1, %arg0, %c0_i32 : i32, i32, i32
  }
  func.func @transform_1(%arg0: i32, %arg1: i32, %arg2: memref<2xf32, #tpu.memory_space<smem>>, %arg3: memref<2xf32, #tpu.memory_space<smem>>, %arg4: memref<2xf32, #tpu.memory_space<smem>>, %arg5: memref<2xf32, #tpu.memory_space<smem>>) -> (i32, i32) {
    %c0_i32 = arith.constant 0 : i32
    %c0_i32_0 = arith.constant 0 : i32
    return %arg0, %c0_i32 : i32, i32
  }
  func.func @transform_2(%arg0: i32, %arg1: i32, %arg2: memref<2xf32, #tpu.memory_space<smem>>, %arg3: memref<2xf32, #tpu.memory_space<smem>>, %arg4: memref<2xf32, #tpu.memory_space<smem>>, %arg5: memref<2xf32, #tpu.memory_space<smem>>) -> (i32, i32) {
    %c0_i32 = arith.constant 0 : i32
    %c0_i32_0 = arith.constant 0 : i32
    return %arg0, %c0_i32 : i32, i32
  }
  func.func @transform_3(%arg0: i32, %arg1: i32, %arg2: memref<2xf32, #tpu.memory_space<smem>>, %arg3: memref<2xf32, #tpu.memory_space<smem>>, %arg4: memref<2xf32, #tpu.memory_space<smem>>, %arg5: memref<2xf32, #tpu.memory_space<smem>>) -> (i32, i32) {
    %c0_i32 = arith.constant 0 : i32
    %c0_i32_0 = arith.constant 0 : i32
    return %arg0, %c0_i32 : i32, i32
  }
  func.func @transform_4(%arg0: i32, %arg1: i32, %arg2: memref<2xf32, #tpu.memory_space<smem>>, %arg3: memref<2xf32, #tpu.memory_space<smem>>, %arg4: memref<2xf32, #tpu.memory_space<smem>>, %arg5: memref<2xf32, #tpu.memory_space<smem>>) -> (i32, i32, i32) {
    %c0_i32 = arith.constant 0 : i32
    %c0_i32_0 = arith.constant 0 : i32
    return %arg1, %arg0, %c0_i32 : i32, i32, i32
  }
}

module attributes {stable_mosaic.version = 11 : i64} {
  func.func @kernel(%arg0: i32, %arg1: i32, %arg2: memref<2xf32, #tpu.memory_space<smem>>, %arg3: memref<2xf32, #tpu.memory_space<smem>>, %arg4: memref<2xf32, #tpu.memory_space<smem>>, %arg5: memref<2xf32, #tpu.memory_space<smem>>, %arg6: memref<1x8x128xf32, #tpu.memory_space<vmem>>, %arg7: memref<8x128xf32, #tpu.memory_space<vmem>>, %arg8: memref<8x128xf32, #tpu.memory_space<vmem>>, %arg9: memref<8x128xf32, #tpu.memory_space<vmem>>, %arg10: memref<1x8x128xf32, #tpu.memory_space<vmem>>, %arg11: memref<1x8x128xf32, #tpu.memory_space<vmem>>) attributes {dimension_semantics = [#tpu.dimension_semantics<parallel>, #tpu.dimension_semantics<parallel>], iteration_bounds = array<i64: 1, 2>, scalar_prefetch = 4 : i64, scratch_operands = 0 : i64, tpu.core_type = #tpu.core_type<tc>, window_params = [{transform_indices = @transform_0, window_bounds = array<i64: 1, 8, 128>}, {transform_indices = @transform_1, window_bounds = array<i64: 8, 128>}, {transform_indices = @transform_2, window_bounds = array<i64: 8, 128>}, {transform_indices = @transform_3, window_bounds = array<i64: 8, 128>}, {transform_indices = @transform_4, window_bounds = array<i64: 1, 8, 128>}, {transform_indices = @transform_5, window_bounds = array<i64: 1, 8, 128>}]} {
    %c0 = arith.constant 0 : index
    %c0_0 = arith.constant 0 : index
    %c0_1 = arith.constant 0 : index
    %0 = vector.load %arg6[%c0, %c0_0, %c0_1] : memref<1x8x128xf32, #tpu.memory_space<vmem>>, vector<1x8x128xf32>
    %1 = vector.shape_cast %0 : vector<1x8x128xf32> to vector<8x128xf32>
    %c0_2 = arith.constant 0 : index
    %c0_3 = arith.constant 0 : index
    %2 = vector.load %arg7[%c0_2, %c0_3] : memref<8x128xf32, #tpu.memory_space<vmem>>, vector<8x128xf32>
    %c0_4 = arith.constant 0 : index
    %c0_5 = arith.constant 0 : index
    %3 = vector.load %arg8[%c0_4, %c0_5] : memref<8x128xf32, #tpu.memory_space<vmem>>, vector<8x128xf32>
    %c0_6 = arith.constant 0 : index
    %c0_7 = arith.constant 0 : index
    %4 = vector.load %arg9[%c0_6, %c0_7] : memref<8x128xf32, #tpu.memory_space<vmem>>, vector<8x128xf32>
    %5 = arith.index_cast %arg1 : i32 to index
    %6 = memref.load %arg2[%5] : memref<2xf32, #tpu.memory_space<smem>>
    %7 = arith.index_cast %arg1 : i32 to index
    %8 = memref.load %arg3[%7] : memref<2xf32, #tpu.memory_space<smem>>
    %9 = arith.index_cast %arg1 : i32 to index
    %10 = memref.load %arg4[%9] : memref<2xf32, #tpu.memory_space<smem>>
    %11 = arith.index_cast %arg1 : i32 to index
    %12 = memref.load %arg5[%11] : memref<2xf32, #tpu.memory_space<smem>>
    %13 = arith.mulf %2, %1 : vector<8x128xf32>
    %14 = vector.broadcast %6 : f32 to vector<8x128xf32>
    %15 = arith.addf %13, %14 : vector<8x128xf32>
    %16 = arith.mulf %3, %1 : vector<8x128xf32>
    %17 = vector.broadcast %8 : f32 to vector<8x128xf32>
    %18 = arith.addf %16, %17 : vector<8x128xf32>
    %19 = arith.mulf %4, %1 : vector<8x128xf32>
    %20 = vector.broadcast %10 : f32 to vector<8x128xf32>
    %21 = arith.mulf %15, %20 : vector<8x128xf32>
    %22 = vector.broadcast %12 : f32 to vector<8x128xf32>
    %23 = arith.mulf %18, %22 : vector<8x128xf32>
    %24 = arith.subf %21, %23 : vector<8x128xf32>
    %25 = vector.broadcast %12 : f32 to vector<8x128xf32>
    %26 = arith.mulf %15, %25 : vector<8x128xf32>
    %27 = vector.broadcast %10 : f32 to vector<8x128xf32>
    %28 = arith.mulf %18, %27 : vector<8x128xf32>
    %29 = arith.addf %26, %28 : vector<8x128xf32>
    %30 = arith.mulf %24, %24 : vector<8x128xf32>
    %31 = arith.mulf %29, %29 : vector<8x128xf32>
    %32 = arith.addf %30, %31 : vector<8x128xf32>
    %33 = arith.mulf %19, %19 : vector<8x128xf32>
    %34 = arith.addf %32, %33 : vector<8x128xf32>
    %35 = math.sqrt %34 : vector<8x128xf32>
    %cst = arith.constant 2.000000e-05 : f32
    %36 = vector.broadcast %cst : f32 to vector<8x128xf32>
    %37 = arith.mulf %36, %35 : vector<8x128xf32>
    %38 = arith.addf %32, %37 : vector<8x128xf32>
    %cst_8 = arith.constant 1.000000e-10 : f32
    %39 = vector.broadcast %cst_8 : f32 to vector<8x128xf32>
    %40 = arith.addf %38, %39 : vector<8x128xf32>
    %41 = math.sqrt %40 : vector<8x128xf32>
    %42 = math.absf %19 : vector<8x128xf32>
    %cst_9 = arith.constant 2.41421366 : f32
    %43 = vector.broadcast %cst_9 : f32 to vector<8x128xf32>
    %44 = arith.mulf %43, %41 : vector<8x128xf32>
    %45 = arith.cmpf ogt, %42, %44 : vector<8x128xf32>
    %cst_10 = arith.constant 0.414213568 : f32
    %46 = vector.broadcast %cst_10 : f32 to vector<8x128xf32>
    %47 = arith.mulf %46, %41 : vector<8x128xf32>
    %48 = arith.cmpf ogt, %42, %47 : vector<8x128xf32>
    %cst_11 = arith.constant 0.000000e+00 : f32
    %49 = vector.broadcast %cst_11 : f32 to vector<8x128xf32>
    %50 = arith.subf %49, %41 : vector<8x128xf32>
    %51 = arith.subf %42, %41 : vector<8x128xf32>
    %52 = arith.select %48, %51, %42 : vector<8x128xi1>, vector<8x128xf32>
    %53 = arith.select %45, %50, %52 : vector<8x128xi1>, vector<8x128xf32>
    %54 = arith.addf %42, %41 : vector<8x128xf32>
    %55 = arith.select %48, %54, %41 : vector<8x128xi1>, vector<8x128xf32>
    %56 = arith.select %45, %42, %55 : vector<8x128xi1>, vector<8x128xf32>
    %57 = tpu.reciprocal %56 {approx = true} : vector<8x128xf32> -> vector<8x128xf32>
    %58 = arith.mulf %56, %57 : vector<8x128xf32>
    %cst_12 = arith.constant 2.000000e+00 : f32
    %59 = vector.broadcast %cst_12 : f32 to vector<8x128xf32>
    %60 = arith.subf %59, %58 : vector<8x128xf32>
    %61 = arith.mulf %57, %60 : vector<8x128xf32>
    %62 = arith.mulf %53, %61 : vector<8x128xf32>
    %cst_13 = arith.constant 0.785398185 : f32
    %cst_14 = arith.constant 0.000000e+00 : f32
    %63 = vector.broadcast %cst_13 : f32 to vector<8x128xf32>
    %64 = vector.broadcast %cst_14 : f32 to vector<8x128xf32>
    %65 = arith.select %48, %63, %64 : vector<8x128xi1>, vector<8x128xf32>
    %cst_15 = arith.constant 1.57079637 : f32
    %66 = vector.broadcast %cst_15 : f32 to vector<8x128xf32>
    %67 = arith.select %45, %66, %65 : vector<8x128xi1>, vector<8x128xf32>
    %68 = arith.mulf %62, %62 : vector<8x128xf32>
    %cst_16 = arith.constant 0.0805374458 : f32
    %69 = vector.broadcast %cst_16 : f32 to vector<8x128xf32>
    %70 = arith.mulf %69, %68 : vector<8x128xf32>
    %cst_17 = arith.constant 0.138776854 : f32
    %71 = vector.broadcast %cst_17 : f32 to vector<8x128xf32>
    %72 = arith.subf %70, %71 : vector<8x128xf32>
    %73 = arith.mulf %72, %68 : vector<8x128xf32>
    %cst_18 = arith.constant 0.199777111 : f32
    %74 = vector.broadcast %cst_18 : f32 to vector<8x128xf32>
    %75 = arith.addf %73, %74 : vector<8x128xf32>
    %76 = arith.mulf %75, %68 : vector<8x128xf32>
    %cst_19 = arith.constant 0.333329499 : f32
    %77 = vector.broadcast %cst_19 : f32 to vector<8x128xf32>
    %78 = arith.subf %76, %77 : vector<8x128xf32>
    %79 = arith.mulf %78, %68 : vector<8x128xf32>
    %80 = arith.mulf %79, %62 : vector<8x128xf32>
    %81 = arith.addf %80, %62 : vector<8x128xf32>
    %82 = arith.addf %67, %81 : vector<8x128xf32>
    %cst_20 = arith.constant 0.000000e+00 : f32
    %83 = vector.broadcast %cst_20 : f32 to vector<8x128xf32>
    %84 = arith.cmpf olt, %19, %83 : vector<8x128xf32>
    %cst_21 = arith.constant 0.000000e+00 : f32
    %85 = vector.broadcast %cst_21 : f32 to vector<8x128xf32>
    %86 = arith.subf %85, %82 : vector<8x128xf32>
    %87 = arith.select %84, %86, %82 : vector<8x128xi1>, vector<8x128xf32>
    %cst_22 = arith.constant -0.636619746 : f32
    %88 = vector.broadcast %cst_22 : f32 to vector<8x128xf32>
    %89 = arith.mulf %87, %88 : vector<8x128xf32>
    %cst_23 = arith.constant 9.99999974E-6 : f32
    %90 = vector.broadcast %cst_23 : f32 to vector<8x128xf32>
    %91 = arith.addf %24, %90 : vector<8x128xf32>
    %92 = math.absf %29 : vector<8x128xf32>
    %93 = math.absf %91 : vector<8x128xf32>
    %cst_24 = arith.constant 2.41421366 : f32
    %94 = vector.broadcast %cst_24 : f32 to vector<8x128xf32>
    %95 = arith.mulf %94, %93 : vector<8x128xf32>
    %96 = arith.cmpf ogt, %92, %95 : vector<8x128xf32>
    %cst_25 = arith.constant 0.414213568 : f32
    %97 = vector.broadcast %cst_25 : f32 to vector<8x128xf32>
    %98 = arith.mulf %97, %93 : vector<8x128xf32>
    %99 = arith.cmpf ogt, %92, %98 : vector<8x128xf32>
    %cst_26 = arith.constant 0.000000e+00 : f32
    %100 = vector.broadcast %cst_26 : f32 to vector<8x128xf32>
    %101 = arith.subf %100, %93 : vector<8x128xf32>
    %102 = arith.subf %92, %93 : vector<8x128xf32>
    %103 = arith.select %99, %102, %92 : vector<8x128xi1>, vector<8x128xf32>
    %104 = arith.select %96, %101, %103 : vector<8x128xi1>, vector<8x128xf32>
    %105 = arith.addf %92, %93 : vector<8x128xf32>
    %106 = arith.select %99, %105, %93 : vector<8x128xi1>, vector<8x128xf32>
    %107 = arith.select %96, %92, %106 : vector<8x128xi1>, vector<8x128xf32>
    %108 = tpu.reciprocal %107 {approx = true} : vector<8x128xf32> -> vector<8x128xf32>
    %109 = arith.mulf %107, %108 : vector<8x128xf32>
    %cst_27 = arith.constant 2.000000e+00 : f32
    %110 = vector.broadcast %cst_27 : f32 to vector<8x128xf32>
    %111 = arith.subf %110, %109 : vector<8x128xf32>
    %112 = arith.mulf %108, %111 : vector<8x128xf32>
    %113 = arith.mulf %104, %112 : vector<8x128xf32>
    %cst_28 = arith.constant 0.785398185 : f32
    %cst_29 = arith.constant 0.000000e+00 : f32
    %114 = vector.broadcast %cst_28 : f32 to vector<8x128xf32>
    %115 = vector.broadcast %cst_29 : f32 to vector<8x128xf32>
    %116 = arith.select %99, %114, %115 : vector<8x128xi1>, vector<8x128xf32>
    %cst_30 = arith.constant 1.57079637 : f32
    %117 = vector.broadcast %cst_30 : f32 to vector<8x128xf32>
    %118 = arith.select %96, %117, %116 : vector<8x128xi1>, vector<8x128xf32>
    %119 = arith.mulf %113, %113 : vector<8x128xf32>
    %cst_31 = arith.constant 0.0805374458 : f32
    %120 = vector.broadcast %cst_31 : f32 to vector<8x128xf32>
    %121 = arith.mulf %120, %119 : vector<8x128xf32>
    %cst_32 = arith.constant 0.138776854 : f32
    %122 = vector.broadcast %cst_32 : f32 to vector<8x128xf32>
    %123 = arith.subf %121, %122 : vector<8x128xf32>
    %124 = arith.mulf %123, %119 : vector<8x128xf32>
    %cst_33 = arith.constant 0.199777111 : f32
    %125 = vector.broadcast %cst_33 : f32 to vector<8x128xf32>
    %126 = arith.addf %124, %125 : vector<8x128xf32>
    %127 = arith.mulf %126, %119 : vector<8x128xf32>
    %cst_34 = arith.constant 0.333329499 : f32
    %128 = vector.broadcast %cst_34 : f32 to vector<8x128xf32>
    %129 = arith.subf %127, %128 : vector<8x128xf32>
    %130 = arith.mulf %129, %119 : vector<8x128xf32>
    %131 = arith.mulf %130, %113 : vector<8x128xf32>
    %132 = arith.addf %131, %113 : vector<8x128xf32>
    %133 = arith.addf %118, %132 : vector<8x128xf32>
    %cst_35 = arith.constant 0.000000e+00 : f32
    %134 = vector.broadcast %cst_35 : f32 to vector<8x128xf32>
    %135 = arith.cmpf olt, %29, %134 : vector<8x128xf32>
    %cst_36 = arith.constant 0.000000e+00 : f32
    %136 = vector.broadcast %cst_36 : f32 to vector<8x128xf32>
    %137 = arith.cmpf olt, %91, %136 : vector<8x128xf32>
    %138 = arith.xori %135, %137 : vector<8x128xi1>
    %cst_37 = arith.constant 0.000000e+00 : f32
    %139 = vector.broadcast %cst_37 : f32 to vector<8x128xf32>
    %140 = arith.subf %139, %133 : vector<8x128xf32>
    %141 = arith.select %138, %140, %133 : vector<8x128xi1>, vector<8x128xf32>
    %cst_38 = arith.constant 0.000000e+00 : f32
    %142 = vector.broadcast %cst_38 : f32 to vector<8x128xf32>
    %143 = arith.cmpf olt, %24, %142 : vector<8x128xf32>
    %cst_39 = arith.constant 0.000000e+00 : f32
    %144 = vector.broadcast %cst_39 : f32 to vector<8x128xf32>
    %145 = arith.cmpf oge, %29, %144 : vector<8x128xf32>
    %cst_40 = arith.constant 3.14159274 : f32
    %cst_41 = arith.constant -3.14159274 : f32
    %146 = vector.broadcast %cst_40 : f32 to vector<8x128xf32>
    %147 = vector.broadcast %cst_41 : f32 to vector<8x128xf32>
    %148 = arith.select %145, %146, %147 : vector<8x128xi1>, vector<8x128xf32>
    %cst_42 = arith.constant 0.000000e+00 : f32
    %149 = vector.broadcast %cst_42 : f32 to vector<8x128xf32>
    %150 = arith.select %143, %148, %149 : vector<8x128xi1>, vector<8x128xf32>
    %151 = arith.addf %141, %150 : vector<8x128xf32>
    %cst_43 = arith.constant 0.318309873 : f32
    %152 = vector.broadcast %cst_43 : f32 to vector<8x128xf32>
    %153 = arith.mulf %151, %152 : vector<8x128xf32>
    %c0_44 = arith.constant 0 : index
    %c0_45 = arith.constant 0 : index
    %c0_46 = arith.constant 0 : index
    %154 = vector.load %arg10[%c0_44, %c0_45, %c0_46] : memref<1x8x128xf32, #tpu.memory_space<vmem>>, vector<1x8x128xf32>
    %155 = vector.shape_cast %154 : vector<1x8x128xf32> to vector<8x128xf32>
    %156 = vector.shape_cast %89 : vector<8x128xf32> to vector<1x8x128xf32>
    tpu.vector_store %arg10[%c0_44, %c0_45, %c0_46], %156 {strides = array<i32>} : memref<1x8x128xf32, #tpu.memory_space<vmem>>, vector<1x8x128xf32>,
    %c0_47 = arith.constant 0 : index
    %c0_48 = arith.constant 0 : index
    %c0_49 = arith.constant 0 : index
    %157 = vector.load %arg11[%c0_47, %c0_48, %c0_49] : memref<1x8x128xf32, #tpu.memory_space<vmem>>, vector<1x8x128xf32>
    %158 = vector.shape_cast %157 : vector<1x8x128xf32> to vector<8x128xf32>
    %159 = vector.shape_cast %153 : vector<8x128xf32> to vector<1x8x128xf32>
    tpu.vector_store %arg11[%c0_47, %c0_48, %c0_49], %159 {strides = array<i32>} : memref<1x8x128xf32, #tpu.memory_space<vmem>>, vector<1x8x128xf32>,
    return
  }
  func.func @transform_0(%arg0: i32, %arg1: i32, %arg2: memref<2xf32, #tpu.memory_space<smem>>, %arg3: memref<2xf32, #tpu.memory_space<smem>>, %arg4: memref<2xf32, #tpu.memory_space<smem>>, %arg5: memref<2xf32, #tpu.memory_space<smem>>) -> (i32, i32, i32) {
    %c0_i32 = arith.constant 0 : i32
    %c0_i32_0 = arith.constant 0 : i32
    return %arg1, %arg0, %c0_i32 : i32, i32, i32
  }
  func.func @transform_1(%arg0: i32, %arg1: i32, %arg2: memref<2xf32, #tpu.memory_space<smem>>, %arg3: memref<2xf32, #tpu.memory_space<smem>>, %arg4: memref<2xf32, #tpu.memory_space<smem>>, %arg5: memref<2xf32, #tpu.memory_space<smem>>) -> (i32, i32) {
    %c0_i32 = arith.constant 0 : i32
    %c0_i32_0 = arith.constant 0 : i32
    return %arg0, %c0_i32 : i32, i32
  }
  func.func @transform_2(%arg0: i32, %arg1: i32, %arg2: memref<2xf32, #tpu.memory_space<smem>>, %arg3: memref<2xf32, #tpu.memory_space<smem>>, %arg4: memref<2xf32, #tpu.memory_space<smem>>, %arg5: memref<2xf32, #tpu.memory_space<smem>>) -> (i32, i32) {
    %c0_i32 = arith.constant 0 : i32
    %c0_i32_0 = arith.constant 0 : i32
    return %arg0, %c0_i32 : i32, i32
  }
  func.func @transform_3(%arg0: i32, %arg1: i32, %arg2: memref<2xf32, #tpu.memory_space<smem>>, %arg3: memref<2xf32, #tpu.memory_space<smem>>, %arg4: memref<2xf32, #tpu.memory_space<smem>>, %arg5: memref<2xf32, #tpu.memory_space<smem>>) -> (i32, i32) {
    %c0_i32 = arith.constant 0 : i32
    %c0_i32_0 = arith.constant 0 : i32
    return %arg0, %c0_i32 : i32, i32
  }
  func.func @transform_4(%arg0: i32, %arg1: i32, %arg2: memref<2xf32, #tpu.memory_space<smem>>, %arg3: memref<2xf32, #tpu.memory_space<smem>>, %arg4: memref<2xf32, #tpu.memory_space<smem>>, %arg5: memref<2xf32, #tpu.memory_space<smem>>) -> (i32, i32, i32) {
    %c0_i32 = arith.constant 0 : i32
    %c0_i32_0 = arith.constant 0 : i32
    return %arg1, %arg0, %c0_i32 : i32, i32, i32
  }
  func.func @transform_5(%arg0: i32, %arg1: i32, %arg2: memref<2xf32, #tpu.memory_space<smem>>, %arg3: memref<2xf32, #tpu.memory_space<smem>>, %arg4: memref<2xf32, #tpu.memory_space<smem>>, %arg5: memref<2xf32, #tpu.memory_space<smem>>) -> (i32, i32, i32) {
    %c0_i32 = arith.constant 0 : i32
    %c0_i32_0 = arith.constant 0 : i32
    return %arg1, %arg0, %c0_i32 : i32, i32, i32
  }
}

</mosaic_0001>

<llo_original>
// kernel: tpu_custom_call.1
$region0: #{tpu_custom_call.1}
  #allocation0 [shape = 'u32[]', space=smem, size = 0x4, offset = 0x4, fixed_abs, tag = 'smem constant byte address 0x4 - core index']
  #allocation1 [shape = 'u32[144,128]{1,0:T(1,128)}', space=vmem, size = 0x12000, scoped, tag = 'internal scratch']
  #allocation2 [shape = 's32[1]{0}', space=sflag, size = 0x4, scoped, tag = 'scoped memory for tpu_custom_call.1']
  #allocation3 [shape = 'u8[512]{0}', space=smem, size = 0x200, scoped, tag = 'prefetched SMEM operand 0']
  #allocation4 [shape = 'u8[512]{0}', space=smem, size = 0x200, scoped, tag = 'prefetched SMEM operand 1']
  #allocation5 [shape = 'u8[512]{0}', space=smem, size = 0x200, scoped, tag = 'prefetched SMEM operand 2']
  #allocation6 [shape = 'u8[512]{0}', space=smem, size = 0x200, scoped, tag = 'prefetched SMEM operand 3']
  %s0 = inlined_call_operand.hbm [shape: f32[2], index: 0, kind: input, shape index: {}]
  %s1 = inlined_call_operand.vmem [shape: f32[2], index: 1, kind: input, shape index: {}]
  %s2 = inlined_call_operand.hbm [shape: f32[2], index: 2, kind: input, shape index: {}]
  %s3 = inlined_call_operand.hbm [shape: f32[2], index: 3, kind: input, shape index: {}]
  %s4 = inlined_call_operand.hbm [shape: f32[2,8,128], index: 4, kind: input, shape index: {}]
  %s5 = inlined_call_operand.vmem [shape: f32[8,128], index: 5, kind: input, shape index: {}]
  %s6 = inlined_call_operand.hbm [shape: f32[8,128], index: 6, kind: input, shape index: {}]
  %s7 = inlined_call_operand.hbm [shape: f32[8,128], index: 7, kind: input, shape index: {}]
  %s8 = inlined_call_operand.hbm [shape: f32[2,8,256], index: 8, kind: output, shape index: {}]
  %s9 = sld [smem:[#allocation0]]
  $region61: #{tpu_custom_call.1} parent=0
    _
  %s11 = ssub.s32 1, %s9
  %s12 = scalar_select 0, %s11, %s9
  %14 = dma.hbm_to_smem %s0, 16, [#allocation3], [#allocation2]
  %s15 = sshll.u32 %s1, 4
  %s16 = int_to_ptr.vmem [resolvable:$true] %s15
  %18 = dma.vmem_to_smem %s16, 16, [#allocation4], [#allocation2]
  %20 = dma.hbm_to_smem %s2, 16, [#allocation5], [#allocation2]
  %22 = dma.hbm_to_smem %s3, 16, [#allocation6], [#allocation2]
  %23 = dma.done [#allocation2], 64
  %24 = sfence
  $region1: #{tpu_custom_call.1} parent=0
    #allocation7 [shape = 'u8[8192]{0}', space=vmem, size = 0x2000, scoped, tag = 'input window, operand 4']
    #allocation8 [shape = 's32[2]{0}', space=sflag, size = 0x8, scoped, tag = 'scoped memory for tpu_custom_call.1']
    #allocation9 [shape = 's32[2]{0}', space=sflag, size = 0x8, scoped, tag = 'scoped memory for tpu_custom_call.1']
    #allocation10 [shape = 'u8[4096]{0}', space=vmem, size = 0x1000, scoped, tag = 'input window, operand 6, single buffered']
    #allocation11 [shape = 's32[1]{0}', space=sflag, size = 0x4, scoped, tag = 'scoped memory for tpu_custom_call.1']
    #allocation12 [shape = 'u8[4096]{0}', space=vmem, size = 0x1000, scoped, tag = 'input window, operand 7, single buffered']
    #allocation13 [shape = 'u8[16384]{0}', space=vmem, size = 0x4000, scoped, tag = 'output window, operand 0']
    %25 = vsyncpa [#allocation8], 0
    %s26 = scalar_lea.sflag [#allocation8], 1
    %27 = vsyncpa %s26, 0
    %28 = vsyncpa [#allocation11], 0
    %29 = vsyncpa [#allocation9], 0
    %s30 = scalar_lea.sflag [#allocation9], 1
    %31 = vsyncpa %s30, 0
    loop: start=0, step=1, limit=4
    $region2: #{tpu_custom_call.1} parent=1 // loop_pre_header
      _
    $region3: #{tpu_custom_call.1} parent=1 // loop_header
      %s33 = sphi 0, %s37
      %p34 = scmp.ge.s32.totalorder %s33, 4
      %s40 = sphi 0, %s52
      %s41 = sphi 0, %s48
      %s42 = sphi 0, %s40
      %s43 = sphi 0, %s41
      %s44 = sphi 0, %s42
      %s45 = sphi 0, %s43
      %s57 = sphi 0, %s59
      %s60 = sphi 0, %s57
      %s61 = sphi 0, %s60
      %s77 = sphi 0, %s61
      %s83 = sphi 0, %s85
      %s86 = sphi 0, %s83
      %s87 = sphi 0, %s86
      %s103 = sphi 0, %s87
      %s109 = sphi 0, %s111
      %s112 = sphi 0, %s109
      %s113 = sphi 0, %s112
      %s129 = sphi 0, %s113
      %s135 = sphi 0, %s137
      %s138 = sphi 0, %s135
      %s139 = sphi 0, %s138
      %s155 = sphi 0, %s139
      %s163 = sphi 0, %s165
      %s166 = sphi 0, %s163
      %s167 = sphi 0, %s166
      %s183 = sphi 0, %s167
    $region4: #{tpu_custom_call.1} parent=1 // loop_header_branch
      %36 = sbr.rel (%p34) target = $region8
    $region5: #{tpu_custom_call.1} parent=1 // loop_body
      %s38 = ssub.s32 %s33, 1
      %s39 = ssub.s32 %s33, 2
      %s46 = sadd.s32 1, %s41
      %p47 = scmp.ge.s32.totalorder %s46, 2
      %s48 = scalar_select %p47, 0, %s46
      %s49 = sadd.s32 1, %s40
      %s50 = scalar_select %p47, %s49, %s40
      %p51 = scmp.ge.s32.totalorder %s50, 1
      %s52 = scalar_select %p51, 0, %s50
      %s53 = ssub.s32 %s41, %s48
      %s54 = ssub.s32 %s40, %s52
      %s55 = sor.u32 %s53, %s54
      %p56 = scmp.eq.s32.totalorder %s55, 0
      %s58 = sadd.s32 %s57, 1
      %s59 = scalar_select %p56, %s57, %s58
      %p62 = pneg %p56
      %p63 = scmp.eq.s32.totalorder %s33, 1
      %p64 = por %p62, %p63
      %p65 = scmp.ne.s32.totalorder %s57, %s60
      %p66 = scmp.eq.s32.totalorder %s33, 0
      %p67 = por %p65, %p66
      %p68 = scmp.ne.s32.totalorder %s57, %s60
      %p69 = scmp.eq.s32.totalorder %s38, 1
      %p70 = por %p68, %p69
      %p71 = scmp.ne.s32.totalorder %s60, %s61
      %p72 = scmp.eq.s32.totalorder %s38, 0
      %p73 = por %p71, %p72
      %p74 = scmp.ne.s32.totalorder %s60, %s61
      %p75 = scmp.eq.s32.totalorder %s39, 1
      %p76 = por %p74, %p75
      %p78 = scmp.ne.s32.totalorder %s61, %s77
      %p79 = scmp.eq.s32.totalorder %s39, 0
      %p80 = por %p78, %p79
      %s81 = ssub.s32 %s40, %s52
      %p82 = scmp.eq.s32.totalorder %s81, 0
      %s84 = sadd.s32 %s83, 1
      %s85 = scalar_select %p82, %s83, %s84
      %p88 = pneg %p82
      %p89 = scmp.eq.s32.totalorder %s33, 1
      %p90 = por %p88, %p89
      %p91 = scmp.ne.s32.totalorder %s83, %s86
      %p92 = scmp.eq.s32.totalorder %s33, 0
      %p93 = por %p91, %p92
      %p94 = scmp.ne.s32.totalorder %s83, %s86
      %p95 = scmp.eq.s32.totalorder %s38, 1
      %p96 = por %p94, %p95
      %p97 = scmp.ne.s32.totalorder %s86, %s87
      %p98 = scmp.eq.s32.totalorder %s38, 0
      %p99 = por %p97, %p98
      %p100 = scmp.ne.s32.totalorder %s86, %s87
      %p101 = scmp.eq.s32.totalorder %s39, 1
      %p102 = por %p100, %p101
      %p104 = scmp.ne.s32.totalorder %s87, %s103
      %p105 = scmp.eq.s32.totalorder %s39, 0
      %p106 = por %p104, %p105
      %s107 = ssub.s32 %s40, %s52
      %p108 = scmp.eq.s32.totalorder %s107, 0
      %s110 = sadd.s32 %s109, 1
      %s111 = scalar_select %p108, %s109, %s110
      %p114 = pneg %p108
      %p115 = scmp.eq.s32.totalorder %s33, 1
      %p116 = por %p114, %p115
      %p117 = scmp.ne.s32.totalorder %s109, %s112
      %p118 = scmp.eq.s32.totalorder %s33, 0
      %p119 = por %p117, %p118
      %p120 = scmp.ne.s32.totalorder %s109, %s112
      %p121 = scmp.eq.s32.totalorder %s38, 1
      %p122 = por %p120, %p121
      %p123 = scmp.ne.s32.totalorder %s112, %s113
      %p124 = scmp.eq.s32.totalorder %s38, 0
      %p125 = por %p123, %p124
      %p126 = scmp.ne.s32.totalorder %s112, %s113
      %p127 = scmp.eq.s32.totalorder %s39, 1
      %p128 = por %p126, %p127
      %p130 = scmp.ne.s32.totalorder %s113, %s129
      %p131 = scmp.eq.s32.totalorder %s39, 0
      %p132 = por %p130, %p131
      %s133 = ssub.s32 %s40, %s52
      %p134 = scmp.eq.s32.totalorder %s133, 0
      %s136 = sadd.s32 %s135, 1
      %s137 = scalar_select %p134, %s135, %s136
      %p140 = pneg %p134
      %p141 = scmp.eq.s32.totalorder %s33, 1
      %p142 = por %p140, %p141
      %p143 = scmp.ne.s32.totalorder %s135, %s138
      %p144 = scmp.eq.s32.totalorder %s33, 0
      %p145 = por %p143, %p144
      %p146 = scmp.ne.s32.totalorder %s135, %s138
      %p147 = scmp.eq.s32.totalorder %s38, 1
      %p148 = por %p146, %p147
      %p149 = scmp.ne.s32.totalorder %s138, %s139
      %p150 = scmp.eq.s32.totalorder %s38, 0
      %p151 = por %p149, %p150
      %p152 = scmp.ne.s32.totalorder %s138, %s139
      %p153 = scmp.eq.s32.totalorder %s39, 1
      %p154 = por %p152, %p153
      %p156 = scmp.ne.s32.totalorder %s139, %s155
      %p157 = scmp.eq.s32.totalorder %s39, 0
      %p158 = por %p156, %p157
      %s159 = ssub.s32 %s41, %s48
      %s160 = ssub.s32 %s40, %s52
      %s161 = sor.u32 %s159, %s160
      %p162 = scmp.eq.s32.totalorder %s161, 0
      %s164 = sadd.s32 %s163, 1
      %s165 = scalar_select %p162, %s163, %s164
      %p168 = pneg %p162
      %p169 = scmp.eq.s32.totalorder %s33, 1
      %p170 = por %p168, %p169
      %p171 = scmp.ne.s32.totalorder %s163, %s166
      %p172 = scmp.eq.s32.totalorder %s33, 0
      %p173 = por %p171, %p172
      %p174 = scmp.ne.s32.totalorder %s163, %s166
      %p175 = scmp.eq.s32.totalorder %s38, 1
      %p176 = por %p174, %p175
      %p177 = scmp.ne.s32.totalorder %s166, %s167
      %p178 = scmp.eq.s32.totalorder %s38, 0
      %p179 = por %p177, %p178
      %p180 = scmp.ne.s32.totalorder %s166, %s167
      %p181 = scmp.eq.s32.totalorder %s39, 1
      %p182 = por %p180, %p181
      %p184 = scmp.ne.s32.totalorder %s167, %s183
      %p185 = scmp.eq.s32.totalorder %s39, 0
      %p186 = por %p184, %p185
      %p187 = scmp.le.s32.totalorder 1, %s33
      %p188 = scmp.lt.s32.totalorder %s33, 3
      %p189 = pnand %p187, %p188
      %p190 = pneg %p189
      // Predicated region
      $region9: #{tpu_custom_call.1} parent=5 // pred_check
        _
      $region10: #{tpu_custom_call.1} parent=5 // pred_check_branch
        %192 = sbr.rel (%p189) target = $region12
      $region11: #{tpu_custom_call.1} parent=5 // pred_region
        %s193 = ssub.s32 %s33, 1
        // Predicated region
        $region13: #{tpu_custom_call.1} parent=11 // pred_check
          %p194 = pneg %p99
        $region14: #{tpu_custom_call.1} parent=11 // pred_check_branch
          %196 = sbr.rel (%p194) target = $region16
        $region15: #{tpu_custom_call.1} parent=11 // pred_region
          %p197 = scmp.lt.s32.totalorder %s42, 0
          %s198 = scalar_select %p197, %s42, 0
          %s199 = smul.addr %s198, 8
          %s200 = scalar_lea.vmem %s5, %s199
        $region16: #{tpu_custom_call.1} parent=11 // pred_fallthru
          _
        // Predicated region
        $region17: #{tpu_custom_call.1} parent=11 // pred_check
          %p201 = pneg %p125
        $region18: #{tpu_custom_call.1} parent=11 // pred_check_branch
          %203 = sbr.rel (%p201) target = $region20
        $region19: #{tpu_custom_call.1} parent=11 // pred_region
          %s205 = ssub.s32 128, 128
          %206 = vsyncadd [#allocation11], %s205
          %s207 = smul.addr %s42, 128
          %s208 = scalar_lea.hbm %s6, %s207
          %s210 = sshll.u32 [#allocation10], 4
          %s211 = int_to_ptr.vmem [resolvable:$true] %s210
          %213 = dma.hbm_to_vmem [thread:$0]  %s208, 128, %s211, [#allocation11]
        $region20: #{tpu_custom_call.1} parent=11 // pred_fallthru
          _
        // Predicated region
        $region21: #{tpu_custom_call.1} parent=11 // pred_check
          %p214 = pneg %p151
        $region22: #{tpu_custom_call.1} parent=11 // pred_check_branch
          %216 = sbr.rel (%p214) target = $region24
        $region23: #{tpu_custom_call.1} parent=11 // pred_region
          %s218 = ssub.s32 128, 128
          %219 = vsyncadd [#allocation11], %s218
          %s220 = smul.addr %s42, 128
          %s221 = scalar_lea.hbm %s7, %s220
          %s223 = sshll.u32 [#allocation12], 4
          %s224 = int_to_ptr.vmem [resolvable:$true] %s223
          %226 = dma.hbm_to_vmem [thread:$0]  %s221, 128, %s224, [#allocation11]
        $region24: #{tpu_custom_call.1} parent=11 // pred_fallthru
          _
      $region12: #{tpu_custom_call.1} parent=5 // pred_fallthru
        _
      %p227 = scmp.lt.s32.totalorder %s33, 2
      // Predicated region
      $region25: #{tpu_custom_call.1} parent=5 // pred_check
        %p228 = pneg %p227
      $region26: #{tpu_custom_call.1} parent=5 // pred_check_branch
        %230 = sbr.rel (%p228) target = $region28
      $region27: #{tpu_custom_call.1} parent=5 // pred_region
        // Predicated region
        $region29: #{tpu_custom_call.1} parent=27 // pred_check
          %p231 = pneg %p67
        $region30: #{tpu_custom_call.1} parent=27 // pred_check_branch
          %233 = sbr.rel (%p231) target = $region32
        $region31: #{tpu_custom_call.1} parent=27 // pred_region
          %s234 = sand.u32 %s57, 1
          %s235 = scalar_lea.sflag [#allocation8], %s234
          %s236 = sand.u32 %s57, 1
          %s237 = smul.addr %s236, 8
          %s238 = scalar_lea.vmem [#allocation7], %s237
          %s240 = ssub.s32 128, 128
          %241 = vsyncadd %s235, %s240
          %s242 = sadd.s32 %s40, %s41
          %s243 = smul.addr %s242, 128
          %s244 = scalar_lea.hbm %s4, %s243
          %s246 = sshll.u32 %s238, 4
          %s247 = int_to_ptr.vmem [resolvable:$true] %s246
          %249 = dma.hbm_to_vmem [thread:$0]  %s244, 128, %s247, %s235
        $region32: #{tpu_custom_call.1} parent=27 // pred_fallthru
          _
      $region28: #{tpu_custom_call.1} parent=5 // pred_fallthru
        _
      %p250 = scmp.le.s32.totalorder 1, %s33
      %p251 = scmp.lt.s32.totalorder %s33, 3
      %p252 = pnand %p250, %p251
      %p253 = pneg %p252
      // Predicated region
      $region33: #{tpu_custom_call.1} parent=5 // pred_check
        _
      $region34: #{tpu_custom_call.1} parent=5 // pred_check_branch
        %255 = sbr.rel (%p252) target = $region36
      $region35: #{tpu_custom_call.1} parent=5 // pred_region
        %s256 = ssub.s32 %s33, 1
        %s257 = sand.u32 %s60, 1
        %s258 = scalar_lea.sflag [#allocation8], %s257
        %s259 = sand.u32 %s60, 1
        %s260 = smul.addr %s259, 8
        %s261 = scalar_lea.vmem [#allocation7], %s260
        // Predicated region
        $region37: #{tpu_custom_call.1} parent=35 // pred_check
          %p262 = pneg %p73
        $region38: #{tpu_custom_call.1} parent=35 // pred_check_branch
          %264 = sbr.rel (%p262) target = $region40
        $region39: #{tpu_custom_call.1} parent=35 // pred_region
          %265 = dma.done %s258, 128
        $region40: #{tpu_custom_call.1} parent=35 // pred_fallthru
          _
        // Predicated region
        $region41: #{tpu_custom_call.1} parent=35 // pred_check
          %p266 = pneg %p125
        $region42: #{tpu_custom_call.1} parent=35 // pred_check_branch
          %268 = sbr.rel (%p266) target = $region44
        $region43: #{tpu_custom_call.1} parent=35 // pred_region
          %269 = dma.done [#allocation11], 128
        $region44: #{tpu_custom_call.1} parent=35 // pred_fallthru
          _
        // Predicated region
        $region45: #{tpu_custom_call.1} parent=35 // pred_check
          %p270 = pneg %p151
        $region46: #{tpu_custom_call.1} parent=35 // pred_check_branch
          %272 = sbr.rel (%p270) target = $region48
        $region47: #{tpu_custom_call.1} parent=35 // pred_region
          %273 = dma.done [#allocation11], 128
        $region48: #{tpu_custom_call.1} parent=35 // pred_fallthru
          _
        %s274 = sand.u32 %s60, 1
        %s275 = scalar_lea.sflag [#allocation8], %s274
        %s276 = sand.u32 %s60, 1
        %s277 = smul.addr %s276, 8
        %s278 = scalar_lea.vmem [#allocation7], %s277
        %p279 = pneg %p73
        %p280 = pneg %p70
        %p281 = scmp.lt.s32.totalorder %s42, 0
        %s282 = scalar_select %p281, %s42, 0
        %s283 = smul.addr %s282, 8
        %s284 = scalar_lea.vmem %s5, %s283
        %p285 = pneg %p99
        %p286 = pneg %p96
        %p287 = pneg %p125
        %p288 = pneg %p122
        %p289 = pneg %p151
        %p290 = pneg %p148
        %p291 = pneg %p179
        %p292 = pneg %p176
        %s293 = sand.u32 %s166, 1
        %s294 = scalar_lea.sflag [#allocation9], %s293
        %s295 = sand.u32 %s166, 1
        %s296 = smul.addr %s295, 16
        %s297 = scalar_lea.vmem [#allocation13], %s296
        %p298 = scmp.lt.s32.totalorder %s42, 0
        %s299 = scalar_select %p298, %s42, 0
        %s300 = smul.addr %s299, 8
        %s301 = scalar_lea.vmem %s5, %s300
        %v302 = vld [vmem:[%s261] sm:$0xff]
        %v303 = vld [vmem:[%s301] sm:$0xff]
        %v304 = vld [vmem:[#allocation10] sm:$0xff]
        %v305 = vld [vmem:[#allocation12] sm:$0xff]
        %s306 = sld [smem:[#allocation3 + %s43]]
        %s307 = sld [smem:[#allocation4 + %s43]]
        %s308 = sld [smem:[#allocation5 + %s43]]
        %s309 = sld [smem:[#allocation6 + %s43]]
        %v310 = vmul.f32 %v303, %v302
        %v311 = vstv %s306
        %v312 = vadd.f32 %v310, %v311
        %v313 = vmul.f32 %v304, %v302
        %v314 = vstv %s307
        %v315 = vadd.f32 %v313, %v314
        %v316 = vmul.f32 %v305, %v302
        %v317 = vstv %s308
        %v318 = vmul.f32 %v312, %v317
        %v319 = vstv %s309
        %v320 = vmul.f32 %v315, %v319
        %v321 = vsub.f32 %v318, %v320
        %v322 = vmul.f32 %v312, %v319
        %v323 = vmul.f32 %v315, %v317
        %v324 = vadd.f32 %v322, %v323
        %v325 = vmul.f32 %v321, %v321
        %v326 = vmul.f32 %v324, %v324
        %v327 = vadd.f32 %v325, %v326
        %v328 = vmul.f32 %v316, %v316
        %v329 = vadd.f32 %v327, %v328
        %v330 = vrsqrt.pop %v329
        %v331 = vmul.f32 %v329, %v330
        %vm332 = vcmp.eq.f32.partialorder %v329, inf
        %v333 = vsel %vm332, %v329, %v331
        %vm334 = vcmp.eq.f32.partialorder %v329, 0.0
        %v335 = vand.u32 %v329, 2147483648
        %v336 = vsel %vm334, %v335, %v333
        %v337 = vmul.f32 %v336, 2e-05
        %v338 = vadd.f32 %v327, %v337
        %v339 = vadd.f32 %v338, 1e-10
        %v340 = vrsqrt.pop %v339
        %v341 = vmul.f32 %v339, %v340
        %vm342 = vcmp.eq.f32.partialorder %v339, inf
        %v343 = vsel %vm342, %v339, %v341
        %vm344 = vcmp.eq.f32.partialorder %v339, 0.0
        %v345 = vand.u32 %v339, 2147483648
        %v346 = vsel %vm344, %v345, %v343
        %v347 = vand.u32 2147483647, %v316
        %v348 = vmul.f32 %v346, 2.4142137
        %vm349 = vcmp.gt.f32.partialorder %v347, %v348
        %v350 = vmul.f32 %v346, 0.41421357
        %vm351 = vcmp.gt.f32.partialorder %v347, %v350
        %v352 = vsub.f32 0.0, %v346
        %v353 = vsub.f32 %v347, %v346
        %v354 = vsel %vm351, %v353, %v347
        %v355 = vsel %vm349, %v352, %v354
        %v356 = vadd.f32 %v347, %v346
        %v357 = vsel %vm351, %v356, %v346
        %v358 = vsel %vm349, %v347, %v357
        %v359 = vrcp.pop %v358
        %v360 = vmul.f32 %v358, %v359
        %v361 = vsub.f32 2.0, %v360
        %v362 = vmul.f32 %v359, %v361
        %v363 = vmul.f32 %v355, %v362
        %v364 = vsel %vm351, 0.7853982, 0.0
        %v365 = vsel %vm349, 1.5707964, %v364
        %v366 = vmul.f32 %v363, %v363
        %v367 = vmul.f32 %v366, 0.080537446
        %v368 = vsub.f32 %v367, 0.13877685
        %v369 = vmul.f32 %v368, %v366
        %v370 = vadd.f32 %v369, 0.19977711
        %v371 = vmul.f32 %v370, %v366
        %v372 = vsub.f32 %v371, 0.3333295
        %v373 = vmul.f32 %v372, %v366
        %v374 = vmul.f32 %v373, %v363
        %v375 = vadd.f32 %v374, %v363
        %v376 = vadd.f32 %v365, %v375
        %vm377 = vcmp.lt.f32.partialorder %v316, 0.0
        %v378 = vsub.f32 0.0, %v376
        %v379 = vsel %vm377, %v378, %v376
        %v380 = vmul.f32 %v379, -0.63661975
        %v381 = vadd.f32 %v321, 1e-05
        %v382 = vand.u32 2147483647, %v324
        %v383 = vand.u32 2147483647, %v381
        %v384 = vmul.f32 %v383, 2.4142137
        %vm385 = vcmp.gt.f32.partialorder %v382, %v384
        %v386 = vmul.f32 %v383, 0.41421357
        %vm387 = vcmp.gt.f32.partialorder %v382, %v386
        %v388 = vsub.f32 0.0, %v383
        %v389 = vsub.f32 %v382, %v383
        %v390 = vsel %vm387, %v389, %v382
        %v391 = vsel %vm385, %v388, %v390
        %v392 = vadd.f32 %v382, %v383
        %v393 = vsel %vm387, %v392, %v383
        %v394 = vsel %vm385, %v382, %v393
        %v395 = vrcp.pop %v394
        %v396 = vmul.f32 %v394, %v395
        %v397 = vsub.f32 2.0, %v396
        %v398 = vmul.f32 %v395, %v397
        %v399 = vmul.f32 %v391, %v398
        %v400 = vsel %vm387, 0.7853982, 0.0
        %v401 = vsel %vm385, 1.5707964, %v400
        %v402 = vmul.f32 %v399, %v399
        %v403 = vmul.f32 %v402, 0.080537446
        %v404 = vsub.f32 %v403, 0.13877685
        %v405 = vmul.f32 %v404, %v402
        %v406 = vadd.f32 %v405, 0.19977711
        %v407 = vmul.f32 %v406, %v402
        %v408 = vsub.f32 %v407, 0.3333295
        %v409 = vmul.f32 %v408, %v402
        %v410 = vmul.f32 %v409, %v399
        %v411 = vadd.f32 %v410, %v399
        %v412 = vadd.f32 %v401, %v411
        %vm413 = vcmp.lt.f32.partialorder %v324, 0.0
        %vm414 = vcmp.lt.f32.partialorder %v381, 0.0
        %vm415 = vmxor %vm413, %vm414
        %v416 = vsub.f32 0.0, %v412
        %v417 = vsel %vm415, %v416, %v412
        %vm418 = vcmp.lt.f32.partialorder %v321, 0.0
        %vm419 = vcmp.ge.f32.partialorder %v324, 0.0
        %v420 = vsel %vm419, 3.1415927, -3.1415927
        %v421 = vsel %vm418, %v420, 0.0
        %v422 = vadd.f32 %v417, %v421
        %v423 = vmul.f32 %v422, 0.31830987
        %v424 = vlaneseq
        %v425 = vshrl.u32 %v424, 7
        %v426 = vsub.s32 0, %v425
        %v427 = vrot.slane %v380, %v426
        %429 = vbcast.lane.b32.xlu0 %v427, 256
        %v430 = vpop.permute.xlu0 %429
        %s432 = sor.u32 256, 8
        %433 = vbcast.lane.b32.xlu0 %v427, %s432
        %v434 = vpop.permute.xlu0 %433
        %s436 = sor.u32 256, 16
        %437 = vbcast.lane.b32.xlu0 %v427, %s436
        %v438 = vpop.permute.xlu0 %437
        %s440 = sor.u32 256, 24
        %441 = vbcast.lane.b32.xlu0 %v427, %s440
        %v442 = vpop.permute.xlu0 %441
        %s444 = sor.u32 256, 32
        %445 = vbcast.lane.b32.xlu0 %v427, %s444
        %v446 = vpop.permute.xlu0 %445
        %s448 = sor.u32 256, 40
        %449 = vbcast.lane.b32.xlu0 %v427, %s448
        %v450 = vpop.permute.xlu0 %449
        %s452 = sor.u32 256, 48
        %453 = vbcast.lane.b32.xlu0 %v427, %s452
        %v454 = vpop.permute.xlu0 %453
        %s456 = sor.u32 256, 56
        %457 = vbcast.lane.b32.xlu0 %v427, %s456
        %v458 = vpop.permute.xlu0 %457
        %s460 = sor.u32 256, 64
        %461 = vbcast.lane.b32.xlu0 %v427, %s460
        %v462 = vpop.permute.xlu0 %461
        %s464 = sor.u32 256, 72
        %465 = vbcast.lane.b32.xlu0 %v427, %s464
        %v466 = vpop.permute.xlu0 %465
        %s468 = sor.u32 256, 80
        %469 = vbcast.lane.b32.xlu0 %v427, %s468
        %v470 = vpop.permute.xlu0 %469
        %s472 = sor.u32 256, 88
        %473 = vbcast.lane.b32.xlu0 %v427, %s472
        %v474 = vpop.permute.xlu0 %473
        %s476 = sor.u32 256, 96
        %477 = vbcast.lane.b32.xlu0 %v427, %s476
        %v478 = vpop.permute.xlu0 %477
        %s480 = sor.u32 256, 104
        %481 = vbcast.lane.b32.xlu0 %v427, %s480
        %v482 = vpop.permute.xlu0 %481
        %s484 = sor.u32 256, 112
        %485 = vbcast.lane.b32.xlu0 %v427, %s484
        %v486 = vpop.permute.xlu0 %485
        %s488 = sor.u32 256, 120
        %489 = vbcast.lane.b32.xlu0 %v427, %s488
        %v490 = vpop.permute.xlu0 %489
        %v491 = vlaneseq
        %v492 = vshrl.u32 %v491, 7
        %v493 = vsub.s32 1, %v492
        %v494 = vrot.slane %v380, %v493
        %496 = vbcast.lane.b32.xlu0 %v494, 256
        %v497 = vpop.permute.xlu0 %496
        %s499 = sor.u32 256, 8
        %500 = vbcast.lane.b32.xlu0 %v494, %s499
        %v501 = vpop.permute.xlu0 %500
        %s503 = sor.u32 256, 16
        %504 = vbcast.lane.b32.xlu0 %v494, %s503
        %v505 = vpop.permute.xlu0 %504
        %s507 = sor.u32 256, 24
        %508 = vbcast.lane.b32.xlu0 %v494, %s507
        %v509 = vpop.permute.xlu0 %508
        %s511 = sor.u32 256, 32
        %512 = vbcast.lane.b32.xlu0 %v494, %s511
        %v513 = vpop.permute.xlu0 %512
        %s515 = sor.u32 256, 40
        %516 = vbcast.lane.b32.xlu0 %v494, %s515
        %v517 = vpop.permute.xlu0 %516
        %s519 = sor.u32 256, 48
        %520 = vbcast.lane.b32.xlu0 %v494, %s519
        %v521 = vpop.permute.xlu0 %520
        %s523 = sor.u32 256, 56
        %524 = vbcast.lane.b32.xlu0 %v494, %s523
        %v525 = vpop.permute.xlu0 %524
        %s527 = sor.u32 256, 64
        %528 = vbcast.lane.b32.xlu0 %v494, %s527
        %v529 = vpop.permute.xlu0 %528
        %s531 = sor.u32 256, 72
        %532 = vbcast.lane.b32.xlu0 %v494, %s531
        %v533 = vpop.permute.xlu0 %532
        %s535 = sor.u32 256, 80
        %536 = vbcast.lane.b32.xlu0 %v494, %s535
        %v537 = vpop.permute.xlu0 %536
        %s539 = sor.u32 256, 88
        %540 = vbcast.lane.b32.xlu0 %v494, %s539
        %v541 = vpop.permute.xlu0 %540
        %s543 = sor.u32 256, 96
        %544 = vbcast.lane.b32.xlu0 %v494, %s543
        %v545 = vpop.permute.xlu0 %544
        %s547 = sor.u32 256, 104
        %548 = vbcast.lane.b32.xlu0 %v494, %s547
        %v549 = vpop.permute.xlu0 %548
        %s551 = sor.u32 256, 112
        %552 = vbcast.lane.b32.xlu0 %v494, %s551
        %v553 = vpop.permute.xlu0 %552
        %s555 = sor.u32 256, 120
        %556 = vbcast.lane.b32.xlu0 %v494, %s555
        %v557 = vpop.permute.xlu0 %556
        %v558 = vlaneseq
        %v559 = vshrl.u32 %v558, 7
        %v560 = vsub.s32 2, %v559
        %v561 = vrot.slane %v380, %v560
        %563 = vbcast.lane.b32.xlu0 %v561, 256
        %v564 = vpop.permute.xlu0 %563
        %s566 = sor.u32 256, 8
        %567 = vbcast.lane.b32.xlu0 %v561, %s566
        %v568 = vpop.permute.xlu0 %567
        %s570 = sor.u32 256, 16
        %571 = vbcast.lane.b32.xlu0 %v561, %s570
        %v572 = vpop.permute.xlu0 %571
        %s574 = sor.u32 256, 24
        %575 = vbcast.lane.b32.xlu0 %v561, %s574
        %v576 = vpop.permute.xlu0 %575
        %s578 = sor.u32 256, 32
        %579 = vbcast.lane.b32.xlu0 %v561, %s578
        %v580 = vpop.permute.xlu0 %579
        %s582 = sor.u32 256, 40
        %583 = vbcast.lane.b32.xlu0 %v561, %s582
        %v584 = vpop.permute.xlu0 %583
        %s586 = sor.u32 256, 48
        %587 = vbcast.lane.b32.xlu0 %v561, %s586
        %v588 = vpop.permute.xlu0 %587
        %s590 = sor.u32 256, 56
        %591 = vbcast.lane.b32.xlu0 %v561, %s590
        %v592 = vpop.permute.xlu0 %591
        %s594 = sor.u32 256, 64
        %595 = vbcast.lane.b32.xlu0 %v561, %s594
        %v596 = vpop.permute.xlu0 %595
        %s598 = sor.u32 256, 72
        %599 = vbcast.lane.b32.xlu0 %v561, %s598
        %v600 = vpop.permute.xlu0 %599
        %s602 = sor.u32 256, 80
        %603 = vbcast.lane.b32.xlu0 %v561, %s602
        %v604 = vpop.permute.xlu0 %603
        %s606 = sor.u32 256, 88
        %607 = vbcast.lane.b32.xlu0 %v561, %s606
        %v608 = vpop.permute.xlu0 %607
        %s610 = sor.u32 256, 96
        %611 = vbcast.lane.b32.xlu0 %v561, %s610
        %v612 = vpop.permute.xlu0 %611
        %s614 = sor.u32 256, 104
        %615 = vbcast.lane.b32.xlu0 %v561, %s614
        %v616 = vpop.permute.xlu0 %615
        %s618 = sor.u32 256, 112
        %619 = vbcast.lane.b32.xlu0 %v561, %s618
        %v620 = vpop.permute.xlu0 %619
        %s622 = sor.u32 256, 120
        %623 = vbcast.lane.b32.xlu0 %v561, %s622
        %v624 = vpop.permute.xlu0 %623
        %v625 = vlaneseq
        %v626 = vshrl.u32 %v625, 7
        %v627 = vsub.s32 3, %v626
        %v628 = vrot.slane %v380, %v627
        %630 = vbcast.lane.b32.xlu0 %v628, 256
        %v631 = vpop.permute.xlu0 %630
        %s633 = sor.u32 256, 8
        %634 = vbcast.lane.b32.xlu0 %v628, %s633
        %v635 = vpop.permute.xlu0 %634
        %s637 = sor.u32 256, 16
        %638 = vbcast.lane.b32.xlu0 %v628, %s637
        %v639 = vpop.permute.xlu0 %638
        %s641 = sor.u32 256, 24
        %642 = vbcast.lane.b32.xlu0 %v628, %s641
        %v643 = vpop.permute.xlu0 %642
        %s645 = sor.u32 256, 32
        %646 = vbcast.lane.b32.xlu0 %v628, %s645
        %v647 = vpop.permute.xlu0 %646
        %s649 = sor.u32 256, 40
        %650 = vbcast.lane.b32.xlu0 %v628, %s649
        %v651 = vpop.permute.xlu0 %650
        %s653 = sor.u32 256, 48
        %654 = vbcast.lane.b32.xlu0 %v628, %s653
        %v655 = vpop.permute.xlu0 %654
        %s657 = sor.u32 256, 56
        %658 = vbcast.lane.b32.xlu0 %v628, %s657
        %v659 = vpop.permute.xlu0 %658
        %s661 = sor.u32 256, 64
        %662 = vbcast.lane.b32.xlu0 %v628, %s661
        %v663 = vpop.permute.xlu0 %662
        %s665 = sor.u32 256, 72
        %666 = vbcast.lane.b32.xlu0 %v628, %s665
        %v667 = vpop.permute.xlu0 %666
        %s669 = sor.u32 256, 80
        %670 = vbcast.lane.b32.xlu0 %v628, %s669
        %v671 = vpop.permute.xlu0 %670
        %s673 = sor.u32 256, 88
        %674 = vbcast.lane.b32.xlu0 %v628, %s673
        %v675 = vpop.permute.xlu0 %674
        %s677 = sor.u32 256, 96
        %678 = vbcast.lane.b32.xlu0 %v628, %s677
        %v679 = vpop.permute.xlu0 %678
        %s681 = sor.u32 256, 104
        %682 = vbcast.lane.b32.xlu0 %v628, %s681
        %v683 = vpop.permute.xlu0 %682
        %s685 = sor.u32 256, 112
        %686 = vbcast.lane.b32.xlu0 %v628, %s685
        %v687 = vpop.permute.xlu0 %686
        %s689 = sor.u32 256, 120
        %690 = vbcast.lane.b32.xlu0 %v628, %s689
        %v691 = vpop.permute.xlu0 %690
        %v692 = vlaneseq
        %v693 = vshrl.u32 %v692, 7
        %v694 = vsub.s32 4, %v693
        %v695 = vrot.slane %v380, %v694
        %697 = vbcast.lane.b32.xlu0 %v695, 256
        %v698 = vpop.permute.xlu0 %697
        %s700 = sor.u32 256, 8
        %701 = vbcast.lane.b32.xlu0 %v695, %s700
        %v702 = vpop.permute.xlu0 %701
        %s704 = sor.u32 256, 16
        %705 = vbcast.lane.b32.xlu0 %v695, %s704
        %v706 = vpop.permute.xlu0 %705
        %s708 = sor.u32 256, 24
        %709 = vbcast.lane.b32.xlu0 %v695, %s708
        %v710 = vpop.permute.xlu0 %709
        %s712 = sor.u32 256, 32
        %713 = vbcast.lane.b32.xlu0 %v695, %s712
        %v714 = vpop.permute.xlu0 %713
        %s716 = sor.u32 256, 40
        %717 = vbcast.lane.b32.xlu0 %v695, %s716
        %v718 = vpop.permute.xlu0 %717
        %s720 = sor.u32 256, 48
        %721 = vbcast.lane.b32.xlu0 %v695, %s720
        %v722 = vpop.permute.xlu0 %721
        %s724 = sor.u32 256, 56
        %725 = vbcast.lane.b32.xlu0 %v695, %s724
        %v726 = vpop.permute.xlu0 %725
        %s728 = sor.u32 256, 64
        %729 = vbcast.lane.b32.xlu0 %v695, %s728
        %v730 = vpop.permute.xlu0 %729
        %s732 = sor.u32 256, 72
        %733 = vbcast.lane.b32.xlu0 %v695, %s732
        %v734 = vpop.permute.xlu0 %733
        %s736 = sor.u32 256, 80
        %737 = vbcast.lane.b32.xlu0 %v695, %s736
        %v738 = vpop.permute.xlu0 %737
        %s740 = sor.u32 256, 88
        %741 = vbcast.lane.b32.xlu0 %v695, %s740
        %v742 = vpop.permute.xlu0 %741
        %s744 = sor.u32 256, 96
        %745 = vbcast.lane.b32.xlu0 %v695, %s744
        %v746 = vpop.permute.xlu0 %745
        %s748 = sor.u32 256, 104
        %749 = vbcast.lane.b32.xlu0 %v695, %s748
        %v750 = vpop.permute.xlu0 %749
        %s752 = sor.u32 256, 112
        %753 = vbcast.lane.b32.xlu0 %v695, %s752
        %v754 = vpop.permute.xlu0 %753
        %s756 = sor.u32 256, 120
        %757 = vbcast.lane.b32.xlu0 %v695, %s756
        %v758 = vpop.permute.xlu0 %757
        %v759 = vlaneseq
        %v760 = vshrl.u32 %v759, 7
        %v761 = vsub.s32 5, %v760
        %v762 = vrot.slane %v380, %v761
        %764 = vbcast.lane.b32.xlu0 %v762, 256
        %v765 = vpop.permute.xlu0 %764
        %s767 = sor.u32 256, 8
        %768 = vbcast.lane.b32.xlu0 %v762, %s767
        %v769 = vpop.permute.xlu0 %768
        %s771 = sor.u32 256, 16
        %772 = vbcast.lane.b32.xlu0 %v762, %s771
        %v773 = vpop.permute.xlu0 %772
        %s775 = sor.u32 256, 24
        %776 = vbcast.lane.b32.xlu0 %v762, %s775
        %v777 = vpop.permute.xlu0 %776
        %s779 = sor.u32 256, 32
        %780 = vbcast.lane.b32.xlu0 %v762, %s779
        %v781 = vpop.permute.xlu0 %780
        %s783 = sor.u32 256, 40
        %784 = vbcast.lane.b32.xlu0 %v762, %s783
        %v785 = vpop.permute.xlu0 %784
        %s787 = sor.u32 256, 48
        %788 = vbcast.lane.b32.xlu0 %v762, %s787
        %v789 = vpop.permute.xlu0 %788
        %s791 = sor.u32 256, 56
        %792 = vbcast.lane.b32.xlu0 %v762, %s791
        %v793 = vpop.permute.xlu0 %792
        %s795 = sor.u32 256, 64
        %796 = vbcast.lane.b32.xlu0 %v762, %s795
        %v797 = vpop.permute.xlu0 %796
        %s799 = sor.u32 256, 72
        %800 = vbcast.lane.b32.xlu0 %v762, %s799
        %v801 = vpop.permute.xlu0 %800
        %s803 = sor.u32 256, 80
        %804 = vbcast.lane.b32.xlu0 %v762, %s803
        %v805 = vpop.permute.xlu0 %804
        %s807 = sor.u32 256, 88
        %808 = vbcast.lane.b32.xlu0 %v762, %s807
        %v809 = vpop.permute.xlu0 %808
        %s811 = sor.u32 256, 96
        %812 = vbcast.lane.b32.xlu0 %v762, %s811
        %v813 = vpop.permute.xlu0 %812
        %s815 = sor.u32 256, 104
        %816 = vbcast.lane.b32.xlu0 %v762, %s815
        %v817 = vpop.permute.xlu0 %816
        %s819 = sor.u32 256, 112
        %820 = vbcast.lane.b32.xlu0 %v762, %s819
        %v821 = vpop.permute.xlu0 %820
        %s823 = sor.u32 256, 120
        %824 = vbcast.lane.b32.xlu0 %v762, %s823
        %v825 = vpop.permute.xlu0 %824
        %v826 = vlaneseq
        %v827 = vshrl.u32 %v826, 7
        %v828 = vsub.s32 6, %v827
        %v829 = vrot.slane %v380, %v828
        %831 = vbcast.lane.b32.xlu0 %v829, 256
        %v832 = vpop.permute.xlu0 %831
        %s834 = sor.u32 256, 8
        %835 = vbcast.lane.b32.xlu0 %v829, %s834
        %v836 = vpop.permute.xlu0 %835
        %s838 = sor.u32 256, 16
        %839 = vbcast.lane.b32.xlu0 %v829, %s838
        %v840 = vpop.permute.xlu0 %839
        %s842 = sor.u32 256, 24
        %843 = vbcast.lane.b32.xlu0 %v829, %s842
        %v844 = vpop.permute.xlu0 %843
        %s846 = sor.u32 256, 32
        %847 = vbcast.lane.b32.xlu0 %v829, %s846
        %v848 = vpop.permute.xlu0 %847
        %s850 = sor.u32 256, 40
        %851 = vbcast.lane.b32.xlu0 %v829, %s850
        %v852 = vpop.permute.xlu0 %851
        %s854 = sor.u32 256, 48
        %855 = vbcast.lane.b32.xlu0 %v829, %s854
        %v856 = vpop.permute.xlu0 %855
        %s858 = sor.u32 256, 56
        %859 = vbcast.lane.b32.xlu0 %v829, %s858
        %v860 = vpop.permute.xlu0 %859
        %s862 = sor.u32 256, 64
        %863 = vbcast.lane.b32.xlu0 %v829, %s862
        %v864 = vpop.permute.xlu0 %863
        %s866 = sor.u32 256, 72
        %867 = vbcast.lane.b32.xlu0 %v829, %s866
        %v868 = vpop.permute.xlu0 %867
        %s870 = sor.u32 256, 80
        %871 = vbcast.lane.b32.xlu0 %v829, %s870
        %v872 = vpop.permute.xlu0 %871
        %s874 = sor.u32 256, 88
        %875 = vbcast.lane.b32.xlu0 %v829, %s874
        %v876 = vpop.permute.xlu0 %875
        %s878 = sor.u32 256, 96
        %879 = vbcast.lane.b32.xlu0 %v829, %s878
        %v880 = vpop.permute.xlu0 %879
        %s882 = sor.u32 256, 104
        %883 = vbcast.lane.b32.xlu0 %v829, %s882
        %v884 = vpop.permute.xlu0 %883
        %s886 = sor.u32 256, 112
        %887 = vbcast.lane.b32.xlu0 %v829, %s886
        %v888 = vpop.permute.xlu0 %887
        %s890 = sor.u32 256, 120
        %891 = vbcast.lane.b32.xlu0 %v829, %s890
        %v892 = vpop.permute.xlu0 %891
        %v893 = vlaneseq
        %v894 = vshrl.u32 %v893, 7
        %v895 = vsub.s32 7, %v894
        %v896 = vrot.slane %v380, %v895
        %898 = vbcast.lane.b32.xlu0 %v896, 256
        %v899 = vpop.permute.xlu0 %898
        %s901 = sor.u32 256, 8
        %902 = vbcast.lane.b32.xlu0 %v896, %s901
        %v903 = vpop.permute.xlu0 %902
        %s905 = sor.u32 256, 16
        %906 = vbcast.lane.b32.xlu0 %v896, %s905
        %v907 = vpop.permute.xlu0 %906
        %s909 = sor.u32 256, 24
        %910 = vbcast.lane.b32.xlu0 %v896, %s909
        %v911 = vpop.permute.xlu0 %910
        %s913 = sor.u32 256, 32
        %914 = vbcast.lane.b32.xlu0 %v896, %s913
        %v915 = vpop.permute.xlu0 %914
        %s917 = sor.u32 256, 40
        %918 = vbcast.lane.b32.xlu0 %v896, %s917
        %v919 = vpop.permute.xlu0 %918
        %s921 = sor.u32 256, 48
        %922 = vbcast.lane.b32.xlu0 %v896, %s921
        %v923 = vpop.permute.xlu0 %922
        %s925 = sor.u32 256, 56
        %926 = vbcast.lane.b32.xlu0 %v896, %s925
        %v927 = vpop.permute.xlu0 %926
        %s929 = sor.u32 256, 64
        %930 = vbcast.lane.b32.xlu0 %v896, %s929
        %v931 = vpop.permute.xlu0 %930
        %s933 = sor.u32 256, 72
        %934 = vbcast.lane.b32.xlu0 %v896, %s933
        %v935 = vpop.permute.xlu0 %934
        %s937 = sor.u32 256, 80
        %938 = vbcast.lane.b32.xlu0 %v896, %s937
        %v939 = vpop.permute.xlu0 %938
        %s941 = sor.u32 256, 88
        %942 = vbcast.lane.b32.xlu0 %v896, %s941
        %v943 = vpop.permute.xlu0 %942
        %s945 = sor.u32 256, 96
        %946 = vbcast.lane.b32.xlu0 %v896, %s945
        %v947 = vpop.permute.xlu0 %946
        %s949 = sor.u32 256, 104
        %950 = vbcast.lane.b32.xlu0 %v896, %s949
        %v951 = vpop.permute.xlu0 %950
        %s953 = sor.u32 256, 112
        %954 = vbcast.lane.b32.xlu0 %v896, %s953
        %v955 = vpop.permute.xlu0 %954
        %s957 = sor.u32 256, 120
        %958 = vbcast.lane.b32.xlu0 %v896, %s957
        %v959 = vpop.permute.xlu0 %958
        %v960 = vlaneseq
        %v961 = vshrl.u32 %v960, 7
        %v962 = vsub.s32 0, %v961
        %v963 = vrot.slane %v423, %v962
        %965 = vbcast.lane.b32.xlu0 %v963, 256
        %v966 = vpop.permute.xlu0 %965
        %s968 = sor.u32 256, 8
        %969 = vbcast.lane.b32.xlu0 %v963, %s968
        %v970 = vpop.permute.xlu0 %969
        %s972 = sor.u32 256, 16
        %973 = vbcast.lane.b32.xlu0 %v963, %s972
        %v974 = vpop.permute.xlu0 %973
        %s976 = sor.u32 256, 24
        %977 = vbcast.lane.b32.xlu0 %v963, %s976
        %v978 = vpop.permute.xlu0 %977
        %s980 = sor.u32 256, 32
        %981 = vbcast.lane.b32.xlu0 %v963, %s980
        %v982 = vpop.permute.xlu0 %981
        %s984 = sor.u32 256, 40
        %985 = vbcast.lane.b32.xlu0 %v963, %s984
        %v986 = vpop.permute.xlu0 %985
        %s988 = sor.u32 256, 48
        %989 = vbcast.lane.b32.xlu0 %v963, %s988
        %v990 = vpop.permute.xlu0 %989
        %s992 = sor.u32 256, 56
        %993 = vbcast.lane.b32.xlu0 %v963, %s992
        %v994 = vpop.permute.xlu0 %993
        %s996 = sor.u32 256, 64
        %997 = vbcast.lane.b32.xlu0 %v963, %s996
        %v998 = vpop.permute.xlu0 %997
        %s1000 = sor.u32 256, 72
        %1001 = vbcast.lane.b32.xlu0 %v963, %s1000
        %v1002 = vpop.permute.xlu0 %1001
        %s1004 = sor.u32 256, 80
        %1005 = vbcast.lane.b32.xlu0 %v963, %s1004
        %v1006 = vpop.permute.xlu0 %1005
        %s1008 = sor.u32 256, 88
        %1009 = vbcast.lane.b32.xlu0 %v963, %s1008
        %v1010 = vpop.permute.xlu0 %1009
        %s1012 = sor.u32 256, 96
        %1013 = vbcast.lane.b32.xlu0 %v963, %s1012
        %v1014 = vpop.permute.xlu0 %1013
        %s1016 = sor.u32 256, 104
        %1017 = vbcast.lane.b32.xlu0 %v963, %s1016
        %v1018 = vpop.permute.xlu0 %1017
        %s1020 = sor.u32 256, 112
        %1021 = vbcast.lane.b32.xlu0 %v963, %s1020
        %v1022 = vpop.permute.xlu0 %1021
        %s1024 = sor.u32 256, 120
        %1025 = vbcast.lane.b32.xlu0 %v963, %s1024
        %v1026 = vpop.permute.xlu0 %1025
        %v1027 = vlaneseq
        %v1028 = vshrl.u32 %v1027, 7
        %v1029 = vsub.s32 1, %v1028
        %v1030 = vrot.slane %v423, %v1029
        %1032 = vbcast.lane.b32.xlu0 %v1030, 256
        %v1033 = vpop.permute.xlu0 %1032
        %s1035 = sor.u32 256, 8
        %1036 = vbcast.lane.b32.xlu0 %v1030, %s1035
        %v1037 = vpop.permute.xlu0 %1036
        %s1039 = sor.u32 256, 16
        %1040 = vbcast.lane.b32.xlu0 %v1030, %s1039
        %v1041 = vpop.permute.xlu0 %1040
        %s1043 = sor.u32 256, 24
        %1044 = vbcast.lane.b32.xlu0 %v1030, %s1043
        %v1045 = vpop.permute.xlu0 %1044
        %s1047 = sor.u32 256, 32
        %1048 = vbcast.lane.b32.xlu0 %v1030, %s1047
        %v1049 = vpop.permute.xlu0 %1048
        %s1051 = sor.u32 256, 40
        %1052 = vbcast.lane.b32.xlu0 %v1030, %s1051
        %v1053 = vpop.permute.xlu0 %1052
        %s1055 = sor.u32 256, 48
        %1056 = vbcast.lane.b32.xlu0 %v1030, %s1055
        %v1057 = vpop.permute.xlu0 %1056
        %s1059 = sor.u32 256, 56
        %1060 = vbcast.lane.b32.xlu0 %v1030, %s1059
        %v1061 = vpop.permute.xlu0 %1060
        %s1063 = sor.u32 256, 64
        %1064 = vbcast.lane.b32.xlu0 %v1030, %s1063
        %v1065 = vpop.permute.xlu0 %1064
        %s1067 = sor.u32 256, 72
        %1068 = vbcast.lane.b32.xlu0 %v1030, %s1067
        %v1069 = vpop.permute.xlu0 %1068
        %s1071 = sor.u32 256, 80
        %1072 = vbcast.lane.b32.xlu0 %v1030, %s1071
        %v1073 = vpop.permute.xlu0 %1072
        %s1075 = sor.u32 256, 88
        %1076 = vbcast.lane.b32.xlu0 %v1030, %s1075
        %v1077 = vpop.permute.xlu0 %1076
        %s1079 = sor.u32 256, 96
        %1080 = vbcast.lane.b32.xlu0 %v1030, %s1079
        %v1081 = vpop.permute.xlu0 %1080
        %s1083 = sor.u32 256, 104
        %1084 = vbcast.lane.b32.xlu0 %v1030, %s1083
        %v1085 = vpop.permute.xlu0 %1084
        %s1087 = sor.u32 256, 112
        %1088 = vbcast.lane.b32.xlu0 %v1030, %s1087
        %v1089 = vpop.permute.xlu0 %1088
        %s1091 = sor.u32 256, 120
        %1092 = vbcast.lane.b32.xlu0 %v1030, %s1091
        %v1093 = vpop.permute.xlu0 %1092
        %v1094 = vlaneseq
        %v1095 = vshrl.u32 %v1094, 7
        %v1096 = vsub.s32 2, %v1095
        %v1097 = vrot.slane %v423, %v1096
        %1099 = vbcast.lane.b32.xlu0 %v1097, 256
        %v1100 = vpop.permute.xlu0 %1099
        %s1102 = sor.u32 256, 8
        %1103 = vbcast.lane.b32.xlu0 %v1097, %s1102
        %v1104 = vpop.permute.xlu0 %1103
        %s1106 = sor.u32 256, 16
        %1107 = vbcast.lane.b32.xlu0 %v1097, %s1106
        %v1108 = vpop.permute.xlu0 %1107
        %s1110 = sor.u32 256, 24
        %1111 = vbcast.lane.b32.xlu0 %v1097, %s1110
        %v1112 = vpop.permute.xlu0 %1111
        %s1114 = sor.u32 256, 32
        %1115 = vbcast.lane.b32.xlu0 %v1097, %s1114
        %v1116 = vpop.permute.xlu0 %1115
        %s1118 = sor.u32 256, 40
        %1119 = vbcast.lane.b32.xlu0 %v1097, %s1118
        %v1120 = vpop.permute.xlu0 %1119
        %s1122 = sor.u32 256, 48
        %1123 = vbcast.lane.b32.xlu0 %v1097, %s1122
        %v1124 = vpop.permute.xlu0 %1123
        %s1126 = sor.u32 256, 56
        %1127 = vbcast.lane.b32.xlu0 %v1097, %s1126
        %v1128 = vpop.permute.xlu0 %1127
        %s1130 = sor.u32 256, 64
        %1131 = vbcast.lane.b32.xlu0 %v1097, %s1130
        %v1132 = vpop.permute.xlu0 %1131
        %s1134 = sor.u32 256, 72
        %1135 = vbcast.lane.b32.xlu0 %v1097, %s1134
        %v1136 = vpop.permute.xlu0 %1135
        %s1138 = sor.u32 256, 80
        %1139 = vbcast.lane.b32.xlu0 %v1097, %s1138
        %v1140 = vpop.permute.xlu0 %1139
        %s1142 = sor.u32 256, 88
        %1143 = vbcast.lane.b32.xlu0 %v1097, %s1142
        %v1144 = vpop.permute.xlu0 %1143
        %s1146 = sor.u32 256, 96
        %1147 = vbcast.lane.b32.xlu0 %v1097, %s1146
        %v1148 = vpop.permute.xlu0 %1147
        %s1150 = sor.u32 256, 104
        %1151 = vbcast.lane.b32.xlu0 %v1097, %s1150
        %v1152 = vpop.permute.xlu0 %1151
        %s1154 = sor.u32 256, 112
        %1155 = vbcast.lane.b32.xlu0 %v1097, %s1154
        %v1156 = vpop.permute.xlu0 %1155
        %s1158 = sor.u32 256, 120
        %1159 = vbcast.lane.b32.xlu0 %v1097, %s1158
        %v1160 = vpop.permute.xlu0 %1159
        %v1161 = vlaneseq
        %v1162 = vshrl.u32 %v1161, 7
        %v1163 = vsub.s32 3, %v1162
        %v1164 = vrot.slane %v423, %v1163
        %1166 = vbcast.lane.b32.xlu0 %v1164, 256
        %v1167 = vpop.permute.xlu0 %1166
        %s1169 = sor.u32 256, 8
        %1170 = vbcast.lane.b32.xlu0 %v1164, %s1169
        %v1171 = vpop.permute.xlu0 %1170
        %s1173 = sor.u32 256, 16
        %1174 = vbcast.lane.b32.xlu0 %v1164, %s1173
        %v1175 = vpop.permute.xlu0 %1174
        %s1177 = sor.u32 256, 24
        %1178 = vbcast.lane.b32.xlu0 %v1164, %s1177
        %v1179 = vpop.permute.xlu0 %1178
        %s1181 = sor.u32 256, 32
        %1182 = vbcast.lane.b32.xlu0 %v1164, %s1181
        %v1183 = vpop.permute.xlu0 %1182
        %s1185 = sor.u32 256, 40
        %1186 = vbcast.lane.b32.xlu0 %v1164, %s1185
        %v1187 = vpop.permute.xlu0 %1186
        %s1189 = sor.u32 256, 48
        %1190 = vbcast.lane.b32.xlu0 %v1164, %s1189
        %v1191 = vpop.permute.xlu0 %1190
        %s1193 = sor.u32 256, 56
        %1194 = vbcast.lane.b32.xlu0 %v1164, %s1193
        %v1195 = vpop.permute.xlu0 %1194
        %s1197 = sor.u32 256, 64
        %1198 = vbcast.lane.b32.xlu0 %v1164, %s1197
        %v1199 = vpop.permute.xlu0 %1198
        %s1201 = sor.u32 256, 72
        %1202 = vbcast.lane.b32.xlu0 %v1164, %s1201
        %v1203 = vpop.permute.xlu0 %1202
        %s1205 = sor.u32 256, 80
        %1206 = vbcast.lane.b32.xlu0 %v1164, %s1205
        %v1207 = vpop.permute.xlu0 %1206
        %s1209 = sor.u32 256, 88
        %1210 = vbcast.lane.b32.xlu0 %v1164, %s1209
        %v1211 = vpop.permute.xlu0 %1210
        %s1213 = sor.u32 256, 96
        %1214 = vbcast.lane.b32.xlu0 %v1164, %s1213
        %v1215 = vpop.permute.xlu0 %1214
        %s1217 = sor.u32 256, 104
        %1218 = vbcast.lane.b32.xlu0 %v1164, %s1217
        %v1219 = vpop.permute.xlu0 %1218
        %s1221 = sor.u32 256, 112
        %1222 = vbcast.lane.b32.xlu0 %v1164, %s1221
        %v1223 = vpop.permute.xlu0 %1222
        %s1225 = sor.u32 256, 120
        %1226 = vbcast.lane.b32.xlu0 %v1164, %s1225
        %v1227 = vpop.permute.xlu0 %1226
        %v1228 = vlaneseq
        %v1229 = vshrl.u32 %v1228, 7
        %v1230 = vsub.s32 4, %v1229
        %v1231 = vrot.slane %v423, %v1230
        %1233 = vbcast.lane.b32.xlu0 %v1231, 256
        %v1234 = vpop.permute.xlu0 %1233
        %s1236 = sor.u32 256, 8
        %1237 = vbcast.lane.b32.xlu0 %v1231, %s1236
        %v1238 = vpop.permute.xlu0 %1237
        %s1240 = sor.u32 256, 16
        %1241 = vbcast.lane.b32.xlu0 %v1231, %s1240
        %v1242 = vpop.permute.xlu0 %1241
        %s1244 = sor.u32 256, 24
        %1245 = vbcast.lane.b32.xlu0 %v1231, %s1244
        %v1246 = vpop.permute.xlu0 %1245
        %s1248 = sor.u32 256, 32
        %1249 = vbcast.lane.b32.xlu0 %v1231, %s1248
        %v1250 = vpop.permute.xlu0 %1249
        %s1252 = sor.u32 256, 40
        %1253 = vbcast.lane.b32.xlu0 %v1231, %s1252
        %v1254 = vpop.permute.xlu0 %1253
        %s1256 = sor.u32 256, 48
        %1257 = vbcast.lane.b32.xlu0 %v1231, %s1256
        %v1258 = vpop.permute.xlu0 %1257
        %s1260 = sor.u32 256, 56
        %1261 = vbcast.lane.b32.xlu0 %v1231, %s1260
        %v1262 = vpop.permute.xlu0 %1261
        %s1264 = sor.u32 256, 64
        %1265 = vbcast.lane.b32.xlu0 %v1231, %s1264
        %v1266 = vpop.permute.xlu0 %1265
        %s1268 = sor.u32 256, 72
        %1269 = vbcast.lane.b32.xlu0 %v1231, %s1268
        %v1270 = vpop.permute.xlu0 %1269
        %s1272 = sor.u32 256, 80
        %1273 = vbcast.lane.b32.xlu0 %v1231, %s1272
        %v1274 = vpop.permute.xlu0 %1273
        %s1276 = sor.u32 256, 88
        %1277 = vbcast.lane.b32.xlu0 %v1231, %s1276
        %v1278 = vpop.permute.xlu0 %1277
        %s1280 = sor.u32 256, 96
        %1281 = vbcast.lane.b32.xlu0 %v1231, %s1280
        %v1282 = vpop.permute.xlu0 %1281
        %s1284 = sor.u32 256, 104
        %1285 = vbcast.lane.b32.xlu0 %v1231, %s1284
        %v1286 = vpop.permute.xlu0 %1285
        %s1288 = sor.u32 256, 112
        %1289 = vbcast.lane.b32.xlu0 %v1231, %s1288
        %v1290 = vpop.permute.xlu0 %1289
        %s1292 = sor.u32 256, 120
        %1293 = vbcast.lane.b32.xlu0 %v1231, %s1292
        %v1294 = vpop.permute.xlu0 %1293
        %v1295 = vlaneseq
        %v1296 = vshrl.u32 %v1295, 7
        %v1297 = vsub.s32 5, %v1296
        %v1298 = vrot.slane %v423, %v1297
        %1300 = vbcast.lane.b32.xlu0 %v1298, 256
        %v1301 = vpop.permute.xlu0 %1300
        %s1303 = sor.u32 256, 8
        %1304 = vbcast.lane.b32.xlu0 %v1298, %s1303
        %v1305 = vpop.permute.xlu0 %1304
        %s1307 = sor.u32 256, 16
        %1308 = vbcast.lane.b32.xlu0 %v1298, %s1307
        %v1309 = vpop.permute.xlu0 %1308
        %s1311 = sor.u32 256, 24
        %1312 = vbcast.lane.b32.xlu0 %v1298, %s1311
        %v1313 = vpop.permute.xlu0 %1312
        %s1315 = sor.u32 256, 32
        %1316 = vbcast.lane.b32.xlu0 %v1298, %s1315
        %v1317 = vpop.permute.xlu0 %1316
        %s1319 = sor.u32 256, 40
        %1320 = vbcast.lane.b32.xlu0 %v1298, %s1319
        %v1321 = vpop.permute.xlu0 %1320
        %s1323 = sor.u32 256, 48
        %1324 = vbcast.lane.b32.xlu0 %v1298, %s1323
        %v1325 = vpop.permute.xlu0 %1324
        %s1327 = sor.u32 256, 56
        %1328 = vbcast.lane.b32.xlu0 %v1298, %s1327
        %v1329 = vpop.permute.xlu0 %1328
        %s1331 = sor.u32 256, 64
        %1332 = vbcast.lane.b32.xlu0 %v1298, %s1331
        %v1333 = vpop.permute.xlu0 %1332
        %s1335 = sor.u32 256, 72
        %1336 = vbcast.lane.b32.xlu0 %v1298, %s1335
        %v1337 = vpop.permute.xlu0 %1336
        %s1339 = sor.u32 256, 80
        %1340 = vbcast.lane.b32.xlu0 %v1298, %s1339
        %v1341 = vpop.permute.xlu0 %1340
        %s1343 = sor.u32 256, 88
        %1344 = vbcast.lane.b32.xlu0 %v1298, %s1343
        %v1345 = vpop.permute.xlu0 %1344
        %s1347 = sor.u32 256, 96
        %1348 = vbcast.lane.b32.xlu0 %v1298, %s1347
        %v1349 = vpop.permute.xlu0 %1348
        %s1351 = sor.u32 256, 104
        %1352 = vbcast.lane.b32.xlu0 %v1298, %s1351
        %v1353 = vpop.permute.xlu0 %1352
        %s1355 = sor.u32 256, 112
        %1356 = vbcast.lane.b32.xlu0 %v1298, %s1355
        %v1357 = vpop.permute.xlu0 %1356
        %s1359 = sor.u32 256, 120
        %1360 = vbcast.lane.b32.xlu0 %v1298, %s1359
        %v1361 = vpop.permute.xlu0 %1360
        %v1362 = vlaneseq
        %v1363 = vshrl.u32 %v1362, 7
        %v1364 = vsub.s32 6, %v1363
        %v1365 = vrot.slane %v423, %v1364
        %1367 = vbcast.lane.b32.xlu0 %v1365, 256
        %v1368 = vpop.permute.xlu0 %1367
        %s1370 = sor.u32 256, 8
        %1371 = vbcast.lane.b32.xlu0 %v1365, %s1370
        %v1372 = vpop.permute.xlu0 %1371
        %s1374 = sor.u32 256, 16
        %1375 = vbcast.lane.b32.xlu0 %v1365, %s1374
        %v1376 = vpop.permute.xlu0 %1375
        %s1378 = sor.u32 256, 24
        %1379 = vbcast.lane.b32.xlu0 %v1365, %s1378
        %v1380 = vpop.permute.xlu0 %1379
        %s1382 = sor.u32 256, 32
        %1383 = vbcast.lane.b32.xlu0 %v1365, %s1382
        %v1384 = vpop.permute.xlu0 %1383
        %s1386 = sor.u32 256, 40
        %1387 = vbcast.lane.b32.xlu0 %v1365, %s1386
        %v1388 = vpop.permute.xlu0 %1387
        %s1390 = sor.u32 256, 48
        %1391 = vbcast.lane.b32.xlu0 %v1365, %s1390
        %v1392 = vpop.permute.xlu0 %1391
        %s1394 = sor.u32 256, 56
        %1395 = vbcast.lane.b32.xlu0 %v1365, %s1394
        %v1396 = vpop.permute.xlu0 %1395
        %s1398 = sor.u32 256, 64
        %1399 = vbcast.lane.b32.xlu0 %v1365, %s1398
        %v1400 = vpop.permute.xlu0 %1399
        %s1402 = sor.u32 256, 72
        %1403 = vbcast.lane.b32.xlu0 %v1365, %s1402
        %v1404 = vpop.permute.xlu0 %1403
        %s1406 = sor.u32 256, 80
        %1407 = vbcast.lane.b32.xlu0 %v1365, %s1406
        %v1408 = vpop.permute.xlu0 %1407
        %s1410 = sor.u32 256, 88
        %1411 = vbcast.lane.b32.xlu0 %v1365, %s1410
        %v1412 = vpop.permute.xlu0 %1411
        %s1414 = sor.u32 256, 96
        %1415 = vbcast.lane.b32.xlu0 %v1365, %s1414
        %v1416 = vpop.permute.xlu0 %1415
        %s1418 = sor.u32 256, 104
        %1419 = vbcast.lane.b32.xlu0 %v1365, %s1418
        %v1420 = vpop.permute.xlu0 %1419
        %s1422 = sor.u32 256, 112
        %1423 = vbcast.lane.b32.xlu0 %v1365, %s1422
        %v1424 = vpop.permute.xlu0 %1423
        %s1426 = sor.u32 256, 120
        %1427 = vbcast.lane.b32.xlu0 %v1365, %s1426
        %v1428 = vpop.permute.xlu0 %1427
        %v1429 = vlaneseq
        %v1430 = vshrl.u32 %v1429, 7
        %v1431 = vsub.s32 7, %v1430
        %v1432 = vrot.slane %v423, %v1431
        %1434 = vbcast.lane.b32.xlu0 %v1432, 256
        %v1435 = vpop.permute.xlu0 %1434
        %s1437 = sor.u32 256, 8
        %1438 = vbcast.lane.b32.xlu0 %v1432, %s1437
        %v1439 = vpop.permute.xlu0 %1438
        %s1441 = sor.u32 256, 16
        %1442 = vbcast.lane.b32.xlu0 %v1432, %s1441
        %v1443 = vpop.permute.xlu0 %1442
        %s1445 = sor.u32 256, 24
        %1446 = vbcast.lane.b32.xlu0 %v1432, %s1445
        %v1447 = vpop.permute.xlu0 %1446
        %s1449 = sor.u32 256, 32
        %1450 = vbcast.lane.b32.xlu0 %v1432, %s1449
        %v1451 = vpop.permute.xlu0 %1450
        %s1453 = sor.u32 256, 40
        %1454 = vbcast.lane.b32.xlu0 %v1432, %s1453
        %v1455 = vpop.permute.xlu0 %1454
        %s1457 = sor.u32 256, 48
        %1458 = vbcast.lane.b32.xlu0 %v1432, %s1457
        %v1459 = vpop.permute.xlu0 %1458
        %s1461 = sor.u32 256, 56
        %1462 = vbcast.lane.b32.xlu0 %v1432, %s1461
        %v1463 = vpop.permute.xlu0 %1462
        %s1465 = sor.u32 256, 64
        %1466 = vbcast.lane.b32.xlu0 %v1432, %s1465
        %v1467 = vpop.permute.xlu0 %1466
        %s1469 = sor.u32 256, 72
        %1470 = vbcast.lane.b32.xlu0 %v1432, %s1469
        %v1471 = vpop.permute.xlu0 %1470
        %s1473 = sor.u32 256, 80
        %1474 = vbcast.lane.b32.xlu0 %v1432, %s1473
        %v1475 = vpop.permute.xlu0 %1474
        %s1477 = sor.u32 256, 88
        %1478 = vbcast.lane.b32.xlu0 %v1432, %s1477
        %v1479 = vpop.permute.xlu0 %1478
        %s1481 = sor.u32 256, 96
        %1482 = vbcast.lane.b32.xlu0 %v1432, %s1481
        %v1483 = vpop.permute.xlu0 %1482
        %s1485 = sor.u32 256, 104
        %1486 = vbcast.lane.b32.xlu0 %v1432, %s1485
        %v1487 = vpop.permute.xlu0 %1486
        %s1489 = sor.u32 256, 112
        %1490 = vbcast.lane.b32.xlu0 %v1432, %s1489
        %v1491 = vpop.permute.xlu0 %1490
        %s1493 = sor.u32 256, 120
        %1494 = vbcast.lane.b32.xlu0 %v1432, %s1493
        %v1495 = vpop.permute.xlu0 %1494
        %vm1496 = vcmask 7168
        %v1497 = vsel %vm1496, %v430, %v966
        %v1498 = vsel %vm1496, %v434, %v970
        %v1499 = vsel %vm1496, %v438, %v974
        %v1500 = vsel %vm1496, %v442, %v978
        %v1501 = vsel %vm1496, %v446, %v982
        %v1502 = vsel %vm1496, %v450, %v986
        %v1503 = vsel %vm1496, %v454, %v990
        %v1504 = vsel %vm1496, %v458, %v994
        %v1505 = vsel %vm1496, %v462, %v998
        %v1506 = vsel %vm1496, %v466, %v1002
        %v1507 = vsel %vm1496, %v470, %v1006
        %v1508 = vsel %vm1496, %v474, %v1010
        %v1509 = vsel %vm1496, %v478, %v1014
        %v1510 = vsel %vm1496, %v482, %v1018
        %v1511 = vsel %vm1496, %v486, %v1022
        %v1512 = vsel %vm1496, %v490, %v1026
        %v1513 = vsel %vm1496, %v497, %v1033
        %v1514 = vsel %vm1496, %v501, %v1037
        %v1515 = vsel %vm1496, %v505, %v1041
        %v1516 = vsel %vm1496, %v509, %v1045
        %v1517 = vsel %vm1496, %v513, %v1049
        %v1518 = vsel %vm1496, %v517, %v1053
        %v1519 = vsel %vm1496, %v521, %v1057
        %v1520 = vsel %vm1496, %v525, %v1061
        %v1521 = vsel %vm1496, %v529, %v1065
        %v1522 = vsel %vm1496, %v533, %v1069
        %v1523 = vsel %vm1496, %v537, %v1073
        %v1524 = vsel %vm1496, %v541, %v1077
        %v1525 = vsel %vm1496, %v545, %v1081
        %v1526 = vsel %vm1496, %v549, %v1085
        %v1527 = vsel %vm1496, %v553, %v1089
        %v1528 = vsel %vm1496, %v557, %v1093
        %v1529 = vsel %vm1496, %v564, %v1100
        %v1530 = vsel %vm1496, %v568, %v1104
        %v1531 = vsel %vm1496, %v572, %v1108
        %v1532 = vsel %vm1496, %v576, %v1112
        %v1533 = vsel %vm1496, %v580, %v1116
        %v1534 = vsel %vm1496, %v584, %v1120
        %v1535 = vsel %vm1496, %v588, %v1124
        %v1536 = vsel %vm1496, %v592, %v1128
        %v1537 = vsel %vm1496, %v596, %v1132
        %v1538 = vsel %vm1496, %v600, %v1136
        %v1539 = vsel %vm1496, %v604, %v1140
        %v1540 = vsel %vm1496, %v608, %v1144
        %v1541 = vsel %vm1496, %v612, %v1148
        %v1542 = vsel %vm1496, %v616, %v1152
        %v1543 = vsel %vm1496, %v620, %v1156
        %v1544 = vsel %vm1496, %v624, %v1160
        %v1545 = vsel %vm1496, %v631, %v1167
        %v1546 = vsel %vm1496, %v635, %v1171
        %v1547 = vsel %vm1496, %v639, %v1175
        %v1548 = vsel %vm1496, %v643, %v1179
        %v1549 = vsel %vm1496, %v647, %v1183
        %v1550 = vsel %vm1496, %v651, %v1187
        %v1551 = vsel %vm1496, %v655, %v1191
        %v1552 = vsel %vm1496, %v659, %v1195
        %v1553 = vsel %vm1496, %v663, %v1199
        %v1554 = vsel %vm1496, %v667, %v1203
        %v1555 = vsel %vm1496, %v671, %v1207
        %v1556 = vsel %vm1496, %v675, %v1211
        %v1557 = vsel %vm1496, %v679, %v1215
        %v1558 = vsel %vm1496, %v683, %v1219
        %v1559 = vsel %vm1496, %v687, %v1223
        %v1560 = vsel %vm1496, %v691, %v1227
        %v1561 = vsel %vm1496, %v698, %v1234
        %v1562 = vsel %vm1496, %v702, %v1238
        %v1563 = vsel %vm1496, %v706, %v1242
        %v1564 = vsel %vm1496, %v710, %v1246
        %v1565 = vsel %vm1496, %v714, %v1250
        %v1566 = vsel %vm1496, %v718, %v1254
        %v1567 = vsel %vm1496, %v722, %v1258
        %v1568 = vsel %vm1496, %v726, %v1262
        %v1569 = vsel %vm1496, %v730, %v1266
        %v1570 = vsel %vm1496, %v734, %v1270
        %v1571 = vsel %vm1496, %v738, %v1274
        %v1572 = vsel %vm1496, %v742, %v1278
        %v1573 = vsel %vm1496, %v746, %v1282
        %v1574 = vsel %vm1496, %v750, %v1286
        %v1575 = vsel %vm1496, %v754, %v1290
        %v1576 = vsel %vm1496, %v758, %v1294
        %v1577 = vsel %vm1496, %v765, %v1301
        %v1578 = vsel %vm1496, %v769, %v1305
        %v1579 = vsel %vm1496, %v773, %v1309
        %v1580 = vsel %vm1496, %v777, %v1313
        %v1581 = vsel %vm1496, %v781, %v1317
        %v1582 = vsel %vm1496, %v785, %v1321
        %v1583 = vsel %vm1496, %v789, %v1325
        %v1584 = vsel %vm1496, %v793, %v1329
        %v1585 = vsel %vm1496, %v797, %v1333
        %v1586 = vsel %vm1496, %v801, %v1337
        %v1587 = vsel %vm1496, %v805, %v1341
        %v1588 = vsel %vm1496, %v809, %v1345
        %v1589 = vsel %vm1496, %v813, %v1349
        %v1590 = vsel %vm1496, %v817, %v1353
        %v1591 = vsel %vm1496, %v821, %v1357
        %v1592 = vsel %vm1496, %v825, %v1361
        %v1593 = vsel %vm1496, %v832, %v1368
        %v1594 = vsel %vm1496, %v836, %v1372
        %v1595 = vsel %vm1496, %v840, %v1376
        %v1596 = vsel %vm1496, %v844, %v1380
        %v1597 = vsel %vm1496, %v848, %v1384
        %v1598 = vsel %vm1496, %v852, %v1388
        %v1599 = vsel %vm1496, %v856, %v1392
        %v1600 = vsel %vm1496, %v860, %v1396
        %v1601 = vsel %vm1496, %v864, %v1400
        %v1602 = vsel %vm1496, %v868, %v1404
        %v1603 = vsel %vm1496, %v872, %v1408
        %v1604 = vsel %vm1496, %v876, %v1412
        %v1605 = vsel %vm1496, %v880, %v1416
        %v1606 = vsel %vm1496, %v884, %v1420
        %v1607 = vsel %vm1496, %v888, %v1424
        %v1608 = vsel %vm1496, %v892, %v1428
        %v1609 = vsel %vm1496, %v899, %v1435
        %v1610 = vsel %vm1496, %v903, %v1439
        %v1611 = vsel %vm1496, %v907, %v1443
        %v1612 = vsel %vm1496, %v911, %v1447
        %v1613 = vsel %vm1496, %v915, %v1451
        %v1614 = vsel %vm1496, %v919, %v1455
        %v1615 = vsel %vm1496, %v923, %v1459
        %v1616 = vsel %vm1496, %v927, %v1463
        %v1617 = vsel %vm1496, %v931, %v1467
        %v1618 = vsel %vm1496, %v935, %v1471
        %v1619 = vsel %vm1496, %v939, %v1475
        %v1620 = vsel %vm1496, %v943, %v1479
        %v1621 = vsel %vm1496, %v947, %v1483
        %v1622 = vsel %vm1496, %v951, %v1487
        %v1623 = vsel %vm1496, %v955, %v1491
        %v1624 = vsel %vm1496, %v959, %v1495
        %v1625 = vcombine.low %v1497, %v1529
        %v1626 = vcombine.high %v1497, %v1529
        %v1628 = vunpack.c.l.s4 1983009808
        %v1629 = vunpack.c.0.s8 %v1628
        %v1630 = vlaneseq
        %v1631 = vshrl.u32 %v1630, 7
        %v1632 = vsub.s32 %v1629, %v1631
        %v1633 = vrot.slane %v1625, %v1632
        %v1635 = vunpack.c.l.s4 1983009808
        %v1636 = vunpack.c.0.s8 %v1635
        %v1637 = vlaneseq
        %v1638 = vshrl.u32 %v1637, 7
        %v1639 = vsub.s32 %v1636, %v1638
        %v1640 = vrot.slane %v1626, %v1639
        %v1641 = vcombine.low %v1513, %v1545
        %v1642 = vcombine.high %v1513, %v1545
        %v1644 = vunpack.c.l.s4 1983009808
        %v1645 = vunpack.c.0.s8 %v1644
        %v1646 = vlaneseq
        %v1647 = vshrl.u32 %v1646, 7
        %v1648 = vsub.s32 %v1645, %v1647
        %v1649 = vrot.slane %v1641, %v1648
        %v1651 = vunpack.c.l.s4 1983009808
        %v1652 = vunpack.c.0.s8 %v1651
        %v1653 = vlaneseq
        %v1654 = vshrl.u32 %v1653, 7
        %v1655 = vsub.s32 %v1652, %v1654
        %v1656 = vrot.slane %v1642, %v1655
        %v1657 = vcombine.low %v1561, %v1593
        %v1658 = vcombine.high %v1561, %v1593
        %v1660 = vunpack.c.l.s4 1983009808
        %v1661 = vunpack.c.0.s8 %v1660
        %v1662 = vlaneseq
        %v1663 = vshrl.u32 %v1662, 7
        %v1664 = vsub.s32 %v1661, %v1663
        %v1665 = vrot.slane %v1657, %v1664
        %v1667 = vunpack.c.l.s4 1983009808
        %v1668 = vunpack.c.0.s8 %v1667
        %v1669 = vlaneseq
        %v1670 = vshrl.u32 %v1669, 7
        %v1671 = vsub.s32 %v1668, %v1670
        %v1672 = vrot.slane %v1658, %v1671
        %v1673 = vcombine.low %v1577, %v1609
        %v1674 = vcombine.high %v1577, %v1609
        %v1676 = vunpack.c.l.s4 1983009808
        %v1677 = vunpack.c.0.s8 %v1676
        %v1678 = vlaneseq
        %v1679 = vshrl.u32 %v1678, 7
        %v1680 = vsub.s32 %v1677, %v1679
        %v1681 = vrot.slane %v1673, %v1680
        %v1683 = vunpack.c.l.s4 1983009808
        %v1684 = vunpack.c.0.s8 %v1683
        %v1685 = vlaneseq
        %v1686 = vshrl.u32 %v1685, 7
        %v1687 = vsub.s32 %v1684, %v1686
        %v1688 = vrot.slane %v1674, %v1687
        %v1689 = vcombine.low %v1633, %v1649
        %v1690 = vcombine.high %v1633, %v1649
        %v1692 = vunpack.c.l.s4 1934713408
        %v1693 = vunpack.c.0.s8 %v1692
        %v1694 = vlaneseq
        %v1695 = vshrl.u32 %v1694, 7
        %v1696 = vsub.s32 %v1693, %v1695
        %v1697 = vrot.slane %v1689, %v1696
        %v1699 = vunpack.c.l.s4 1934713408
        %v1700 = vunpack.c.0.s8 %v1699
        %v1701 = vlaneseq
        %v1702 = vshrl.u32 %v1701, 7
        %v1703 = vsub.s32 %v1700, %v1702
        %v1704 = vrot.slane %v1690, %v1703
        %v1705 = vcombine.low %v1640, %v1656
        %v1706 = vcombine.high %v1640, %v1656
        %v1708 = vunpack.c.l.s4 1934713408
        %v1709 = vunpack.c.0.s8 %v1708
        %v1710 = vlaneseq
        %v1711 = vshrl.u32 %v1710, 7
        %v1712 = vsub.s32 %v1709, %v1711
        %v1713 = vrot.slane %v1705, %v1712
        %v1715 = vunpack.c.l.s4 1934713408
        %v1716 = vunpack.c.0.s8 %v1715
        %v1717 = vlaneseq
        %v1718 = vshrl.u32 %v1717, 7
        %v1719 = vsub.s32 %v1716, %v1718
        %v1720 = vrot.slane %v1706, %v1719
        %v1721 = vcombine.low %v1665, %v1681
        %v1722 = vcombine.high %v1665, %v1681
        %v1724 = vunpack.c.l.s4 1934713408
        %v1725 = vunpack.c.0.s8 %v1724
        %v1726 = vlaneseq
        %v1727 = vshrl.u32 %v1726, 7
        %v1728 = vsub.s32 %v1725, %v1727
        %v1729 = vrot.slane %v1721, %v1728
        %v1731 = vunpack.c.l.s4 1934713408
        %v1732 = vunpack.c.0.s8 %v1731
        %v1733 = vlaneseq
        %v1734 = vshrl.u32 %v1733, 7
        %v1735 = vsub.s32 %v1732, %v1734
        %v1736 = vrot.slane %v1722, %v1735
        %v1737 = vcombine.low %v1672, %v1688
        %v1738 = vcombine.high %v1672, %v1688
        %v1740 = vunpack.c.l.s4 1934713408
        %v1741 = vunpack.c.0.s8 %v1740
        %v1742 = vlaneseq
        %v1743 = vshrl.u32 %v1742, 7
        %v1744 = vsub.s32 %v1741, %v1743
        %v1745 = vrot.slane %v1737, %v1744
        %v1747 = vunpack.c.l.s4 1934713408
        %v1748 = vunpack.c.0.s8 %v1747
        %v1749 = vlaneseq
        %v1750 = vshrl.u32 %v1749, 7
        %v1751 = vsub.s32 %v1748, %v1750
        %v1752 = vrot.slane %v1738, %v1751
        %v1753 = vcombine.low %v1697, %v1729
        %v1754 = vcombine.high %v1697, %v1729
        %v1755 = vcombine.low %v1704, %v1736
        %v1756 = vcombine.high %v1704, %v1736
        %v1757 = vcombine.low %v1713, %v1745
        %v1758 = vcombine.high %v1713, %v1745
        %v1759 = vcombine.low %v1720, %v1752
        %v1760 = vcombine.high %v1720, %v1752
        %v1761 = vcombine.low %v1498, %v1530
        %v1762 = vcombine.high %v1498, %v1530
        %v1764 = vunpack.c.l.s4 1983009808
        %v1765 = vunpack.c.0.s8 %v1764
        %v1766 = vlaneseq
        %v1767 = vshrl.u32 %v1766, 7
        %v1768 = vsub.s32 %v1765, %v1767
        %v1769 = vrot.slane %v1761, %v1768
        %v1771 = vunpack.c.l.s4 1983009808
        %v1772 = vunpack.c.0.s8 %v1771
        %v1773 = vlaneseq
        %v1774 = vshrl.u32 %v1773, 7
        %v1775 = vsub.s32 %v1772, %v1774
        %v1776 = vrot.slane %v1762, %v1775
        %v1777 = vcombine.low %v1514, %v1546
        %v1778 = vcombine.high %v1514, %v1546
        %v1780 = vunpack.c.l.s4 1983009808
        %v1781 = vunpack.c.0.s8 %v1780
        %v1782 = vlaneseq
        %v1783 = vshrl.u32 %v1782, 7
        %v1784 = vsub.s32 %v1781, %v1783
        %v1785 = vrot.slane %v1777, %v1784
        %v1787 = vunpack.c.l.s4 1983009808
        %v1788 = vunpack.c.0.s8 %v1787
        %v1789 = vlaneseq
        %v1790 = vshrl.u32 %v1789, 7
        %v1791 = vsub.s32 %v1788, %v1790
        %v1792 = vrot.slane %v1778, %v1791
        %v1793 = vcombine.low %v1562, %v1594
        %v1794 = vcombine.high %v1562, %v1594
        %v1796 = vunpack.c.l.s4 1983009808
        %v1797 = vunpack.c.0.s8 %v1796
        %v1798 = vlaneseq
        %v1799 = vshrl.u32 %v1798, 7
        %v1800 = vsub.s32 %v1797, %v1799
        %v1801 = vrot.slane %v1793, %v1800
        %v1803 = vunpack.c.l.s4 1983009808
        %v1804 = vunpack.c.0.s8 %v1803
        %v1805 = vlaneseq
        %v1806 = vshrl.u32 %v1805, 7
        %v1807 = vsub.s32 %v1804, %v1806
        %v1808 = vrot.slane %v1794, %v1807
        %v1809 = vcombine.low %v1578, %v1610
        %v1810 = vcombine.high %v1578, %v1610
        %v1812 = vunpack.c.l.s4 1983009808
        %v1813 = vunpack.c.0.s8 %v1812
        %v1814 = vlaneseq
        %v1815 = vshrl.u32 %v1814, 7
        %v1816 = vsub.s32 %v1813, %v1815
        %v1817 = vrot.slane %v1809, %v1816
        %v1819 = vunpack.c.l.s4 1983009808
        %v1820 = vunpack.c.0.s8 %v1819
        %v1821 = vlaneseq
        %v1822 = vshrl.u32 %v1821, 7
        %v1823 = vsub.s32 %v1820, %v1822
        %v1824 = vrot.slane %v1810, %v1823
        %v1825 = vcombine.low %v1769, %v1785
        %v1826 = vcombine.high %v1769, %v1785
        %v1828 = vunpack.c.l.s4 1934713408
        %v1829 = vunpack.c.0.s8 %v1828
        %v1830 = vlaneseq
        %v1831 = vshrl.u32 %v1830, 7
        %v1832 = vsub.s32 %v1829, %v1831
        %v1833 = vrot.slane %v1825, %v1832
        %v1835 = vunpack.c.l.s4 1934713408
        %v1836 = vunpack.c.0.s8 %v1835
        %v1837 = vlaneseq
        %v1838 = vshrl.u32 %v1837, 7
        %v1839 = vsub.s32 %v1836, %v1838
        %v1840 = vrot.slane %v1826, %v1839
        %v1841 = vcombine.low %v1776, %v1792
        %v1842 = vcombine.high %v1776, %v1792
        %v1844 = vunpack.c.l.s4 1934713408
        %v1845 = vunpack.c.0.s8 %v1844
        %v1846 = vlaneseq
        %v1847 = vshrl.u32 %v1846, 7
        %v1848 = vsub.s32 %v1845, %v1847
        %v1849 = vrot.slane %v1841, %v1848
        %v1851 = vunpack.c.l.s4 1934713408
        %v1852 = vunpack.c.0.s8 %v1851
        %v1853 = vlaneseq
        %v1854 = vshrl.u32 %v1853, 7
        %v1855 = vsub.s32 %v1852, %v1854
        %v1856 = vrot.slane %v1842, %v1855
        %v1857 = vcombine.low %v1801, %v1817
        %v1858 = vcombine.high %v1801, %v1817
        %v1860 = vunpack.c.l.s4 1934713408
        %v1861 = vunpack.c.0.s8 %v1860
        %v1862 = vlaneseq
        %v1863 = vshrl.u32 %v1862, 7
        %v1864 = vsub.s32 %v1861, %v1863
        %v1865 = vrot.slane %v1857, %v1864
        %v1867 = vunpack.c.l.s4 1934713408
        %v1868 = vunpack.c.0.s8 %v1867
        %v1869 = vlaneseq
        %v1870 = vshrl.u32 %v1869, 7
        %v1871 = vsub.s32 %v1868, %v1870
        %v1872 = vrot.slane %v1858, %v1871
        %v1873 = vcombine.low %v1808, %v1824
        %v1874 = vcombine.high %v1808, %v1824
        %v1876 = vunpack.c.l.s4 1934713408
        %v1877 = vunpack.c.0.s8 %v1876
        %v1878 = vlaneseq
        %v1879 = vshrl.u32 %v1878, 7
        %v1880 = vsub.s32 %v1877, %v1879
        %v1881 = vrot.slane %v1873, %v1880
        %v1883 = vunpack.c.l.s4 1934713408
        %v1884 = vunpack.c.0.s8 %v1883
        %v1885 = vlaneseq
        %v1886 = vshrl.u32 %v1885, 7
        %v1887 = vsub.s32 %v1884, %v1886
        %v1888 = vrot.slane %v1874, %v1887
        %v1889 = vcombine.low %v1833, %v1865
        %v1890 = vcombine.high %v1833, %v1865
        %v1891 = vcombine.low %v1840, %v1872
        %v1892 = vcombine.high %v1840, %v1872
        %v1893 = vcombine.low %v1849, %v1881
        %v1894 = vcombine.high %v1849, %v1881
        %v1895 = vcombine.low %v1856, %v1888
        %v1896 = vcombine.high %v1856, %v1888
        %v1897 = vcombine.low %v1499, %v1531
        %v1898 = vcombine.high %v1499, %v1531
        %v1900 = vunpack.c.l.s4 1983009808
        %v1901 = vunpack.c.0.s8 %v1900
        %v1902 = vlaneseq
        %v1903 = vshrl.u32 %v1902, 7
        %v1904 = vsub.s32 %v1901, %v1903
        %v1905 = vrot.slane %v1897, %v1904
        %v1907 = vunpack.c.l.s4 1983009808
        %v1908 = vunpack.c.0.s8 %v1907
        %v1909 = vlaneseq
        %v1910 = vshrl.u32 %v1909, 7
        %v1911 = vsub.s32 %v1908, %v1910
        %v1912 = vrot.slane %v1898, %v1911
        %v1913 = vcombine.low %v1515, %v1547
        %v1914 = vcombine.high %v1515, %v1547
        %v1916 = vunpack.c.l.s4 1983009808
        %v1917 = vunpack.c.0.s8 %v1916
        %v1918 = vlaneseq
        %v1919 = vshrl.u32 %v1918, 7
        %v1920 = vsub.s32 %v1917, %v1919
        %v1921 = vrot.slane %v1913, %v1920
        %v1923 = vunpack.c.l.s4 1983009808
        %v1924 = vunpack.c.0.s8 %v1923
        %v1925 = vlaneseq
        %v1926 = vshrl.u32 %v1925, 7
        %v1927 = vsub.s32 %v1924, %v1926
        %v1928 = vrot.slane %v1914, %v1927
        %v1929 = vcombine.low %v1563, %v1595
        %v1930 = vcombine.high %v1563, %v1595
        %v1932 = vunpack.c.l.s4 1983009808
        %v1933 = vunpack.c.0.s8 %v1932
        %v1934 = vlaneseq
        %v1935 = vshrl.u32 %v1934, 7
        %v1936 = vsub.s32 %v1933, %v1935
        %v1937 = vrot.slane %v1929, %v1936
        %v1939 = vunpack.c.l.s4 1983009808
        %v1940 = vunpack.c.0.s8 %v1939
        %v1941 = vlaneseq
        %v1942 = vshrl.u32 %v1941, 7
        %v1943 = vsub.s32 %v1940, %v1942
        %v1944 = vrot.slane %v1930, %v1943
        %v1945 = vcombine.low %v1579, %v1611
        %v1946 = vcombine.high %v1579, %v1611
        %v1948 = vunpack.c.l.s4 1983009808
        %v1949 = vunpack.c.0.s8 %v1948
        %v1950 = vlaneseq
        %v1951 = vshrl.u32 %v1950, 7
        %v1952 = vsub.s32 %v1949, %v1951
        %v1953 = vrot.slane %v1945, %v1952
        %v1955 = vunpack.c.l.s4 1983009808
        %v1956 = vunpack.c.0.s8 %v1955
        %v1957 = vlaneseq
        %v1958 = vshrl.u32 %v1957, 7
        %v1959 = vsub.s32 %v1956, %v1958
        %v1960 = vrot.slane %v1946, %v1959
        %v1961 = vcombine.low %v1905, %v1921
        %v1962 = vcombine.high %v1905, %v1921
        %v1964 = vunpack.c.l.s4 1934713408
        %v1965 = vunpack.c.0.s8 %v1964
        %v1966 = vlaneseq
        %v1967 = vshrl.u32 %v1966, 7
        %v1968 = vsub.s32 %v1965, %v1967
        %v1969 = vrot.slane %v1961, %v1968
        %v1971 = vunpack.c.l.s4 1934713408
        %v1972 = vunpack.c.0.s8 %v1971
        %v1973 = vlaneseq
        %v1974 = vshrl.u32 %v1973, 7
        %v1975 = vsub.s32 %v1972, %v1974
        %v1976 = vrot.slane %v1962, %v1975
        %v1977 = vcombine.low %v1912, %v1928
        %v1978 = vcombine.high %v1912, %v1928
        %v1980 = vunpack.c.l.s4 1934713408
        %v1981 = vunpack.c.0.s8 %v1980
        %v1982 = vlaneseq
        %v1983 = vshrl.u32 %v1982, 7
        %v1984 = vsub.s32 %v1981, %v1983
        %v1985 = vrot.slane %v1977, %v1984
        %v1987 = vunpack.c.l.s4 1934713408
        %v1988 = vunpack.c.0.s8 %v1987
        %v1989 = vlaneseq
        %v1990 = vshrl.u32 %v1989, 7
        %v1991 = vsub.s32 %v1988, %v1990
        %v1992 = vrot.slane %v1978, %v1991
        %v1993 = vcombine.low %v1937, %v1953
        %v1994 = vcombine.high %v1937, %v1953
        %v1996 = vunpack.c.l.s4 1934713408
        %v1997 = vunpack.c.0.s8 %v1996
        %v1998 = vlaneseq
        %v1999 = vshrl.u32 %v1998, 7
        %v2000 = vsub.s32 %v1997, %v1999
        %v2001 = vrot.slane %v1993, %v2000
        %v2003 = vunpack.c.l.s4 1934713408
        %v2004 = vunpack.c.0.s8 %v2003
        %v2005 = vlaneseq
        %v2006 = vshrl.u32 %v2005, 7
        %v2007 = vsub.s32 %v2004, %v2006
        %v2008 = vrot.slane %v1994, %v2007
        %v2009 = vcombine.low %v1944, %v1960
        %v2010 = vcombine.high %v1944, %v1960
        %v2012 = vunpack.c.l.s4 1934713408
        %v2013 = vunpack.c.0.s8 %v2012
        %v2014 = vlaneseq
        %v2015 = vshrl.u32 %v2014, 7
        %v2016 = vsub.s32 %v2013, %v2015
        %v2017 = vrot.slane %v2009, %v2016
        %v2019 = vunpack.c.l.s4 1934713408
        %v2020 = vunpack.c.0.s8 %v2019
        %v2021 = vlaneseq
        %v2022 = vshrl.u32 %v2021, 7
        %v2023 = vsub.s32 %v2020, %v2022
        %v2024 = vrot.slane %v2010, %v2023
        %v2025 = vcombine.low %v1969, %v2001
        %v2026 = vcombine.high %v1969, %v2001
        %v2027 = vcombine.low %v1976, %v2008
        %v2028 = vcombine.high %v1976, %v2008
        %v2029 = vcombine.low %v1985, %v2017
        %v2030 = vcombine.high %v1985, %v2017
        %v2031 = vcombine.low %v1992, %v2024
        %v2032 = vcombine.high %v1992, %v2024
        %v2033 = vcombine.low %v1500, %v1532
        %v2034 = vcombine.high %v1500, %v1532
        %v2036 = vunpack.c.l.s4 1983009808
        %v2037 = vunpack.c.0.s8 %v2036
        %v2038 = vlaneseq
        %v2039 = vshrl.u32 %v2038, 7
        %v2040 = vsub.s32 %v2037, %v2039
        %v2041 = vrot.slane %v2033, %v2040
        %v2043 = vunpack.c.l.s4 1983009808
        %v2044 = vunpack.c.0.s8 %v2043
        %v2045 = vlaneseq
        %v2046 = vshrl.u32 %v2045, 7
        %v2047 = vsub.s32 %v2044, %v2046
        %v2048 = vrot.slane %v2034, %v2047
        %v2049 = vcombine.low %v1516, %v1548
        %v2050 = vcombine.high %v1516, %v1548
        %v2052 = vunpack.c.l.s4 1983009808
        %v2053 = vunpack.c.0.s8 %v2052
        %v2054 = vlaneseq
        %v2055 = vshrl.u32 %v2054, 7
        %v2056 = vsub.s32 %v2053, %v2055
        %v2057 = vrot.slane %v2049, %v2056
        %v2059 = vunpack.c.l.s4 1983009808
        %v2060 = vunpack.c.0.s8 %v2059
        %v2061 = vlaneseq
        %v2062 = vshrl.u32 %v2061, 7
        %v2063 = vsub.s32 %v2060, %v2062
        %v2064 = vrot.slane %v2050, %v2063
        %v2065 = vcombine.low %v1564, %v1596
        %v2066 = vcombine.high %v1564, %v1596
        %v2068 = vunpack.c.l.s4 1983009808
        %v2069 = vunpack.c.0.s8 %v2068
        %v2070 = vlaneseq
        %v2071 = vshrl.u32 %v2070, 7
        %v2072 = vsub.s32 %v2069, %v2071
        %v2073 = vrot.slane %v2065, %v2072
        %v2075 = vunpack.c.l.s4 1983009808
        %v2076 = vunpack.c.0.s8 %v2075
        %v2077 = vlaneseq
        %v2078 = vshrl.u32 %v2077, 7
        %v2079 = vsub.s32 %v2076, %v2078
        %v2080 = vrot.slane %v2066, %v2079
        %v2081 = vcombine.low %v1580, %v1612
        %v2082 = vcombine.high %v1580, %v1612
        %v2084 = vunpack.c.l.s4 1983009808
        %v2085 = vunpack.c.0.s8 %v2084
        %v2086 = vlaneseq
        %v2087 = vshrl.u32 %v2086, 7
        %v2088 = vsub.s32 %v2085, %v2087
        %v2089 = vrot.slane %v2081, %v2088
        %v2091 = vunpack.c.l.s4 1983009808
        %v2092 = vunpack.c.0.s8 %v2091
        %v2093 = vlaneseq
        %v2094 = vshrl.u32 %v2093, 7
        %v2095 = vsub.s32 %v2092, %v2094
        %v2096 = vrot.slane %v2082, %v2095
        %v2097 = vcombine.low %v2041, %v2057
        %v2098 = vcombine.high %v2041, %v2057
        %v2100 = vunpack.c.l.s4 1934713408
        %v2101 = vunpack.c.0.s8 %v2100
        %v2102 = vlaneseq
        %v2103 = vshrl.u32 %v2102, 7
        %v2104 = vsub.s32 %v2101, %v2103
        %v2105 = vrot.slane %v2097, %v2104
        %v2107 = vunpack.c.l.s4 1934713408
        %v2108 = vunpack.c.0.s8 %v2107
        %v2109 = vlaneseq
        %v2110 = vshrl.u32 %v2109, 7
        %v2111 = vsub.s32 %v2108, %v2110
        %v2112 = vrot.slane %v2098, %v2111
        %v2113 = vcombine.low %v2048, %v2064
        %v2114 = vcombine.high %v2048, %v2064
        %v2116 = vunpack.c.l.s4 1934713408
        %v2117 = vunpack.c.0.s8 %v2116
        %v2118 = vlaneseq
        %v2119 = vshrl.u32 %v2118, 7
        %v2120 = vsub.s32 %v2117, %v2119
        %v2121 = vrot.slane %v2113, %v2120
        %v2123 = vunpack.c.l.s4 1934713408
        %v2124 = vunpack.c.0.s8 %v2123
        %v2125 = vlaneseq
        %v2126 = vshrl.u32 %v2125, 7
        %v2127 = vsub.s32 %v2124, %v2126
        %v2128 = vrot.slane %v2114, %v2127
        %v2129 = vcombine.low %v2073, %v2089
        %v2130 = vcombine.high %v2073, %v2089
        %v2132 = vunpack.c.l.s4 1934713408
        %v2133 = vunpack.c.0.s8 %v2132
        %v2134 = vlaneseq
        %v2135 = vshrl.u32 %v2134, 7
        %v2136 = vsub.s32 %v2133, %v2135
        %v2137 = vrot.slane %v2129, %v2136
        %v2139 = vunpack.c.l.s4 1934713408
        %v2140 = vunpack.c.0.s8 %v2139
        %v2141 = vlaneseq
        %v2142 = vshrl.u32 %v2141, 7
        %v2143 = vsub.s32 %v2140, %v2142
        %v2144 = vrot.slane %v2130, %v2143
        %v2145 = vcombine.low %v2080, %v2096
        %v2146 = vcombine.high %v2080, %v2096
        %v2148 = vunpack.c.l.s4 1934713408
        %v2149 = vunpack.c.0.s8 %v2148
        %v2150 = vlaneseq
        %v2151 = vshrl.u32 %v2150, 7
        %v2152 = vsub.s32 %v2149, %v2151
        %v2153 = vrot.slane %v2145, %v2152
        %v2155 = vunpack.c.l.s4 1934713408
        %v2156 = vunpack.c.0.s8 %v2155
        %v2157 = vlaneseq
        %v2158 = vshrl.u32 %v2157, 7
        %v2159 = vsub.s32 %v2156, %v2158
        %v2160 = vrot.slane %v2146, %v2159
        %v2161 = vcombine.low %v2105, %v2137
        %v2162 = vcombine.high %v2105, %v2137
        %v2163 = vcombine.low %v2112, %v2144
        %v2164 = vcombine.high %v2112, %v2144
        %v2165 = vcombine.low %v2121, %v2153
        %v2166 = vcombine.high %v2121, %v2153
        %v2167 = vcombine.low %v2128, %v2160
        %v2168 = vcombine.high %v2128, %v2160
        %v2169 = vcombine.low %v1501, %v1533
        %v2170 = vcombine.high %v1501, %v1533
        %v2172 = vunpack.c.l.s4 1983009808
        %v2173 = vunpack.c.0.s8 %v2172
        %v2174 = vlaneseq
        %v2175 = vshrl.u32 %v2174, 7
        %v2176 = vsub.s32 %v2173, %v2175
        %v2177 = vrot.slane %v2169, %v2176
        %v2179 = vunpack.c.l.s4 1983009808
        %v2180 = vunpack.c.0.s8 %v2179
        %v2181 = vlaneseq
        %v2182 = vshrl.u32 %v2181, 7
        %v2183 = vsub.s32 %v2180, %v2182
        %v2184 = vrot.slane %v2170, %v2183
        %v2185 = vcombine.low %v1517, %v1549
        %v2186 = vcombine.high %v1517, %v1549
        %v2188 = vunpack.c.l.s4 1983009808
        %v2189 = vunpack.c.0.s8 %v2188
        %v2190 = vlaneseq
        %v2191 = vshrl.u32 %v2190, 7
        %v2192 = vsub.s32 %v2189, %v2191
        %v2193 = vrot.slane %v2185, %v2192
        %v2195 = vunpack.c.l.s4 1983009808
        %v2196 = vunpack.c.0.s8 %v2195
        %v2197 = vlaneseq
        %v2198 = vshrl.u32 %v2197, 7
        %v2199 = vsub.s32 %v2196, %v2198
        %v2200 = vrot.slane %v2186, %v2199
        %v2201 = vcombine.low %v1565, %v1597
        %v2202 = vcombine.high %v1565, %v1597
        %v2204 = vunpack.c.l.s4 1983009808
        %v2205 = vunpack.c.0.s8 %v2204
        %v2206 = vlaneseq
        %v2207 = vshrl.u32 %v2206, 7
        %v2208 = vsub.s32 %v2205, %v2207
        %v2209 = vrot.slane %v2201, %v2208
        %v2211 = vunpack.c.l.s4 1983009808
        %v2212 = vunpack.c.0.s8 %v2211
        %v2213 = vlaneseq
        %v2214 = vshrl.u32 %v2213, 7
        %v2215 = vsub.s32 %v2212, %v2214
        %v2216 = vrot.slane %v2202, %v2215
        %v2217 = vcombine.low %v1581, %v1613
        %v2218 = vcombine.high %v1581, %v1613
        %v2220 = vunpack.c.l.s4 1983009808
        %v2221 = vunpack.c.0.s8 %v2220
        %v2222 = vlaneseq
        %v2223 = vshrl.u32 %v2222, 7
        %v2224 = vsub.s32 %v2221, %v2223
        %v2225 = vrot.slane %v2217, %v2224
        %v2227 = vunpack.c.l.s4 1983009808
        %v2228 = vunpack.c.0.s8 %v2227
        %v2229 = vlaneseq
        %v2230 = vshrl.u32 %v2229, 7
        %v2231 = vsub.s32 %v2228, %v2230
        %v2232 = vrot.slane %v2218, %v2231
        %v2233 = vcombine.low %v2177, %v2193
        %v2234 = vcombine.high %v2177, %v2193
        %v2236 = vunpack.c.l.s4 1934713408
        %v2237 = vunpack.c.0.s8 %v2236
        %v2238 = vlaneseq
        %v2239 = vshrl.u32 %v2238, 7
        %v2240 = vsub.s32 %v2237, %v2239
        %v2241 = vrot.slane %v2233, %v2240
        %v2243 = vunpack.c.l.s4 1934713408
        %v2244 = vunpack.c.0.s8 %v2243
        %v2245 = vlaneseq
        %v2246 = vshrl.u32 %v2245, 7
        %v2247 = vsub.s32 %v2244, %v2246
        %v2248 = vrot.slane %v2234, %v2247
        %v2249 = vcombine.low %v2184, %v2200
        %v2250 = vcombine.high %v2184, %v2200
        %v2252 = vunpack.c.l.s4 1934713408
        %v2253 = vunpack.c.0.s8 %v2252
        %v2254 = vlaneseq
        %v2255 = vshrl.u32 %v2254, 7
        %v2256 = vsub.s32 %v2253, %v2255
        %v2257 = vrot.slane %v2249, %v2256
        %v2259 = vunpack.c.l.s4 1934713408
        %v2260 = vunpack.c.0.s8 %v2259
        %v2261 = vlaneseq
        %v2262 = vshrl.u32 %v2261, 7
        %v2263 = vsub.s32 %v2260, %v2262
        %v2264 = vrot.slane %v2250, %v2263
        %v2265 = vcombine.low %v2209, %v2225
        %v2266 = vcombine.high %v2209, %v2225
        %v2268 = vunpack.c.l.s4 1934713408
        %v2269 = vunpack.c.0.s8 %v2268
        %v2270 = vlaneseq
        %v2271 = vshrl.u32 %v2270, 7
        %v2272 = vsub.s32 %v2269, %v2271
        %v2273 = vrot.slane %v2265, %v2272
        %v2275 = vunpack.c.l.s4 1934713408
        %v2276 = vunpack.c.0.s8 %v2275
        %v2277 = vlaneseq
        %v2278 = vshrl.u32 %v2277, 7
        %v2279 = vsub.s32 %v2276, %v2278
        %v2280 = vrot.slane %v2266, %v2279
        %v2281 = vcombine.low %v2216, %v2232
        %v2282 = vcombine.high %v2216, %v2232
        %v2284 = vunpack.c.l.s4 1934713408
        %v2285 = vunpack.c.0.s8 %v2284
        %v2286 = vlaneseq
        %v2287 = vshrl.u32 %v2286, 7
        %v2288 = vsub.s32 %v2285, %v2287
        %v2289 = vrot.slane %v2281, %v2288
        %v2291 = vunpack.c.l.s4 1934713408
        %v2292 = vunpack.c.0.s8 %v2291
        %v2293 = vlaneseq
        %v2294 = vshrl.u32 %v2293, 7
        %v2295 = vsub.s32 %v2292, %v2294
        %v2296 = vrot.slane %v2282, %v2295
        %v2297 = vcombine.low %v2241, %v2273
        %v2298 = vcombine.high %v2241, %v2273
        %v2299 = vcombine.low %v2248, %v2280
        %v2300 = vcombine.high %v2248, %v2280
        %v2301 = vcombine.low %v2257, %v2289
        %v2302 = vcombine.high %v2257, %v2289
        %v2303 = vcombine.low %v2264, %v2296
        %v2304 = vcombine.high %v2264, %v2296
        %v2305 = vcombine.low %v1502, %v1534
        %v2306 = vcombine.high %v1502, %v1534
        %v2308 = vunpack.c.l.s4 1983009808
        %v2309 = vunpack.c.0.s8 %v2308
        %v2310 = vlaneseq
        %v2311 = vshrl.u32 %v2310, 7
        %v2312 = vsub.s32 %v2309, %v2311
        %v2313 = vrot.slane %v2305, %v2312
        %v2315 = vunpack.c.l.s4 1983009808
        %v2316 = vunpack.c.0.s8 %v2315
        %v2317 = vlaneseq
        %v2318 = vshrl.u32 %v2317, 7
        %v2319 = vsub.s32 %v2316, %v2318
        %v2320 = vrot.slane %v2306, %v2319
        %v2321 = vcombine.low %v1518, %v1550
        %v2322 = vcombine.high %v1518, %v1550
        %v2324 = vunpack.c.l.s4 1983009808
        %v2325 = vunpack.c.0.s8 %v2324
        %v2326 = vlaneseq
        %v2327 = vshrl.u32 %v2326, 7
        %v2328 = vsub.s32 %v2325, %v2327
        %v2329 = vrot.slane %v2321, %v2328
        %v2331 = vunpack.c.l.s4 1983009808
        %v2332 = vunpack.c.0.s8 %v2331
        %v2333 = vlaneseq
        %v2334 = vshrl.u32 %v2333, 7
        %v2335 = vsub.s32 %v2332, %v2334
        %v2336 = vrot.slane %v2322, %v2335
        %v2337 = vcombine.low %v1566, %v1598
        %v2338 = vcombine.high %v1566, %v1598
        %v2340 = vunpack.c.l.s4 1983009808
        %v2341 = vunpack.c.0.s8 %v2340
        %v2342 = vlaneseq
        %v2343 = vshrl.u32 %v2342, 7
        %v2344 = vsub.s32 %v2341, %v2343
        %v2345 = vrot.slane %v2337, %v2344
        %v2347 = vunpack.c.l.s4 1983009808
        %v2348 = vunpack.c.0.s8 %v2347
        %v2349 = vlaneseq
        %v2350 = vshrl.u32 %v2349, 7
        %v2351 = vsub.s32 %v2348, %v2350
        %v2352 = vrot.slane %v2338, %v2351
        %v2353 = vcombine.low %v1582, %v1614
        %v2354 = vcombine.high %v1582, %v1614
        %v2356 = vunpack.c.l.s4 1983009808
        %v2357 = vunpack.c.0.s8 %v2356
        %v2358 = vlaneseq
        %v2359 = vshrl.u32 %v2358, 7
        %v2360 = vsub.s32 %v2357, %v2359
        %v2361 = vrot.slane %v2353, %v2360
        %v2363 = vunpack.c.l.s4 1983009808
        %v2364 = vunpack.c.0.s8 %v2363
        %v2365 = vlaneseq
        %v2366 = vshrl.u32 %v2365, 7
        %v2367 = vsub.s32 %v2364, %v2366
        %v2368 = vrot.slane %v2354, %v2367
        %v2369 = vcombine.low %v2313, %v2329
        %v2370 = vcombine.high %v2313, %v2329
        %v2372 = vunpack.c.l.s4 1934713408
        %v2373 = vunpack.c.0.s8 %v2372
        %v2374 = vlaneseq
        %v2375 = vshrl.u32 %v2374, 7
        %v2376 = vsub.s32 %v2373, %v2375
        %v2377 = vrot.slane %v2369, %v2376
        %v2379 = vunpack.c.l.s4 1934713408
        %v2380 = vunpack.c.0.s8 %v2379
        %v2381 = vlaneseq
        %v2382 = vshrl.u32 %v2381, 7
        %v2383 = vsub.s32 %v2380, %v2382
        %v2384 = vrot.slane %v2370, %v2383
        %v2385 = vcombine.low %v2320, %v2336
        %v2386 = vcombine.high %v2320, %v2336
        %v2388 = vunpack.c.l.s4 1934713408
        %v2389 = vunpack.c.0.s8 %v2388
        %v2390 = vlaneseq
        %v2391 = vshrl.u32 %v2390, 7
        %v2392 = vsub.s32 %v2389, %v2391
        %v2393 = vrot.slane %v2385, %v2392
        %v2395 = vunpack.c.l.s4 1934713408
        %v2396 = vunpack.c.0.s8 %v2395
        %v2397 = vlaneseq
        %v2398 = vshrl.u32 %v2397, 7
        %v2399 = vsub.s32 %v2396, %v2398
        %v2400 = vrot.slane %v2386, %v2399
        %v2401 = vcombine.low %v2345, %v2361
        %v2402 = vcombine.high %v2345, %v2361
        %v2404 = vunpack.c.l.s4 1934713408
        %v2405 = vunpack.c.0.s8 %v2404
        %v2406 = vlaneseq
        %v2407 = vshrl.u32 %v2406, 7
        %v2408 = vsub.s32 %v2405, %v2407
        %v2409 = vrot.slane %v2401, %v2408
        %v2411 = vunpack.c.l.s4 1934713408
        %v2412 = vunpack.c.0.s8 %v2411
        %v2413 = vlaneseq
        %v2414 = vshrl.u32 %v2413, 7
        %v2415 = vsub.s32 %v2412, %v2414
        %v2416 = vrot.slane %v2402, %v2415
        %v2417 = vcombine.low %v2352, %v2368
        %v2418 = vcombine.high %v2352, %v2368
        %v2420 = vunpack.c.l.s4 1934713408
        %v2421 = vunpack.c.0.s8 %v2420
        %v2422 = vlaneseq
        %v2423 = vshrl.u32 %v2422, 7
        %v2424 = vsub.s32 %v2421, %v2423
        %v2425 = vrot.slane %v2417, %v2424
        %v2427 = vunpack.c.l.s4 1934713408
        %v2428 = vunpack.c.0.s8 %v2427
        %v2429 = vlaneseq
        %v2430 = vshrl.u32 %v2429, 7
        %v2431 = vsub.s32 %v2428, %v2430
        %v2432 = vrot.slane %v2418, %v2431
        %v2433 = vcombine.low %v2377, %v2409
        %v2434 = vcombine.high %v2377, %v2409
        %v2435 = vcombine.low %v2384, %v2416
        %v2436 = vcombine.high %v2384, %v2416
        %v2437 = vcombine.low %v2393, %v2425
        %v2438 = vcombine.high %v2393, %v2425
        %v2439 = vcombine.low %v2400, %v2432
        %v2440 = vcombine.high %v2400, %v2432
        %v2441 = vcombine.low %v1503, %v1535
        %v2442 = vcombine.high %v1503, %v1535
        %v2444 = vunpack.c.l.s4 1983009808
        %v2445 = vunpack.c.0.s8 %v2444
        %v2446 = vlaneseq
        %v2447 = vshrl.u32 %v2446, 7
        %v2448 = vsub.s32 %v2445, %v2447
        %v2449 = vrot.slane %v2441, %v2448
        %v2451 = vunpack.c.l.s4 1983009808
        %v2452 = vunpack.c.0.s8 %v2451
        %v2453 = vlaneseq
        %v2454 = vshrl.u32 %v2453, 7
        %v2455 = vsub.s32 %v2452, %v2454
        %v2456 = vrot.slane %v2442, %v2455
        %v2457 = vcombine.low %v1519, %v1551
        %v2458 = vcombine.high %v1519, %v1551
        %v2460 = vunpack.c.l.s4 1983009808
        %v2461 = vunpack.c.0.s8 %v2460
        %v2462 = vlaneseq
        %v2463 = vshrl.u32 %v2462, 7
        %v2464 = vsub.s32 %v2461, %v2463
        %v2465 = vrot.slane %v2457, %v2464
        %v2467 = vunpack.c.l.s4 1983009808
        %v2468 = vunpack.c.0.s8 %v2467
        %v2469 = vlaneseq
        %v2470 = vshrl.u32 %v2469, 7
        %v2471 = vsub.s32 %v2468, %v2470
        %v2472 = vrot.slane %v2458, %v2471
        %v2473 = vcombine.low %v1567, %v1599
        %v2474 = vcombine.high %v1567, %v1599
        %v2476 = vunpack.c.l.s4 1983009808
        %v2477 = vunpack.c.0.s8 %v2476
        %v2478 = vlaneseq
        %v2479 = vshrl.u32 %v2478, 7
        %v2480 = vsub.s32 %v2477, %v2479
        %v2481 = vrot.slane %v2473, %v2480
        %v2483 = vunpack.c.l.s4 1983009808
        %v2484 = vunpack.c.0.s8 %v2483
        %v2485 = vlaneseq
        %v2486 = vshrl.u32 %v2485, 7
        %v2487 = vsub.s32 %v2484, %v2486
        %v2488 = vrot.slane %v2474, %v2487
        %v2489 = vcombine.low %v1583, %v1615
        %v2490 = vcombine.high %v1583, %v1615
        %v2492 = vunpack.c.l.s4 1983009808
        %v2493 = vunpack.c.0.s8 %v2492
        %v2494 = vlaneseq
        %v2495 = vshrl.u32 %v2494, 7
        %v2496 = vsub.s32 %v2493, %v2495
        %v2497 = vrot.slane %v2489, %v2496
        %v2499 = vunpack.c.l.s4 1983009808
        %v2500 = vunpack.c.0.s8 %v2499
        %v2501 = vlaneseq
        %v2502 = vshrl.u32 %v2501, 7
        %v2503 = vsub.s32 %v2500, %v2502
        %v2504 = vrot.slane %v2490, %v2503
        %v2505 = vcombine.low %v2449, %v2465
        %v2506 = vcombine.high %v2449, %v2465
        %v2508 = vunpack.c.l.s4 1934713408
        %v2509 = vunpack.c.0.s8 %v2508
        %v2510 = vlaneseq
        %v2511 = vshrl.u32 %v2510, 7
        %v2512 = vsub.s32 %v2509, %v2511
        %v2513 = vrot.slane %v2505, %v2512
        %v2515 = vunpack.c.l.s4 1934713408
        %v2516 = vunpack.c.0.s8 %v2515
        %v2517 = vlaneseq
        %v2518 = vshrl.u32 %v2517, 7
        %v2519 = vsub.s32 %v2516, %v2518
        %v2520 = vrot.slane %v2506, %v2519
        %v2521 = vcombine.low %v2456, %v2472
        %v2522 = vcombine.high %v2456, %v2472
        %v2524 = vunpack.c.l.s4 1934713408
        %v2525 = vunpack.c.0.s8 %v2524
        %v2526 = vlaneseq
        %v2527 = vshrl.u32 %v2526, 7
        %v2528 = vsub.s32 %v2525, %v2527
        %v2529 = vrot.slane %v2521, %v2528
        %v2531 = vunpack.c.l.s4 1934713408
        %v2532 = vunpack.c.0.s8 %v2531
        %v2533 = vlaneseq
        %v2534 = vshrl.u32 %v2533, 7
        %v2535 = vsub.s32 %v2532, %v2534
        %v2536 = vrot.slane %v2522, %v2535
        %v2537 = vcombine.low %v2481, %v2497
        %v2538 = vcombine.high %v2481, %v2497
        %v2540 = vunpack.c.l.s4 1934713408
        %v2541 = vunpack.c.0.s8 %v2540
        %v2542 = vlaneseq
        %v2543 = vshrl.u32 %v2542, 7
        %v2544 = vsub.s32 %v2541, %v2543
        %v2545 = vrot.slane %v2537, %v2544
        %v2547 = vunpack.c.l.s4 1934713408
        %v2548 = vunpack.c.0.s8 %v2547
        %v2549 = vlaneseq
        %v2550 = vshrl.u32 %v2549, 7
        %v2551 = vsub.s32 %v2548, %v2550
        %v2552 = vrot.slane %v2538, %v2551
        %v2553 = vcombine.low %v2488, %v2504
        %v2554 = vcombine.high %v2488, %v2504
        %v2556 = vunpack.c.l.s4 1934713408
        %v2557 = vunpack.c.0.s8 %v2556
        %v2558 = vlaneseq
        %v2559 = vshrl.u32 %v2558, 7
        %v2560 = vsub.s32 %v2557, %v2559
        %v2561 = vrot.slane %v2553, %v2560
        %v2563 = vunpack.c.l.s4 1934713408
        %v2564 = vunpack.c.0.s8 %v2563
        %v2565 = vlaneseq
        %v2566 = vshrl.u32 %v2565, 7
        %v2567 = vsub.s32 %v2564, %v2566
        %v2568 = vrot.slane %v2554, %v2567
        %v2569 = vcombine.low %v2513, %v2545
        %v2570 = vcombine.high %v2513, %v2545
        %v2571 = vcombine.low %v2520, %v2552
        %v2572 = vcombine.high %v2520, %v2552
        %v2573 = vcombine.low %v2529, %v2561
        %v2574 = vcombine.high %v2529, %v2561
        %v2575 = vcombine.low %v2536, %v2568
        %v2576 = vcombine.high %v2536, %v2568
        %v2577 = vcombine.low %v1504, %v1536
        %v2578 = vcombine.high %v1504, %v1536
        %v2580 = vunpack.c.l.s4 1983009808
        %v2581 = vunpack.c.0.s8 %v2580
        %v2582 = vlaneseq
        %v2583 = vshrl.u32 %v2582, 7
        %v2584 = vsub.s32 %v2581, %v2583
        %v2585 = vrot.slane %v2577, %v2584
        %v2587 = vunpack.c.l.s4 1983009808
        %v2588 = vunpack.c.0.s8 %v2587
        %v2589 = vlaneseq
        %v2590 = vshrl.u32 %v2589, 7
        %v2591 = vsub.s32 %v2588, %v2590
        %v2592 = vrot.slane %v2578, %v2591
        %v2593 = vcombine.low %v1520, %v1552
        %v2594 = vcombine.high %v1520, %v1552
        %v2596 = vunpack.c.l.s4 1983009808
        %v2597 = vunpack.c.0.s8 %v2596
        %v2598 = vlaneseq
        %v2599 = vshrl.u32 %v2598, 7
        %v2600 = vsub.s32 %v2597, %v2599
        %v2601 = vrot.slane %v2593, %v2600
        %v2603 = vunpack.c.l.s4 1983009808
        %v2604 = vunpack.c.0.s8 %v2603
        %v2605 = vlaneseq
        %v2606 = vshrl.u32 %v2605, 7
        %v2607 = vsub.s32 %v2604, %v2606
        %v2608 = vrot.slane %v2594, %v2607
        %v2609 = vcombine.low %v1568, %v1600
        %v2610 = vcombine.high %v1568, %v1600
        %v2612 = vunpack.c.l.s4 1983009808
        %v2613 = vunpack.c.0.s8 %v2612
        %v2614 = vlaneseq
        %v2615 = vshrl.u32 %v2614, 7
        %v2616 = vsub.s32 %v2613, %v2615
        %v2617 = vrot.slane %v2609, %v2616
        %v2619 = vunpack.c.l.s4 1983009808
        %v2620 = vunpack.c.0.s8 %v2619
        %v2621 = vlaneseq
        %v2622 = vshrl.u32 %v2621, 7
        %v2623 = vsub.s32 %v2620, %v2622
        %v2624 = vrot.slane %v2610, %v2623
        %v2625 = vcombine.low %v1584, %v1616
        %v2626 = vcombine.high %v1584, %v1616
        %v2628 = vunpack.c.l.s4 1983009808
        %v2629 = vunpack.c.0.s8 %v2628
        %v2630 = vlaneseq
        %v2631 = vshrl.u32 %v2630, 7
        %v2632 = vsub.s32 %v2629, %v2631
        %v2633 = vrot.slane %v2625, %v2632
        %v2635 = vunpack.c.l.s4 1983009808
        %v2636 = vunpack.c.0.s8 %v2635
        %v2637 = vlaneseq
        %v2638 = vshrl.u32 %v2637, 7
        %v2639 = vsub.s32 %v2636, %v2638
        %v2640 = vrot.slane %v2626, %v2639
        %v2641 = vcombine.low %v2585, %v2601
        %v2642 = vcombine.high %v2585, %v2601
        %v2644 = vunpack.c.l.s4 1934713408
        %v2645 = vunpack.c.0.s8 %v2644
        %v2646 = vlaneseq
        %v2647 = vshrl.u32 %v2646, 7
        %v2648 = vsub.s32 %v2645, %v2647
        %v2649 = vrot.slane %v2641, %v2648
        %v2651 = vunpack.c.l.s4 1934713408
        %v2652 = vunpack.c.0.s8 %v2651
        %v2653 = vlaneseq
        %v2654 = vshrl.u32 %v2653, 7
        %v2655 = vsub.s32 %v2652, %v2654
        %v2656 = vrot.slane %v2642, %v2655
        %v2657 = vcombine.low %v2592, %v2608
        %v2658 = vcombine.high %v2592, %v2608
        %v2660 = vunpack.c.l.s4 1934713408
        %v2661 = vunpack.c.0.s8 %v2660
        %v2662 = vlaneseq
        %v2663 = vshrl.u32 %v2662, 7
        %v2664 = vsub.s32 %v2661, %v2663
        %v2665 = vrot.slane %v2657, %v2664
        %v2667 = vunpack.c.l.s4 1934713408
        %v2668 = vunpack.c.0.s8 %v2667
        %v2669 = vlaneseq
        %v2670 = vshrl.u32 %v2669, 7
        %v2671 = vsub.s32 %v2668, %v2670
        %v2672 = vrot.slane %v2658, %v2671
        %v2673 = vcombine.low %v2617, %v2633
        %v2674 = vcombine.high %v2617, %v2633
        %v2676 = vunpack.c.l.s4 1934713408
        %v2677 = vunpack.c.0.s8 %v2676
        %v2678 = vlaneseq
        %v2679 = vshrl.u32 %v2678, 7
        %v2680 = vsub.s32 %v2677, %v2679
        %v2681 = vrot.slane %v2673, %v2680
        %v2683 = vunpack.c.l.s4 1934713408
        %v2684 = vunpack.c.0.s8 %v2683
        %v2685 = vlaneseq
        %v2686 = vshrl.u32 %v2685, 7
        %v2687 = vsub.s32 %v2684, %v2686
        %v2688 = vrot.slane %v2674, %v2687
        %v2689 = vcombine.low %v2624, %v2640
        %v2690 = vcombine.high %v2624, %v2640
        %v2692 = vunpack.c.l.s4 1934713408
        %v2693 = vunpack.c.0.s8 %v2692
        %v2694 = vlaneseq
        %v2695 = vshrl.u32 %v2694, 7
        %v2696 = vsub.s32 %v2693, %v2695
        %v2697 = vrot.slane %v2689, %v2696
        %v2699 = vunpack.c.l.s4 1934713408
        %v2700 = vunpack.c.0.s8 %v2699
        %v2701 = vlaneseq
        %v2702 = vshrl.u32 %v2701, 7
        %v2703 = vsub.s32 %v2700, %v2702
        %v2704 = vrot.slane %v2690, %v2703
        %v2705 = vcombine.low %v2649, %v2681
        %v2706 = vcombine.high %v2649, %v2681
        %v2707 = vcombine.low %v2656, %v2688
        %v2708 = vcombine.high %v2656, %v2688
        %v2709 = vcombine.low %v2665, %v2697
        %v2710 = vcombine.high %v2665, %v2697
        %v2711 = vcombine.low %v2672, %v2704
        %v2712 = vcombine.high %v2672, %v2704
        %v2713 = vcombine.low %v1505, %v1537
        %v2714 = vcombine.high %v1505, %v1537
        %v2716 = vunpack.c.l.s4 1983009808
        %v2717 = vunpack.c.0.s8 %v2716
        %v2718 = vlaneseq
        %v2719 = vshrl.u32 %v2718, 7
        %v2720 = vsub.s32 %v2717, %v2719
        %v2721 = vrot.slane %v2713, %v2720
        %v2723 = vunpack.c.l.s4 1983009808
        %v2724 = vunpack.c.0.s8 %v2723
        %v2725 = vlaneseq
        %v2726 = vshrl.u32 %v2725, 7
        %v2727 = vsub.s32 %v2724, %v2726
        %v2728 = vrot.slane %v2714, %v2727
        %v2729 = vcombine.low %v1521, %v1553
        %v2730 = vcombine.high %v1521, %v1553
        %v2732 = vunpack.c.l.s4 1983009808
        %v2733 = vunpack.c.0.s8 %v2732
        %v2734 = vlaneseq
        %v2735 = vshrl.u32 %v2734, 7
        %v2736 = vsub.s32 %v2733, %v2735
        %v2737 = vrot.slane %v2729, %v2736
        %v2739 = vunpack.c.l.s4 1983009808
        %v2740 = vunpack.c.0.s8 %v2739
        %v2741 = vlaneseq
        %v2742 = vshrl.u32 %v2741, 7
        %v2743 = vsub.s32 %v2740, %v2742
        %v2744 = vrot.slane %v2730, %v2743
        %v2745 = vcombine.low %v1569, %v1601
        %v2746 = vcombine.high %v1569, %v1601
        %v2748 = vunpack.c.l.s4 1983009808
        %v2749 = vunpack.c.0.s8 %v2748
        %v2750 = vlaneseq
        %v2751 = vshrl.u32 %v2750, 7
        %v2752 = vsub.s32 %v2749, %v2751
        %v2753 = vrot.slane %v2745, %v2752
        %v2755 = vunpack.c.l.s4 1983009808
        %v2756 = vunpack.c.0.s8 %v2755
        %v2757 = vlaneseq
        %v2758 = vshrl.u32 %v2757, 7
        %v2759 = vsub.s32 %v2756, %v2758
        %v2760 = vrot.slane %v2746, %v2759
        %v2761 = vcombine.low %v1585, %v1617
        %v2762 = vcombine.high %v1585, %v1617
        %v2764 = vunpack.c.l.s4 1983009808
        %v2765 = vunpack.c.0.s8 %v2764
        %v2766 = vlaneseq
        %v2767 = vshrl.u32 %v2766, 7
        %v2768 = vsub.s32 %v2765, %v2767
        %v2769 = vrot.slane %v2761, %v2768
        %v2771 = vunpack.c.l.s4 1983009808
        %v2772 = vunpack.c.0.s8 %v2771
        %v2773 = vlaneseq
        %v2774 = vshrl.u32 %v2773, 7
        %v2775 = vsub.s32 %v2772, %v2774
        %v2776 = vrot.slane %v2762, %v2775
        %v2777 = vcombine.low %v2721, %v2737
        %v2778 = vcombine.high %v2721, %v2737
        %v2780 = vunpack.c.l.s4 1934713408
        %v2781 = vunpack.c.0.s8 %v2780
        %v2782 = vlaneseq
        %v2783 = vshrl.u32 %v2782, 7
        %v2784 = vsub.s32 %v2781, %v2783
        %v2785 = vrot.slane %v2777, %v2784
        %v2787 = vunpack.c.l.s4 1934713408
        %v2788 = vunpack.c.0.s8 %v2787
        %v2789 = vlaneseq
        %v2790 = vshrl.u32 %v2789, 7
        %v2791 = vsub.s32 %v2788, %v2790
        %v2792 = vrot.slane %v2778, %v2791
        %v2793 = vcombine.low %v2728, %v2744
        %v2794 = vcombine.high %v2728, %v2744
        %v2796 = vunpack.c.l.s4 1934713408
        %v2797 = vunpack.c.0.s8 %v2796
        %v2798 = vlaneseq
        %v2799 = vshrl.u32 %v2798, 7
        %v2800 = vsub.s32 %v2797, %v2799
        %v2801 = vrot.slane %v2793, %v2800
        %v2803 = vunpack.c.l.s4 1934713408
        %v2804 = vunpack.c.0.s8 %v2803
        %v2805 = vlaneseq
        %v2806 = vshrl.u32 %v2805, 7
        %v2807 = vsub.s32 %v2804, %v2806
        %v2808 = vrot.slane %v2794, %v2807
        %v2809 = vcombine.low %v2753, %v2769
        %v2810 = vcombine.high %v2753, %v2769
        %v2812 = vunpack.c.l.s4 1934713408
        %v2813 = vunpack.c.0.s8 %v2812
        %v2814 = vlaneseq
        %v2815 = vshrl.u32 %v2814, 7
        %v2816 = vsub.s32 %v2813, %v2815
        %v2817 = vrot.slane %v2809, %v2816
        %v2819 = vunpack.c.l.s4 1934713408
        %v2820 = vunpack.c.0.s8 %v2819
        %v2821 = vlaneseq
        %v2822 = vshrl.u32 %v2821, 7
        %v2823 = vsub.s32 %v2820, %v2822
        %v2824 = vrot.slane %v2810, %v2823
        %v2825 = vcombine.low %v2760, %v2776
        %v2826 = vcombine.high %v2760, %v2776
        %v2828 = vunpack.c.l.s4 1934713408
        %v2829 = vunpack.c.0.s8 %v2828
        %v2830 = vlaneseq
        %v2831 = vshrl.u32 %v2830, 7
        %v2832 = vsub.s32 %v2829, %v2831
        %v2833 = vrot.slane %v2825, %v2832
        %v2835 = vunpack.c.l.s4 1934713408
        %v2836 = vunpack.c.0.s8 %v2835
        %v2837 = vlaneseq
        %v2838 = vshrl.u32 %v2837, 7
        %v2839 = vsub.s32 %v2836, %v2838
        %v2840 = vrot.slane %v2826, %v2839
        %v2841 = vcombine.low %v2785, %v2817
        %v2842 = vcombine.high %v2785, %v2817
        %v2843 = vcombine.low %v2792, %v2824
        %v2844 = vcombine.high %v2792, %v2824
        %v2845 = vcombine.low %v2801, %v2833
        %v2846 = vcombine.high %v2801, %v2833
        %v2847 = vcombine.low %v2808, %v2840
        %v2848 = vcombine.high %v2808, %v2840
        %v2849 = vcombine.low %v1506, %v1538
        %v2850 = vcombine.high %v1506, %v1538
        %v2852 = vunpack.c.l.s4 1983009808
        %v2853 = vunpack.c.0.s8 %v2852
        %v2854 = vlaneseq
        %v2855 = vshrl.u32 %v2854, 7
        %v2856 = vsub.s32 %v2853, %v2855
        %v2857 = vrot.slane %v2849, %v2856
        %v2859 = vunpack.c.l.s4 1983009808
        %v2860 = vunpack.c.0.s8 %v2859
        %v2861 = vlaneseq
        %v2862 = vshrl.u32 %v2861, 7
        %v2863 = vsub.s32 %v2860, %v2862
        %v2864 = vrot.slane %v2850, %v2863
        %v2865 = vcombine.low %v1522, %v1554
        %v2866 = vcombine.high %v1522, %v1554
        %v2868 = vunpack.c.l.s4 1983009808
        %v2869 = vunpack.c.0.s8 %v2868
        %v2870 = vlaneseq
        %v2871 = vshrl.u32 %v2870, 7
        %v2872 = vsub.s32 %v2869, %v2871
        %v2873 = vrot.slane %v2865, %v2872
        %v2875 = vunpack.c.l.s4 1983009808
        %v2876 = vunpack.c.0.s8 %v2875
        %v2877 = vlaneseq
        %v2878 = vshrl.u32 %v2877, 7
        %v2879 = vsub.s32 %v2876, %v2878
        %v2880 = vrot.slane %v2866, %v2879
        %v2881 = vcombine.low %v1570, %v1602
        %v2882 = vcombine.high %v1570, %v1602
        %v2884 = vunpack.c.l.s4 1983009808
        %v2885 = vunpack.c.0.s8 %v2884
        %v2886 = vlaneseq
        %v2887 = vshrl.u32 %v2886, 7
        %v2888 = vsub.s32 %v2885, %v2887
        %v2889 = vrot.slane %v2881, %v2888
        %v2891 = vunpack.c.l.s4 1983009808
        %v2892 = vunpack.c.0.s8 %v2891
        %v2893 = vlaneseq
        %v2894 = vshrl.u32 %v2893, 7
        %v2895 = vsub.s32 %v2892, %v2894
        %v2896 = vrot.slane %v2882, %v2895
        %v2897 = vcombine.low %v1586, %v1618
        %v2898 = vcombine.high %v1586, %v1618
        %v2900 = vunpack.c.l.s4 1983009808
        %v2901 = vunpack.c.0.s8 %v2900
        %v2902 = vlaneseq
        %v2903 = vshrl.u32 %v2902, 7
        %v2904 = vsub.s32 %v2901, %v2903
        %v2905 = vrot.slane %v2897, %v2904
        %v2907 = vunpack.c.l.s4 1983009808
        %v2908 = vunpack.c.0.s8 %v2907
        %v2909 = vlaneseq
        %v2910 = vshrl.u32 %v2909, 7
        %v2911 = vsub.s32 %v2908, %v2910
        %v2912 = vrot.slane %v2898, %v2911
        %v2913 = vcombine.low %v2857, %v2873
        %v2914 = vcombine.high %v2857, %v2873
        %v2916 = vunpack.c.l.s4 1934713408
        %v2917 = vunpack.c.0.s8 %v2916
        %v2918 = vlaneseq
        %v2919 = vshrl.u32 %v2918, 7
        %v2920 = vsub.s32 %v2917, %v2919
        %v2921 = vrot.slane %v2913, %v2920
        %v2923 = vunpack.c.l.s4 1934713408
        %v2924 = vunpack.c.0.s8 %v2923
        %v2925 = vlaneseq
        %v2926 = vshrl.u32 %v2925, 7
        %v2927 = vsub.s32 %v2924, %v2926
        %v2928 = vrot.slane %v2914, %v2927
        %v2929 = vcombine.low %v2864, %v2880
        %v2930 = vcombine.high %v2864, %v2880
        %v2932 = vunpack.c.l.s4 1934713408
        %v2933 = vunpack.c.0.s8 %v2932
        %v2934 = vlaneseq
        %v2935 = vshrl.u32 %v2934, 7
        %v2936 = vsub.s32 %v2933, %v2935
        %v2937 = vrot.slane %v2929, %v2936
        %v2939 = vunpack.c.l.s4 1934713408
        %v2940 = vunpack.c.0.s8 %v2939
        %v2941 = vlaneseq
        %v2942 = vshrl.u32 %v2941, 7
        %v2943 = vsub.s32 %v2940, %v2942
        %v2944 = vrot.slane %v2930, %v2943
        %v2945 = vcombine.low %v2889, %v2905
        %v2946 = vcombine.high %v2889, %v2905
        %v2948 = vunpack.c.l.s4 1934713408
        %v2949 = vunpack.c.0.s8 %v2948
        %v2950 = vlaneseq
        %v2951 = vshrl.u32 %v2950, 7
        %v2952 = vsub.s32 %v2949, %v2951
        %v2953 = vrot.slane %v2945, %v2952
        %v2955 = vunpack.c.l.s4 1934713408
        %v2956 = vunpack.c.0.s8 %v2955
        %v2957 = vlaneseq
        %v2958 = vshrl.u32 %v2957, 7
        %v2959 = vsub.s32 %v2956, %v2958
        %v2960 = vrot.slane %v2946, %v2959
        %v2961 = vcombine.low %v2896, %v2912
        %v2962 = vcombine.high %v2896, %v2912
        %v2964 = vunpack.c.l.s4 1934713408
        %v2965 = vunpack.c.0.s8 %v2964
        %v2966 = vlaneseq
        %v2967 = vshrl.u32 %v2966, 7
        %v2968 = vsub.s32 %v2965, %v2967
        %v2969 = vrot.slane %v2961, %v2968
        %v2971 = vunpack.c.l.s4 1934713408
        %v2972 = vunpack.c.0.s8 %v2971
        %v2973 = vlaneseq
        %v2974 = vshrl.u32 %v2973, 7
        %v2975 = vsub.s32 %v2972, %v2974
        %v2976 = vrot.slane %v2962, %v2975
        %v2977 = vcombine.low %v2921, %v2953
        %v2978 = vcombine.high %v2921, %v2953
        %v2979 = vcombine.low %v2928, %v2960
        %v2980 = vcombine.high %v2928, %v2960
        %v2981 = vcombine.low %v2937, %v2969
        %v2982 = vcombine.high %v2937, %v2969
        %v2983 = vcombine.low %v2944, %v2976
        %v2984 = vcombine.high %v2944, %v2976
        %v2985 = vcombine.low %v1507, %v1539
        %v2986 = vcombine.high %v1507, %v1539
        %v2988 = vunpack.c.l.s4 1983009808
        %v2989 = vunpack.c.0.s8 %v2988
        %v2990 = vlaneseq
        %v2991 = vshrl.u32 %v2990, 7
        %v2992 = vsub.s32 %v2989, %v2991
        %v2993 = vrot.slane %v2985, %v2992
        %v2995 = vunpack.c.l.s4 1983009808
        %v2996 = vunpack.c.0.s8 %v2995
        %v2997 = vlaneseq
        %v2998 = vshrl.u32 %v2997, 7
        %v2999 = vsub.s32 %v2996, %v2998
        %v3000 = vrot.slane %v2986, %v2999
        %v3001 = vcombine.low %v1523, %v1555
        %v3002 = vcombine.high %v1523, %v1555
        %v3004 = vunpack.c.l.s4 1983009808
        %v3005 = vunpack.c.0.s8 %v3004
        %v3006 = vlaneseq
        %v3007 = vshrl.u32 %v3006, 7
        %v3008 = vsub.s32 %v3005, %v3007
        %v3009 = vrot.slane %v3001, %v3008
        %v3011 = vunpack.c.l.s4 1983009808
        %v3012 = vunpack.c.0.s8 %v3011
        %v3013 = vlaneseq
        %v3014 = vshrl.u32 %v3013, 7
        %v3015 = vsub.s32 %v3012, %v3014
        %v3016 = vrot.slane %v3002, %v3015
        %v3017 = vcombine.low %v1571, %v1603
        %v3018 = vcombine.high %v1571, %v1603
        %v3020 = vunpack.c.l.s4 1983009808
        %v3021 = vunpack.c.0.s8 %v3020
        %v3022 = vlaneseq
        %v3023 = vshrl.u32 %v3022, 7
        %v3024 = vsub.s32 %v3021, %v3023
        %v3025 = vrot.slane %v3017, %v3024
        %v3027 = vunpack.c.l.s4 1983009808
        %v3028 = vunpack.c.0.s8 %v3027
        %v3029 = vlaneseq
        %v3030 = vshrl.u32 %v3029, 7
        %v3031 = vsub.s32 %v3028, %v3030
        %v3032 = vrot.slane %v3018, %v3031
        %v3033 = vcombine.low %v1587, %v1619
        %v3034 = vcombine.high %v1587, %v1619
        %v3036 = vunpack.c.l.s4 1983009808
        %v3037 = vunpack.c.0.s8 %v3036
        %v3038 = vlaneseq
        %v3039 = vshrl.u32 %v3038, 7
        %v3040 = vsub.s32 %v3037, %v3039
        %v3041 = vrot.slane %v3033, %v3040
        %v3043 = vunpack.c.l.s4 1983009808
        %v3044 = vunpack.c.0.s8 %v3043
        %v3045 = vlaneseq
        %v3046 = vshrl.u32 %v3045, 7
        %v3047 = vsub.s32 %v3044, %v3046
        %v3048 = vrot.slane %v3034, %v3047
        %v3049 = vcombine.low %v2993, %v3009
        %v3050 = vcombine.high %v2993, %v3009
        %v3052 = vunpack.c.l.s4 1934713408
        %v3053 = vunpack.c.0.s8 %v3052
        %v3054 = vlaneseq
        %v3055 = vshrl.u32 %v3054, 7
        %v3056 = vsub.s32 %v3053, %v3055
        %v3057 = vrot.slane %v3049, %v3056
        %v3059 = vunpack.c.l.s4 1934713408
        %v3060 = vunpack.c.0.s8 %v3059
        %v3061 = vlaneseq
        %v3062 = vshrl.u32 %v3061, 7
        %v3063 = vsub.s32 %v3060, %v3062
        %v3064 = vrot.slane %v3050, %v3063
        %v3065 = vcombine.low %v3000, %v3016
        %v3066 = vcombine.high %v3000, %v3016
        %v3068 = vunpack.c.l.s4 1934713408
        %v3069 = vunpack.c.0.s8 %v3068
        %v3070 = vlaneseq
        %v3071 = vshrl.u32 %v3070, 7
        %v3072 = vsub.s32 %v3069, %v3071
        %v3073 = vrot.slane %v3065, %v3072
        %v3075 = vunpack.c.l.s4 1934713408
        %v3076 = vunpack.c.0.s8 %v3075
        %v3077 = vlaneseq
        %v3078 = vshrl.u32 %v3077, 7
        %v3079 = vsub.s32 %v3076, %v3078
        %v3080 = vrot.slane %v3066, %v3079
        %v3081 = vcombine.low %v3025, %v3041
        %v3082 = vcombine.high %v3025, %v3041
        %v3084 = vunpack.c.l.s4 1934713408
        %v3085 = vunpack.c.0.s8 %v3084
        %v3086 = vlaneseq
        %v3087 = vshrl.u32 %v3086, 7
        %v3088 = vsub.s32 %v3085, %v3087
        %v3089 = vrot.slane %v3081, %v3088
        %v3091 = vunpack.c.l.s4 1934713408
        %v3092 = vunpack.c.0.s8 %v3091
        %v3093 = vlaneseq
        %v3094 = vshrl.u32 %v3093, 7
        %v3095 = vsub.s32 %v3092, %v3094
        %v3096 = vrot.slane %v3082, %v3095
        %v3097 = vcombine.low %v3032, %v3048
        %v3098 = vcombine.high %v3032, %v3048
        %v3100 = vunpack.c.l.s4 1934713408
        %v3101 = vunpack.c.0.s8 %v3100
        %v3102 = vlaneseq
        %v3103 = vshrl.u32 %v3102, 7
        %v3104 = vsub.s32 %v3101, %v3103
        %v3105 = vrot.slane %v3097, %v3104
        %v3107 = vunpack.c.l.s4 1934713408
        %v3108 = vunpack.c.0.s8 %v3107
        %v3109 = vlaneseq
        %v3110 = vshrl.u32 %v3109, 7
        %v3111 = vsub.s32 %v3108, %v3110
        %v3112 = vrot.slane %v3098, %v3111
        %v3113 = vcombine.low %v3057, %v3089
        %v3114 = vcombine.high %v3057, %v3089
        %v3115 = vcombine.low %v3064, %v3096
        %v3116 = vcombine.high %v3064, %v3096
        %v3117 = vcombine.low %v3073, %v3105
        %v3118 = vcombine.high %v3073, %v3105
        %v3119 = vcombine.low %v3080, %v3112
        %v3120 = vcombine.high %v3080, %v3112
        %v3121 = vcombine.low %v1508, %v1540
        %v3122 = vcombine.high %v1508, %v1540
        %v3124 = vunpack.c.l.s4 1983009808
        %v3125 = vunpack.c.0.s8 %v3124
        %v3126 = vlaneseq
        %v3127 = vshrl.u32 %v3126, 7
        %v3128 = vsub.s32 %v3125, %v3127
        %v3129 = vrot.slane %v3121, %v3128
        %v3131 = vunpack.c.l.s4 1983009808
        %v3132 = vunpack.c.0.s8 %v3131
        %v3133 = vlaneseq
        %v3134 = vshrl.u32 %v3133, 7
        %v3135 = vsub.s32 %v3132, %v3134
        %v3136 = vrot.slane %v3122, %v3135
        %v3137 = vcombine.low %v1524, %v1556
        %v3138 = vcombine.high %v1524, %v1556
        %v3140 = vunpack.c.l.s4 1983009808
        %v3141 = vunpack.c.0.s8 %v3140
        %v3142 = vlaneseq
        %v3143 = vshrl.u32 %v3142, 7
        %v3144 = vsub.s32 %v3141, %v3143
        %v3145 = vrot.slane %v3137, %v3144
        %v3147 = vunpack.c.l.s4 1983009808
        %v3148 = vunpack.c.0.s8 %v3147
        %v3149 = vlaneseq
        %v3150 = vshrl.u32 %v3149, 7
        %v3151 = vsub.s32 %v3148, %v3150
        %v3152 = vrot.slane %v3138, %v3151
        %v3153 = vcombine.low %v1572, %v1604
        %v3154 = vcombine.high %v1572, %v1604
        %v3156 = vunpack.c.l.s4 1983009808
        %v3157 = vunpack.c.0.s8 %v3156
        %v3158 = vlaneseq
        %v3159 = vshrl.u32 %v3158, 7
        %v3160 = vsub.s32 %v3157, %v3159
        %v3161 = vrot.slane %v3153, %v3160
        %v3163 = vunpack.c.l.s4 1983009808
        %v3164 = vunpack.c.0.s8 %v3163
        %v3165 = vlaneseq
        %v3166 = vshrl.u32 %v3165, 7
        %v3167 = vsub.s32 %v3164, %v3166
        %v3168 = vrot.slane %v3154, %v3167
        %v3169 = vcombine.low %v1588, %v1620
        %v3170 = vcombine.high %v1588, %v1620
        %v3172 = vunpack.c.l.s4 1983009808
        %v3173 = vunpack.c.0.s8 %v3172
        %v3174 = vlaneseq
        %v3175 = vshrl.u32 %v3174, 7
        %v3176 = vsub.s32 %v3173, %v3175
        %v3177 = vrot.slane %v3169, %v3176
        %v3179 = vunpack.c.l.s4 1983009808
        %v3180 = vunpack.c.0.s8 %v3179
        %v3181 = vlaneseq
        %v3182 = vshrl.u32 %v3181, 7
        %v3183 = vsub.s32 %v3180, %v3182
        %v3184 = vrot.slane %v3170, %v3183
        %v3185 = vcombine.low %v3129, %v3145
        %v3186 = vcombine.high %v3129, %v3145
        %v3188 = vunpack.c.l.s4 1934713408
        %v3189 = vunpack.c.0.s8 %v3188
        %v3190 = vlaneseq
        %v3191 = vshrl.u32 %v3190, 7
        %v3192 = vsub.s32 %v3189, %v3191
        %v3193 = vrot.slane %v3185, %v3192
        %v3195 = vunpack.c.l.s4 1934713408
        %v3196 = vunpack.c.0.s8 %v3195
        %v3197 = vlaneseq
        %v3198 = vshrl.u32 %v3197, 7
        %v3199 = vsub.s32 %v3196, %v3198
        %v3200 = vrot.slane %v3186, %v3199
        %v3201 = vcombine.low %v3136, %v3152
        %v3202 = vcombine.high %v3136, %v3152
        %v3204 = vunpack.c.l.s4 1934713408
        %v3205 = vunpack.c.0.s8 %v3204
        %v3206 = vlaneseq
        %v3207 = vshrl.u32 %v3206, 7
        %v3208 = vsub.s32 %v3205, %v3207
        %v3209 = vrot.slane %v3201, %v3208
        %v3211 = vunpack.c.l.s4 1934713408
        %v3212 = vunpack.c.0.s8 %v3211
        %v3213 = vlaneseq
        %v3214 = vshrl.u32 %v3213, 7
        %v3215 = vsub.s32 %v3212, %v3214
        %v3216 = vrot.slane %v3202, %v3215
        %v3217 = vcombine.low %v3161, %v3177
        %v3218 = vcombine.high %v3161, %v3177
        %v3220 = vunpack.c.l.s4 1934713408
        %v3221 = vunpack.c.0.s8 %v3220
        %v3222 = vlaneseq
        %v3223 = vshrl.u32 %v3222, 7
        %v3224 = vsub.s32 %v3221, %v3223
        %v3225 = vrot.slane %v3217, %v3224
        %v3227 = vunpack.c.l.s4 1934713408
        %v3228 = vunpack.c.0.s8 %v3227
        %v3229 = vlaneseq
        %v3230 = vshrl.u32 %v3229, 7
        %v3231 = vsub.s32 %v3228, %v3230
        %v3232 = vrot.slane %v3218, %v3231
        %v3233 = vcombine.low %v3168, %v3184
        %v3234 = vcombine.high %v3168, %v3184
        %v3236 = vunpack.c.l.s4 1934713408
        %v3237 = vunpack.c.0.s8 %v3236
        %v3238 = vlaneseq
        %v3239 = vshrl.u32 %v3238, 7
        %v3240 = vsub.s32 %v3237, %v3239
        %v3241 = vrot.slane %v3233, %v3240
        %v3243 = vunpack.c.l.s4 1934713408
        %v3244 = vunpack.c.0.s8 %v3243
        %v3245 = vlaneseq
        %v3246 = vshrl.u32 %v3245, 7
        %v3247 = vsub.s32 %v3244, %v3246
        %v3248 = vrot.slane %v3234, %v3247
        %v3249 = vcombine.low %v3193, %v3225
        %v3250 = vcombine.high %v3193, %v3225
        %v3251 = vcombine.low %v3200, %v3232
        %v3252 = vcombine.high %v3200, %v3232
        %v3253 = vcombine.low %v3209, %v3241
        %v3254 = vcombine.high %v3209, %v3241
        %v3255 = vcombine.low %v3216, %v3248
        %v3256 = vcombine.high %v3216, %v3248
        %v3257 = vcombine.low %v1509, %v1541
        %v3258 = vcombine.high %v1509, %v1541
        %v3260 = vunpack.c.l.s4 1983009808
        %v3261 = vunpack.c.0.s8 %v3260
        %v3262 = vlaneseq
        %v3263 = vshrl.u32 %v3262, 7
        %v3264 = vsub.s32 %v3261, %v3263
        %v3265 = vrot.slane %v3257, %v3264
        %v3267 = vunpack.c.l.s4 1983009808
        %v3268 = vunpack.c.0.s8 %v3267
        %v3269 = vlaneseq
        %v3270 = vshrl.u32 %v3269, 7
        %v3271 = vsub.s32 %v3268, %v3270
        %v3272 = vrot.slane %v3258, %v3271
        %v3273 = vcombine.low %v1525, %v1557
        %v3274 = vcombine.high %v1525, %v1557
        %v3276 = vunpack.c.l.s4 1983009808
        %v3277 = vunpack.c.0.s8 %v3276
        %v3278 = vlaneseq
        %v3279 = vshrl.u32 %v3278, 7
        %v3280 = vsub.s32 %v3277, %v3279
        %v3281 = vrot.slane %v3273, %v3280
        %v3283 = vunpack.c.l.s4 1983009808
        %v3284 = vunpack.c.0.s8 %v3283
        %v3285 = vlaneseq
        %v3286 = vshrl.u32 %v3285, 7
        %v3287 = vsub.s32 %v3284, %v3286
        %v3288 = vrot.slane %v3274, %v3287
        %v3289 = vcombine.low %v1573, %v1605
        %v3290 = vcombine.high %v1573, %v1605
        %v3292 = vunpack.c.l.s4 1983009808
        %v3293 = vunpack.c.0.s8 %v3292
        %v3294 = vlaneseq
        %v3295 = vshrl.u32 %v3294, 7
        %v3296 = vsub.s32 %v3293, %v3295
        %v3297 = vrot.slane %v3289, %v3296
        %v3299 = vunpack.c.l.s4 1983009808
        %v3300 = vunpack.c.0.s8 %v3299
        %v3301 = vlaneseq
        %v3302 = vshrl.u32 %v3301, 7
        %v3303 = vsub.s32 %v3300, %v3302
        %v3304 = vrot.slane %v3290, %v3303
        %v3305 = vcombine.low %v1589, %v1621
        %v3306 = vcombine.high %v1589, %v1621
        %v3308 = vunpack.c.l.s4 1983009808
        %v3309 = vunpack.c.0.s8 %v3308
        %v3310 = vlaneseq
        %v3311 = vshrl.u32 %v3310, 7
        %v3312 = vsub.s32 %v3309, %v3311
        %v3313 = vrot.slane %v3305, %v3312
        %v3315 = vunpack.c.l.s4 1983009808
        %v3316 = vunpack.c.0.s8 %v3315
        %v3317 = vlaneseq
        %v3318 = vshrl.u32 %v3317, 7
        %v3319 = vsub.s32 %v3316, %v3318
        %v3320 = vrot.slane %v3306, %v3319
        %v3321 = vcombine.low %v3265, %v3281
        %v3322 = vcombine.high %v3265, %v3281
        %v3324 = vunpack.c.l.s4 1934713408
        %v3325 = vunpack.c.0.s8 %v3324
        %v3326 = vlaneseq
        %v3327 = vshrl.u32 %v3326, 7
        %v3328 = vsub.s32 %v3325, %v3327
        %v3329 = vrot.slane %v3321, %v3328
        %v3331 = vunpack.c.l.s4 1934713408
        %v3332 = vunpack.c.0.s8 %v3331
        %v3333 = vlaneseq
        %v3334 = vshrl.u32 %v3333, 7
        %v3335 = vsub.s32 %v3332, %v3334
        %v3336 = vrot.slane %v3322, %v3335
        %v3337 = vcombine.low %v3272, %v3288
        %v3338 = vcombine.high %v3272, %v3288
        %v3340 = vunpack.c.l.s4 1934713408
        %v3341 = vunpack.c.0.s8 %v3340
        %v3342 = vlaneseq
        %v3343 = vshrl.u32 %v3342, 7
        %v3344 = vsub.s32 %v3341, %v3343
        %v3345 = vrot.slane %v3337, %v3344
        %v3347 = vunpack.c.l.s4 1934713408
        %v3348 = vunpack.c.0.s8 %v3347
        %v3349 = vlaneseq
        %v3350 = vshrl.u32 %v3349, 7
        %v3351 = vsub.s32 %v3348, %v3350
        %v3352 = vrot.slane %v3338, %v3351
        %v3353 = vcombine.low %v3297, %v3313
        %v3354 = vcombine.high %v3297, %v3313
        %v3356 = vunpack.c.l.s4 1934713408
        %v3357 = vunpack.c.0.s8 %v3356
        %v3358 = vlaneseq
        %v3359 = vshrl.u32 %v3358, 7
        %v3360 = vsub.s32 %v3357, %v3359
        %v3361 = vrot.slane %v3353, %v3360
        %v3363 = vunpack.c.l.s4 1934713408
        %v3364 = vunpack.c.0.s8 %v3363
        %v3365 = vlaneseq
        %v3366 = vshrl.u32 %v3365, 7
        %v3367 = vsub.s32 %v3364, %v3366
        %v3368 = vrot.slane %v3354, %v3367
        %v3369 = vcombine.low %v3304, %v3320
        %v3370 = vcombine.high %v3304, %v3320
        %v3372 = vunpack.c.l.s4 1934713408
        %v3373 = vunpack.c.0.s8 %v3372
        %v3374 = vlaneseq
        %v3375 = vshrl.u32 %v3374, 7
        %v3376 = vsub.s32 %v3373, %v3375
        %v3377 = vrot.slane %v3369, %v3376
        %v3379 = vunpack.c.l.s4 1934713408
        %v3380 = vunpack.c.0.s8 %v3379
        %v3381 = vlaneseq
        %v3382 = vshrl.u32 %v3381, 7
        %v3383 = vsub.s32 %v3380, %v3382
        %v3384 = vrot.slane %v3370, %v3383
        %v3385 = vcombine.low %v3329, %v3361
        %v3386 = vcombine.high %v3329, %v3361
        %v3387 = vcombine.low %v3336, %v3368
        %v3388 = vcombine.high %v3336, %v3368
        %v3389 = vcombine.low %v3345, %v3377
        %v3390 = vcombine.high %v3345, %v3377
        %v3391 = vcombine.low %v3352, %v3384
        %v3392 = vcombine.high %v3352, %v3384
        %v3393 = vcombine.low %v1510, %v1542
        %v3394 = vcombine.high %v1510, %v1542
        %v3396 = vunpack.c.l.s4 1983009808
        %v3397 = vunpack.c.0.s8 %v3396
        %v3398 = vlaneseq
        %v3399 = vshrl.u32 %v3398, 7
        %v3400 = vsub.s32 %v3397, %v3399
        %v3401 = vrot.slane %v3393, %v3400
        %v3403 = vunpack.c.l.s4 1983009808
        %v3404 = vunpack.c.0.s8 %v3403
        %v3405 = vlaneseq
        %v3406 = vshrl.u32 %v3405, 7
        %v3407 = vsub.s32 %v3404, %v3406
        %v3408 = vrot.slane %v3394, %v3407
        %v3409 = vcombine.low %v1526, %v1558
        %v3410 = vcombine.high %v1526, %v1558
        %v3412 = vunpack.c.l.s4 1983009808
        %v3413 = vunpack.c.0.s8 %v3412
        %v3414 = vlaneseq
        %v3415 = vshrl.u32 %v3414, 7
        %v3416 = vsub.s32 %v3413, %v3415
        %v3417 = vrot.slane %v3409, %v3416
        %v3419 = vunpack.c.l.s4 1983009808
        %v3420 = vunpack.c.0.s8 %v3419
        %v3421 = vlaneseq
        %v3422 = vshrl.u32 %v3421, 7
        %v3423 = vsub.s32 %v3420, %v3422
        %v3424 = vrot.slane %v3410, %v3423
        %v3425 = vcombine.low %v1574, %v1606
        %v3426 = vcombine.high %v1574, %v1606
        %v3428 = vunpack.c.l.s4 1983009808
        %v3429 = vunpack.c.0.s8 %v3428
        %v3430 = vlaneseq
        %v3431 = vshrl.u32 %v3430, 7
        %v3432 = vsub.s32 %v3429, %v3431
        %v3433 = vrot.slane %v3425, %v3432
        %v3435 = vunpack.c.l.s4 1983009808
        %v3436 = vunpack.c.0.s8 %v3435
        %v3437 = vlaneseq
        %v3438 = vshrl.u32 %v3437, 7
        %v3439 = vsub.s32 %v3436, %v3438
        %v3440 = vrot.slane %v3426, %v3439
        %v3441 = vcombine.low %v1590, %v1622
        %v3442 = vcombine.high %v1590, %v1622
        %v3444 = vunpack.c.l.s4 1983009808
        %v3445 = vunpack.c.0.s8 %v3444
        %v3446 = vlaneseq
        %v3447 = vshrl.u32 %v3446, 7
        %v3448 = vsub.s32 %v3445, %v3447
        %v3449 = vrot.slane %v3441, %v3448
        %v3451 = vunpack.c.l.s4 1983009808
        %v3452 = vunpack.c.0.s8 %v3451
        %v3453 = vlaneseq
        %v3454 = vshrl.u32 %v3453, 7
        %v3455 = vsub.s32 %v3452, %v3454
        %v3456 = vrot.slane %v3442, %v3455
        %v3457 = vcombine.low %v3401, %v3417
        %v3458 = vcombine.high %v3401, %v3417
        %v3460 = vunpack.c.l.s4 1934713408
        %v3461 = vunpack.c.0.s8 %v3460
        %v3462 = vlaneseq
        %v3463 = vshrl.u32 %v3462, 7
        %v3464 = vsub.s32 %v3461, %v3463
        %v3465 = vrot.slane %v3457, %v3464
        %v3467 = vunpack.c.l.s4 1934713408
        %v3468 = vunpack.c.0.s8 %v3467
        %v3469 = vlaneseq
        %v3470 = vshrl.u32 %v3469, 7
        %v3471 = vsub.s32 %v3468, %v3470
        %v3472 = vrot.slane %v3458, %v3471
        %v3473 = vcombine.low %v3408, %v3424
        %v3474 = vcombine.high %v3408, %v3424
        %v3476 = vunpack.c.l.s4 1934713408
        %v3477 = vunpack.c.0.s8 %v3476
        %v3478 = vlaneseq
        %v3479 = vshrl.u32 %v3478, 7
        %v3480 = vsub.s32 %v3477, %v3479
        %v3481 = vrot.slane %v3473, %v3480
        %v3483 = vunpack.c.l.s4 1934713408
        %v3484 = vunpack.c.0.s8 %v3483
        %v3485 = vlaneseq
        %v3486 = vshrl.u32 %v3485, 7
        %v3487 = vsub.s32 %v3484, %v3486
        %v3488 = vrot.slane %v3474, %v3487
        %v3489 = vcombine.low %v3433, %v3449
        %v3490 = vcombine.high %v3433, %v3449
        %v3492 = vunpack.c.l.s4 1934713408
        %v3493 = vunpack.c.0.s8 %v3492
        %v3494 = vlaneseq
        %v3495 = vshrl.u32 %v3494, 7
        %v3496 = vsub.s32 %v3493, %v3495
        %v3497 = vrot.slane %v3489, %v3496
        %v3499 = vunpack.c.l.s4 1934713408
        %v3500 = vunpack.c.0.s8 %v3499
        %v3501 = vlaneseq
        %v3502 = vshrl.u32 %v3501, 7
        %v3503 = vsub.s32 %v3500, %v3502
        %v3504 = vrot.slane %v3490, %v3503
        %v3505 = vcombine.low %v3440, %v3456
        %v3506 = vcombine.high %v3440, %v3456
        %v3508 = vunpack.c.l.s4 1934713408
        %v3509 = vunpack.c.0.s8 %v3508
        %v3510 = vlaneseq
        %v3511 = vshrl.u32 %v3510, 7
        %v3512 = vsub.s32 %v3509, %v3511
        %v3513 = vrot.slane %v3505, %v3512
        %v3515 = vunpack.c.l.s4 1934713408
        %v3516 = vunpack.c.0.s8 %v3515
        %v3517 = vlaneseq
        %v3518 = vshrl.u32 %v3517, 7
        %v3519 = vsub.s32 %v3516, %v3518
        %v3520 = vrot.slane %v3506, %v3519
        %v3521 = vcombine.low %v3465, %v3497
        %v3522 = vcombine.high %v3465, %v3497
        %v3523 = vcombine.low %v3472, %v3504
        %v3524 = vcombine.high %v3472, %v3504
        %v3525 = vcombine.low %v3481, %v3513
        %v3526 = vcombine.high %v3481, %v3513
        %v3527 = vcombine.low %v3488, %v3520
        %v3528 = vcombine.high %v3488, %v3520
        %v3529 = vcombine.low %v1511, %v1543
        %v3530 = vcombine.high %v1511, %v1543
        %v3532 = vunpack.c.l.s4 1983009808
        %v3533 = vunpack.c.0.s8 %v3532
        %v3534 = vlaneseq
        %v3535 = vshrl.u32 %v3534, 7
        %v3536 = vsub.s32 %v3533, %v3535
        %v3537 = vrot.slane %v3529, %v3536
        %v3539 = vunpack.c.l.s4 1983009808
        %v3540 = vunpack.c.0.s8 %v3539
        %v3541 = vlaneseq
        %v3542 = vshrl.u32 %v3541, 7
        %v3543 = vsub.s32 %v3540, %v3542
        %v3544 = vrot.slane %v3530, %v3543
        %v3545 = vcombine.low %v1527, %v1559
        %v3546 = vcombine.high %v1527, %v1559
        %v3548 = vunpack.c.l.s4 1983009808
        %v3549 = vunpack.c.0.s8 %v3548
        %v3550 = vlaneseq
        %v3551 = vshrl.u32 %v3550, 7
        %v3552 = vsub.s32 %v3549, %v3551
        %v3553 = vrot.slane %v3545, %v3552
        %v3555 = vunpack.c.l.s4 1983009808
        %v3556 = vunpack.c.0.s8 %v3555
        %v3557 = vlaneseq
        %v3558 = vshrl.u32 %v3557, 7
        %v3559 = vsub.s32 %v3556, %v3558
        %v3560 = vrot.slane %v3546, %v3559
        %v3561 = vcombine.low %v1575, %v1607
        %v3562 = vcombine.high %v1575, %v1607
        %v3564 = vunpack.c.l.s4 1983009808
        %v3565 = vunpack.c.0.s8 %v3564
        %v3566 = vlaneseq
        %v3567 = vshrl.u32 %v3566, 7
        %v3568 = vsub.s32 %v3565, %v3567
        %v3569 = vrot.slane %v3561, %v3568
        %v3571 = vunpack.c.l.s4 1983009808
        %v3572 = vunpack.c.0.s8 %v3571
        %v3573 = vlaneseq
        %v3574 = vshrl.u32 %v3573, 7
        %v3575 = vsub.s32 %v3572, %v3574
        %v3576 = vrot.slane %v3562, %v3575
        %v3577 = vcombine.low %v1591, %v1623
        %v3578 = vcombine.high %v1591, %v1623
        %v3580 = vunpack.c.l.s4 1983009808
        %v3581 = vunpack.c.0.s8 %v3580
        %v3582 = vlaneseq
        %v3583 = vshrl.u32 %v3582, 7
        %v3584 = vsub.s32 %v3581, %v3583
        %v3585 = vrot.slane %v3577, %v3584
        %v3587 = vunpack.c.l.s4 1983009808
        %v3588 = vunpack.c.0.s8 %v3587
        %v3589 = vlaneseq
        %v3590 = vshrl.u32 %v3589, 7
        %v3591 = vsub.s32 %v3588, %v3590
        %v3592 = vrot.slane %v3578, %v3591
        %v3593 = vcombine.low %v3537, %v3553
        %v3594 = vcombine.high %v3537, %v3553
        %v3596 = vunpack.c.l.s4 1934713408
        %v3597 = vunpack.c.0.s8 %v3596
        %v3598 = vlaneseq
        %v3599 = vshrl.u32 %v3598, 7
        %v3600 = vsub.s32 %v3597, %v3599
        %v3601 = vrot.slane %v3593, %v3600
        %v3603 = vunpack.c.l.s4 1934713408
        %v3604 = vunpack.c.0.s8 %v3603
        %v3605 = vlaneseq
        %v3606 = vshrl.u32 %v3605, 7
        %v3607 = vsub.s32 %v3604, %v3606
        %v3608 = vrot.slane %v3594, %v3607
        %v3609 = vcombine.low %v3544, %v3560
        %v3610 = vcombine.high %v3544, %v3560
        %v3612 = vunpack.c.l.s4 1934713408
        %v3613 = vunpack.c.0.s8 %v3612
        %v3614 = vlaneseq
        %v3615 = vshrl.u32 %v3614, 7
        %v3616 = vsub.s32 %v3613, %v3615
        %v3617 = vrot.slane %v3609, %v3616
        %v3619 = vunpack.c.l.s4 1934713408
        %v3620 = vunpack.c.0.s8 %v3619
        %v3621 = vlaneseq
        %v3622 = vshrl.u32 %v3621, 7
        %v3623 = vsub.s32 %v3620, %v3622
        %v3624 = vrot.slane %v3610, %v3623
        %v3625 = vcombine.low %v3569, %v3585
        %v3626 = vcombine.high %v3569, %v3585
        %v3628 = vunpack.c.l.s4 1934713408
        %v3629 = vunpack.c.0.s8 %v3628
        %v3630 = vlaneseq
        %v3631 = vshrl.u32 %v3630, 7
        %v3632 = vsub.s32 %v3629, %v3631
        %v3633 = vrot.slane %v3625, %v3632
        %v3635 = vunpack.c.l.s4 1934713408
        %v3636 = vunpack.c.0.s8 %v3635
        %v3637 = vlaneseq
        %v3638 = vshrl.u32 %v3637, 7
        %v3639 = vsub.s32 %v3636, %v3638
        %v3640 = vrot.slane %v3626, %v3639
        %v3641 = vcombine.low %v3576, %v3592
        %v3642 = vcombine.high %v3576, %v3592
        %v3644 = vunpack.c.l.s4 1934713408
        %v3645 = vunpack.c.0.s8 %v3644
        %v3646 = vlaneseq
        %v3647 = vshrl.u32 %v3646, 7
        %v3648 = vsub.s32 %v3645, %v3647
        %v3649 = vrot.slane %v3641, %v3648
        %v3651 = vunpack.c.l.s4 1934713408
        %v3652 = vunpack.c.0.s8 %v3651
        %v3653 = vlaneseq
        %v3654 = vshrl.u32 %v3653, 7
        %v3655 = vsub.s32 %v3652, %v3654
        %v3656 = vrot.slane %v3642, %v3655
        %v3657 = vcombine.low %v3601, %v3633
        %v3658 = vcombine.high %v3601, %v3633
        %v3659 = vcombine.low %v3608, %v3640
        %v3660 = vcombine.high %v3608, %v3640
        %v3661 = vcombine.low %v3617, %v3649
        %v3662 = vcombine.high %v3617, %v3649
        %v3663 = vcombine.low %v3624, %v3656
        %v3664 = vcombine.high %v3624, %v3656
        %v3665 = vcombine.low %v1512, %v1544
        %v3666 = vcombine.high %v1512, %v1544
        %v3668 = vunpack.c.l.s4 1983009808
        %v3669 = vunpack.c.0.s8 %v3668
        %v3670 = vlaneseq
        %v3671 = vshrl.u32 %v3670, 7
        %v3672 = vsub.s32 %v3669, %v3671
        %v3673 = vrot.slane %v3665, %v3672
        %v3675 = vunpack.c.l.s4 1983009808
        %v3676 = vunpack.c.0.s8 %v3675
        %v3677 = vlaneseq
        %v3678 = vshrl.u32 %v3677, 7
        %v3679 = vsub.s32 %v3676, %v3678
        %v3680 = vrot.slane %v3666, %v3679
        %v3681 = vcombine.low %v1528, %v1560
        %v3682 = vcombine.high %v1528, %v1560
        %v3684 = vunpack.c.l.s4 1983009808
        %v3685 = vunpack.c.0.s8 %v3684
        %v3686 = vlaneseq
        %v3687 = vshrl.u32 %v3686, 7
        %v3688 = vsub.s32 %v3685, %v3687
        %v3689 = vrot.slane %v3681, %v3688
        %v3691 = vunpack.c.l.s4 1983009808
        %v3692 = vunpack.c.0.s8 %v3691
        %v3693 = vlaneseq
        %v3694 = vshrl.u32 %v3693, 7
        %v3695 = vsub.s32 %v3692, %v3694
        %v3696 = vrot.slane %v3682, %v3695
        %v3697 = vcombine.low %v1576, %v1608
        %v3698 = vcombine.high %v1576, %v1608
        %v3700 = vunpack.c.l.s4 1983009808
        %v3701 = vunpack.c.0.s8 %v3700
        %v3702 = vlaneseq
        %v3703 = vshrl.u32 %v3702, 7
        %v3704 = vsub.s32 %v3701, %v3703
        %v3705 = vrot.slane %v3697, %v3704
        %v3707 = vunpack.c.l.s4 1983009808
        %v3708 = vunpack.c.0.s8 %v3707
        %v3709 = vlaneseq
        %v3710 = vshrl.u32 %v3709, 7
        %v3711 = vsub.s32 %v3708, %v3710
        %v3712 = vrot.slane %v3698, %v3711
        %v3713 = vcombine.low %v1592, %v1624
        %v3714 = vcombine.high %v1592, %v1624
        %v3716 = vunpack.c.l.s4 1983009808
        %v3717 = vunpack.c.0.s8 %v3716
        %v3718 = vlaneseq
        %v3719 = vshrl.u32 %v3718, 7
        %v3720 = vsub.s32 %v3717, %v3719
        %v3721 = vrot.slane %v3713, %v3720
        %v3723 = vunpack.c.l.s4 1983009808
        %v3724 = vunpack.c.0.s8 %v3723
        %v3725 = vlaneseq
        %v3726 = vshrl.u32 %v3725, 7
        %v3727 = vsub.s32 %v3724, %v3726
        %v3728 = vrot.slane %v3714, %v3727
        %v3729 = vcombine.low %v3673, %v3689
        %v3730 = vcombine.high %v3673, %v3689
        %v3732 = vunpack.c.l.s4 1934713408
        %v3733 = vunpack.c.0.s8 %v3732
        %v3734 = vlaneseq
        %v3735 = vshrl.u32 %v3734, 7
        %v3736 = vsub.s32 %v3733, %v3735
        %v3737 = vrot.slane %v3729, %v3736
        %v3739 = vunpack.c.l.s4 1934713408
        %v3740 = vunpack.c.0.s8 %v3739
        %v3741 = vlaneseq
        %v3742 = vshrl.u32 %v3741, 7
        %v3743 = vsub.s32 %v3740, %v3742
        %v3744 = vrot.slane %v3730, %v3743
        %v3745 = vcombine.low %v3680, %v3696
        %v3746 = vcombine.high %v3680, %v3696
        %v3748 = vunpack.c.l.s4 1934713408
        %v3749 = vunpack.c.0.s8 %v3748
        %v3750 = vlaneseq
        %v3751 = vshrl.u32 %v3750, 7
        %v3752 = vsub.s32 %v3749, %v3751
        %v3753 = vrot.slane %v3745, %v3752
        %v3755 = vunpack.c.l.s4 1934713408
        %v3756 = vunpack.c.0.s8 %v3755
        %v3757 = vlaneseq
        %v3758 = vshrl.u32 %v3757, 7
        %v3759 = vsub.s32 %v3756, %v3758
        %v3760 = vrot.slane %v3746, %v3759
        %v3761 = vcombine.low %v3705, %v3721
        %v3762 = vcombine.high %v3705, %v3721
        %v3764 = vunpack.c.l.s4 1934713408
        %v3765 = vunpack.c.0.s8 %v3764
        %v3766 = vlaneseq
        %v3767 = vshrl.u32 %v3766, 7
        %v3768 = vsub.s32 %v3765, %v3767
        %v3769 = vrot.slane %v3761, %v3768
        %v3771 = vunpack.c.l.s4 1934713408
        %v3772 = vunpack.c.0.s8 %v3771
        %v3773 = vlaneseq
        %v3774 = vshrl.u32 %v3773, 7
        %v3775 = vsub.s32 %v3772, %v3774
        %v3776 = vrot.slane %v3762, %v3775
        %v3777 = vcombine.low %v3712, %v3728
        %v3778 = vcombine.high %v3712, %v3728
        %v3780 = vunpack.c.l.s4 1934713408
        %v3781 = vunpack.c.0.s8 %v3780
        %v3782 = vlaneseq
        %v3783 = vshrl.u32 %v3782, 7
        %v3784 = vsub.s32 %v3781, %v3783
        %v3785 = vrot.slane %v3777, %v3784
        %v3787 = vunpack.c.l.s4 1934713408
        %v3788 = vunpack.c.0.s8 %v3787
        %v3789 = vlaneseq
        %v3790 = vshrl.u32 %v3789, 7
        %v3791 = vsub.s32 %v3788, %v3790
        %v3792 = vrot.slane %v3778, %v3791
        %v3793 = vcombine.low %v3737, %v3769
        %v3794 = vcombine.high %v3737, %v3769
        %v3795 = vcombine.low %v3744, %v3776
        %v3796 = vcombine.high %v3744, %v3776
        %v3797 = vcombine.low %v3753, %v3785
        %v3798 = vcombine.high %v3753, %v3785
        %v3799 = vcombine.low %v3760, %v3792
        %v3800 = vcombine.high %v3760, %v3792
        %3802 = vrot.lane.b32.xlu0 %v1754, 2
        %v3803 = vpop.permute.xlu0 %3802
        %3806 = vrot.lane.b32.xlu0 %v1755, 4
        %v3807 = vpop.permute.xlu0 %3806
        %3810 = vrot.lane.b32.xlu0 %v1756, 6
        %v3811 = vpop.permute.xlu0 %3810
        %3814 = vrot.lane.b32.xlu0 %v1757, 8
        %v3815 = vpop.permute.xlu0 %3814
        %3818 = vrot.lane.b32.xlu0 %v1758, 10
        %v3819 = vpop.permute.xlu0 %3818
        %3822 = vrot.lane.b32.xlu0 %v1759, 12
        %v3823 = vpop.permute.xlu0 %3822
        %3826 = vrot.lane.b32.xlu0 %v1760, 14
        %v3827 = vpop.permute.xlu0 %3826
        %3830 = vrot.lane.b32.xlu0 %v1889, 16
        %v3831 = vpop.permute.xlu0 %3830
        %3834 = vrot.lane.b32.xlu0 %v1890, 18
        %v3835 = vpop.permute.xlu0 %3834
        %3838 = vrot.lane.b32.xlu0 %v1891, 20
        %v3839 = vpop.permute.xlu0 %3838
        %3842 = vrot.lane.b32.xlu0 %v1892, 22
        %v3843 = vpop.permute.xlu0 %3842
        %3846 = vrot.lane.b32.xlu0 %v1893, 24
        %v3847 = vpop.permute.xlu0 %3846
        %3850 = vrot.lane.b32.xlu0 %v1894, 26
        %v3851 = vpop.permute.xlu0 %3850
        %3854 = vrot.lane.b32.xlu0 %v1895, 28
        %v3855 = vpop.permute.xlu0 %3854
        %3858 = vrot.lane.b32.xlu0 %v1896, 30
        %v3859 = vpop.permute.xlu0 %3858
        %3862 = vrot.lane.b32.xlu0 %v2025, 32
        %v3863 = vpop.permute.xlu0 %3862
        %3866 = vrot.lane.b32.xlu0 %v2026, 34
        %v3867 = vpop.permute.xlu0 %3866
        %3870 = vrot.lane.b32.xlu0 %v2027, 36
        %v3871 = vpop.permute.xlu0 %3870
        %3874 = vrot.lane.b32.xlu0 %v2028, 38
        %v3875 = vpop.permute.xlu0 %3874
        %3878 = vrot.lane.b32.xlu0 %v2029, 40
        %v3879 = vpop.permute.xlu0 %3878
        %3882 = vrot.lane.b32.xlu0 %v2030, 42
        %v3883 = vpop.permute.xlu0 %3882
        %3886 = vrot.lane.b32.xlu0 %v2031, 44
        %v3887 = vpop.permute.xlu0 %3886
        %3890 = vrot.lane.b32.xlu0 %v2032, 46
        %v3891 = vpop.permute.xlu0 %3890
        %3894 = vrot.lane.b32.xlu0 %v2161, 48
        %v3895 = vpop.permute.xlu0 %3894
        %3898 = vrot.lane.b32.xlu0 %v2162, 50
        %v3899 = vpop.permute.xlu0 %3898
        %3902 = vrot.lane.b32.xlu0 %v2163, 52
        %v3903 = vpop.permute.xlu0 %3902
        %3906 = vrot.lane.b32.xlu0 %v2164, 54
        %v3907 = vpop.permute.xlu0 %3906
        %3910 = vrot.lane.b32.xlu0 %v2165, 56
        %v3911 = vpop.permute.xlu0 %3910
        %3914 = vrot.lane.b32.xlu0 %v2166, 58
        %v3915 = vpop.permute.xlu0 %3914
        %3918 = vrot.lane.b32.xlu0 %v2167, 60
        %v3919 = vpop.permute.xlu0 %3918
        %3922 = vrot.lane.b32.xlu0 %v2168, 62
        %v3923 = vpop.permute.xlu0 %3922
        %3926 = vrot.lane.b32.xlu0 %v2297, 64
        %v3927 = vpop.permute.xlu0 %3926
        %3930 = vrot.lane.b32.xlu0 %v2298, 66
        %v3931 = vpop.permute.xlu0 %3930
        %3934 = vrot.lane.b32.xlu0 %v2299, 68
        %v3935 = vpop.permute.xlu0 %3934
        %3938 = vrot.lane.b32.xlu0 %v2300, 70
        %v3939 = vpop.permute.xlu0 %3938
        %3942 = vrot.lane.b32.xlu0 %v2301, 72
        %v3943 = vpop.permute.xlu0 %3942
        %3946 = vrot.lane.b32.xlu0 %v2302, 74
        %v3947 = vpop.permute.xlu0 %3946
        %3950 = vrot.lane.b32.xlu0 %v2303, 76
        %v3951 = vpop.permute.xlu0 %3950
        %3954 = vrot.lane.b32.xlu0 %v2304, 78
        %v3955 = vpop.permute.xlu0 %3954
        %3958 = vrot.lane.b32.xlu0 %v2433, 80
        %v3959 = vpop.permute.xlu0 %3958
        %3962 = vrot.lane.b32.xlu0 %v2434, 82
        %v3963 = vpop.permute.xlu0 %3962
        %3966 = vrot.lane.b32.xlu0 %v2435, 84
        %v3967 = vpop.permute.xlu0 %3966
        %3970 = vrot.lane.b32.xlu0 %v2436, 86
        %v3971 = vpop.permute.xlu0 %3970
        %3974 = vrot.lane.b32.xlu0 %v2437, 88
        %v3975 = vpop.permute.xlu0 %3974
        %3978 = vrot.lane.b32.xlu0 %v2438, 90
        %v3979 = vpop.permute.xlu0 %3978
        %3982 = vrot.lane.b32.xlu0 %v2439, 92
        %v3983 = vpop.permute.xlu0 %3982
        %3986 = vrot.lane.b32.xlu0 %v2440, 94
        %v3987 = vpop.permute.xlu0 %3986
        %3990 = vrot.lane.b32.xlu0 %v2569, 96
        %v3991 = vpop.permute.xlu0 %3990
        %3994 = vrot.lane.b32.xlu0 %v2570, 98
        %v3995 = vpop.permute.xlu0 %3994
        %3998 = vrot.lane.b32.xlu0 %v2571, 100
        %v3999 = vpop.permute.xlu0 %3998
        %4002 = vrot.lane.b32.xlu0 %v2572, 102
        %v4003 = vpop.permute.xlu0 %4002
        %4006 = vrot.lane.b32.xlu0 %v2573, 104
        %v4007 = vpop.permute.xlu0 %4006
        %4010 = vrot.lane.b32.xlu0 %v2574, 106
        %v4011 = vpop.permute.xlu0 %4010
        %4014 = vrot.lane.b32.xlu0 %v2575, 108
        %v4015 = vpop.permute.xlu0 %4014
        %4018 = vrot.lane.b32.xlu0 %v2576, 110
        %v4019 = vpop.permute.xlu0 %4018
        %4022 = vrot.lane.b32.xlu0 %v2705, 112
        %v4023 = vpop.permute.xlu0 %4022
        %4026 = vrot.lane.b32.xlu0 %v2706, 114
        %v4027 = vpop.permute.xlu0 %4026
        %4030 = vrot.lane.b32.xlu0 %v2707, 116
        %v4031 = vpop.permute.xlu0 %4030
        %4034 = vrot.lane.b32.xlu0 %v2708, 118
        %v4035 = vpop.permute.xlu0 %4034
        %4038 = vrot.lane.b32.xlu0 %v2709, 120
        %v4039 = vpop.permute.xlu0 %4038
        %4042 = vrot.lane.b32.xlu0 %v2710, 122
        %v4043 = vpop.permute.xlu0 %4042
        %4046 = vrot.lane.b32.xlu0 %v2711, 124
        %v4047 = vpop.permute.xlu0 %4046
        %4050 = vrot.lane.b32.xlu0 %v2712, 126
        %v4051 = vpop.permute.xlu0 %4050
        %4054 = vrot.lane.b32.xlu0 %v2842, 2
        %v4055 = vpop.permute.xlu0 %4054
        %4058 = vrot.lane.b32.xlu0 %v2843, 4
        %v4059 = vpop.permute.xlu0 %4058
        %4062 = vrot.lane.b32.xlu0 %v2844, 6
        %v4063 = vpop.permute.xlu0 %4062
        %4066 = vrot.lane.b32.xlu0 %v2845, 8
        %v4067 = vpop.permute.xlu0 %4066
        %4070 = vrot.lane.b32.xlu0 %v2846, 10
        %v4071 = vpop.permute.xlu0 %4070
        %4074 = vrot.lane.b32.xlu0 %v2847, 12
        %v4075 = vpop.permute.xlu0 %4074
        %4078 = vrot.lane.b32.xlu0 %v2848, 14
        %v4079 = vpop.permute.xlu0 %4078
        %4082 = vrot.lane.b32.xlu0 %v2977, 16
        %v4083 = vpop.permute.xlu0 %4082
        %4086 = vrot.lane.b32.xlu0 %v2978, 18
        %v4087 = vpop.permute.xlu0 %4086
        %4090 = vrot.lane.b32.xlu0 %v2979, 20
        %v4091 = vpop.permute.xlu0 %4090
        %4094 = vrot.lane.b32.xlu0 %v2980, 22
        %v4095 = vpop.permute.xlu0 %4094
        %4098 = vrot.lane.b32.xlu0 %v2981, 24
        %v4099 = vpop.permute.xlu0 %4098
        %4102 = vrot.lane.b32.xlu0 %v2982, 26
        %v4103 = vpop.permute.xlu0 %4102
        %4106 = vrot.lane.b32.xlu0 %v2983, 28
        %v4107 = vpop.permute.xlu0 %4106
        %4110 = vrot.lane.b32.xlu0 %v2984, 30
        %v4111 = vpop.permute.xlu0 %4110
        %4114 = vrot.lane.b32.xlu0 %v3113, 32
        %v4115 = vpop.permute.xlu0 %4114
        %4118 = vrot.lane.b32.xlu0 %v3114, 34
        %v4119 = vpop.permute.xlu0 %4118
        %4122 = vrot.lane.b32.xlu0 %v3115, 36
        %v4123 = vpop.permute.xlu0 %4122
        %4126 = vrot.lane.b32.xlu0 %v3116, 38
        %v4127 = vpop.permute.xlu0 %4126
        %4130 = vrot.lane.b32.xlu0 %v3117, 40
        %v4131 = vpop.permute.xlu0 %4130
        %4134 = vrot.lane.b32.xlu0 %v3118, 42
        %v4135 = vpop.permute.xlu0 %4134
        %4138 = vrot.lane.b32.xlu0 %v3119, 44
        %v4139 = vpop.permute.xlu0 %4138
        %4142 = vrot.lane.b32.xlu0 %v3120, 46
        %v4143 = vpop.permute.xlu0 %4142
        %4146 = vrot.lane.b32.xlu0 %v3249, 48
        %v4147 = vpop.permute.xlu0 %4146
        %4150 = vrot.lane.b32.xlu0 %v3250, 50
        %v4151 = vpop.permute.xlu0 %4150
        %4154 = vrot.lane.b32.xlu0 %v3251, 52
        %v4155 = vpop.permute.xlu0 %4154
        %4158 = vrot.lane.b32.xlu0 %v3252, 54
        %v4159 = vpop.permute.xlu0 %4158
        %4162 = vrot.lane.b32.xlu0 %v3253, 56
        %v4163 = vpop.permute.xlu0 %4162
        %4166 = vrot.lane.b32.xlu0 %v3254, 58
        %v4167 = vpop.permute.xlu0 %4166
        %4170 = vrot.lane.b32.xlu0 %v3255, 60
        %v4171 = vpop.permute.xlu0 %4170
        %4174 = vrot.lane.b32.xlu0 %v3256, 62
        %v4175 = vpop.permute.xlu0 %4174
        %4178 = vrot.lane.b32.xlu0 %v3385, 64
        %v4179 = vpop.permute.xlu0 %4178
        %4182 = vrot.lane.b32.xlu0 %v3386, 66
        %v4183 = vpop.permute.xlu0 %4182
        %4186 = vrot.lane.b32.xlu0 %v3387, 68
        %v4187 = vpop.permute.xlu0 %4186
        %4190 = vrot.lane.b32.xlu0 %v3388, 70
        %v4191 = vpop.permute.xlu0 %4190
        %4194 = vrot.lane.b32.xlu0 %v3389, 72
        %v4195 = vpop.permute.xlu0 %4194
        %4198 = vrot.lane.b32.xlu0 %v3390, 74
        %v4199 = vpop.permute.xlu0 %4198
        %4202 = vrot.lane.b32.xlu0 %v3391, 76
        %v4203 = vpop.permute.xlu0 %4202
        %4206 = vrot.lane.b32.xlu0 %v3392, 78
        %v4207 = vpop.permute.xlu0 %4206
        %4210 = vrot.lane.b32.xlu0 %v3521, 80
        %v4211 = vpop.permute.xlu0 %4210
        %4214 = vrot.lane.b32.xlu0 %v3522, 82
        %v4215 = vpop.permute.xlu0 %4214
        %4218 = vrot.lane.b32.xlu0 %v3523, 84
        %v4219 = vpop.permute.xlu0 %4218
        %4222 = vrot.lane.b32.xlu0 %v3524, 86
        %v4223 = vpop.permute.xlu0 %4222
        %4226 = vrot.lane.b32.xlu0 %v3525, 88
        %v4227 = vpop.permute.xlu0 %4226
        %4230 = vrot.lane.b32.xlu0 %v3526, 90
        %v4231 = vpop.permute.xlu0 %4230
        %4234 = vrot.lane.b32.xlu0 %v3527, 92
        %v4235 = vpop.permute.xlu0 %4234
        %4238 = vrot.lane.b32.xlu0 %v3528, 94
        %v4239 = vpop.permute.xlu0 %4238
        %4242 = vrot.lane.b32.xlu0 %v3657, 96
        %v4243 = vpop.permute.xlu0 %4242
        %4246 = vrot.lane.b32.xlu0 %v3658, 98
        %v4247 = vpop.permute.xlu0 %4246
        %4250 = vrot.lane.b32.xlu0 %v3659, 100
        %v4251 = vpop.permute.xlu0 %4250
        %4254 = vrot.lane.b32.xlu0 %v3660, 102
        %v4255 = vpop.permute.xlu0 %4254
        %4258 = vrot.lane.b32.xlu0 %v3661, 104
        %v4259 = vpop.permute.xlu0 %4258
        %4262 = vrot.lane.b32.xlu0 %v3662, 106
        %v4263 = vpop.permute.xlu0 %4262
        %4266 = vrot.lane.b32.xlu0 %v3663, 108
        %v4267 = vpop.permute.xlu0 %4266
        %4270 = vrot.lane.b32.xlu0 %v3664, 110
        %v4271 = vpop.permute.xlu0 %4270
        %4274 = vrot.lane.b32.xlu0 %v3793, 112
        %v4275 = vpop.permute.xlu0 %4274
        %4278 = vrot.lane.b32.xlu0 %v3794, 114
        %v4279 = vpop.permute.xlu0 %4278
        %4282 = vrot.lane.b32.xlu0 %v3795, 116
        %v4283 = vpop.permute.xlu0 %4282
        %4286 = vrot.lane.b32.xlu0 %v3796, 118
        %v4287 = vpop.permute.xlu0 %4286
        %4290 = vrot.lane.b32.xlu0 %v3797, 120
        %v4291 = vpop.permute.xlu0 %4290
        %4294 = vrot.lane.b32.xlu0 %v3798, 122
        %v4295 = vpop.permute.xlu0 %4294
        %4298 = vrot.lane.b32.xlu0 %v3799, 124
        %v4299 = vpop.permute.xlu0 %4298
        %4302 = vrot.lane.b32.xlu0 %v3800, 126
        %v4303 = vpop.permute.xlu0 %4302
        %vm4305 = vcmask 15360
        %v4306 = vsel %vm4305, %v1753, %v3803
        %vm4307 = vcmask 31744
        %v4308 = vsel %vm4307, %v4306, %v3807
        %vm4309 = vcmask 48128
        %v4310 = vsel %vm4309, %v4308, %v3811
        %vm4311 = vcmask 64512
        %v4312 = vsel %vm4311, %v4310, %v3815
        %vm4313 = vcmask 80896
        %v4314 = vsel %vm4313, %v4312, %v3819
        %vm4315 = vcmask 97280
        %v4316 = vsel %vm4315, %v4314, %v3823
        %vm4317 = vcmask 113664
        %v4318 = vsel %vm4317, %v4316, %v3827
        %vm4319 = vcmask 130048
        %v4320 = vsel %vm4319, %v4318, %v3831
        %vm4321 = vcmask 146432
        %v4322 = vsel %vm4321, %v4320, %v3835
        %vm4323 = vcmask 162816
        %v4324 = vsel %vm4323, %v4322, %v3839
        %vm4325 = vcmask 179200
        %v4326 = vsel %vm4325, %v4324, %v3843
        %vm4327 = vcmask 195584
        %v4328 = vsel %vm4327, %v4326, %v3847
        %vm4329 = vcmask 211968
        %v4330 = vsel %vm4329, %v4328, %v3851
        %vm4331 = vcmask 228352
        %v4332 = vsel %vm4331, %v4330, %v3855
        %vm4333 = vcmask 244736
        %v4334 = vsel %vm4333, %v4332, %v3859
        %vm4335 = vcmask 261120
        %v4336 = vsel %vm4335, %v4334, %v3863
        %vm4337 = vcmask 277504
        %v4338 = vsel %vm4337, %v4336, %v3867
        %vm4339 = vcmask 293888
        %v4340 = vsel %vm4339, %v4338, %v3871
        %vm4341 = vcmask 310272
        %v4342 = vsel %vm4341, %v4340, %v3875
        %vm4343 = vcmask 326656
        %v4344 = vsel %vm4343, %v4342, %v3879
        %vm4345 = vcmask 343040
        %v4346 = vsel %vm4345, %v4344, %v3883
        %vm4347 = vcmask 359424
        %v4348 = vsel %vm4347, %v4346, %v3887
        %vm4349 = vcmask 375808
        %v4350 = vsel %vm4349, %v4348, %v3891
        %vm4351 = vcmask 392192
        %v4352 = vsel %vm4351, %v4350, %v3895
        %vm4353 = vcmask 408576
        %v4354 = vsel %vm4353, %v4352, %v3899
        %vm4355 = vcmask 424960
        %v4356 = vsel %vm4355, %v4354, %v3903
        %vm4357 = vcmask 441344
        %v4358 = vsel %vm4357, %v4356, %v3907
        %vm4359 = vcmask 457728
        %v4360 = vsel %vm4359, %v4358, %v3911
        %vm4361 = vcmask 474112
        %v4362 = vsel %vm4361, %v4360, %v3915
        %vm4363 = vcmask 490496
        %v4364 = vsel %vm4363, %v4362, %v3919
        %vm4365 = vcmask 506880
        %v4366 = vsel %vm4365, %v4364, %v3923
        %vm4367 = vcmask 523264
        %v4368 = vsel %vm4367, %v4366, %v3927
        %vm4369 = vcmask 539648
        %v4370 = vsel %vm4369, %v4368, %v3931
        %vm4371 = vcmask 556032
        %v4372 = vsel %vm4371, %v4370, %v3935
        %vm4373 = vcmask 572416
        %v4374 = vsel %vm4373, %v4372, %v3939
        %vm4375 = vcmask 588800
        %v4376 = vsel %vm4375, %v4374, %v3943
        %vm4377 = vcmask 605184
        %v4378 = vsel %vm4377, %v4376, %v3947
        %vm4379 = vcmask 621568
        %v4380 = vsel %vm4379, %v4378, %v3951
        %vm4381 = vcmask 637952
        %v4382 = vsel %vm4381, %v4380, %v3955
        %vm4383 = vcmask 654336
        %v4384 = vsel %vm4383, %v4382, %v3959
        %vm4385 = vcmask 670720
        %v4386 = vsel %vm4385, %v4384, %v3963
        %vm4387 = vcmask 687104
        %v4388 = vsel %vm4387, %v4386, %v3967
        %vm4389 = vcmask 703488
        %v4390 = vsel %vm4389, %v4388, %v3971
        %vm4391 = vcmask 719872
        %v4392 = vsel %vm4391, %v4390, %v3975
        %vm4393 = vcmask 736256
        %v4394 = vsel %vm4393, %v4392, %v3979
        %vm4395 = vcmask 752640
        %v4396 = vsel %vm4395, %v4394, %v3983
        %vm4397 = vcmask 769024
        %v4398 = vsel %vm4397, %v4396, %v3987
        %vm4399 = vcmask 785408
        %v4400 = vsel %vm4399, %v4398, %v3991
        %vm4401 = vcmask 801792
        %v4402 = vsel %vm4401, %v4400, %v3995
        %vm4403 = vcmask 818176
        %v4404 = vsel %vm4403, %v4402, %v3999
        %vm4405 = vcmask 834560
        %v4406 = vsel %vm4405, %v4404, %v4003
        %vm4407 = vcmask 850944
        %v4408 = vsel %vm4407, %v4406, %v4007
        %vm4409 = vcmask 867328
        %v4410 = vsel %vm4409, %v4408, %v4011
        %vm4411 = vcmask 883712
        %v4412 = vsel %vm4411, %v4410, %v4015
        %vm4413 = vcmask 900096
        %v4414 = vsel %vm4413, %v4412, %v4019
        %vm4415 = vcmask 916480
        %v4416 = vsel %vm4415, %v4414, %v4023
        %vm4417 = vcmask 932864
        %v4418 = vsel %vm4417, %v4416, %v4027
        %vm4419 = vcmask 949248
        %v4420 = vsel %vm4419, %v4418, %v4031
        %vm4421 = vcmask 965632
        %v4422 = vsel %vm4421, %v4420, %v4035
        %vm4423 = vcmask 982016
        %v4424 = vsel %vm4423, %v4422, %v4039
        %vm4425 = vcmask 998400
        %v4426 = vsel %vm4425, %v4424, %v4043
        %vm4427 = vcmask 1014784
        %v4428 = vsel %vm4427, %v4426, %v4047
        %vm4429 = vcmask 1031168
        %v4430 = vsel %vm4429, %v4428, %v4051
        %v4431 = vsel %vm4305, %v2841, %v4055
        %v4432 = vsel %vm4307, %v4431, %v4059
        %v4433 = vsel %vm4309, %v4432, %v4063
        %v4434 = vsel %vm4311, %v4433, %v4067
        %v4435 = vsel %vm4313, %v4434, %v4071
        %v4436 = vsel %vm4315, %v4435, %v4075
        %v4437 = vsel %vm4317, %v4436, %v4079
        %v4438 = vsel %vm4319, %v4437, %v4083
        %v4439 = vsel %vm4321, %v4438, %v4087
        %v4440 = vsel %vm4323, %v4439, %v4091
        %v4441 = vsel %vm4325, %v4440, %v4095
        %v4442 = vsel %vm4327, %v4441, %v4099
        %v4443 = vsel %vm4329, %v4442, %v4103
        %v4444 = vsel %vm4331, %v4443, %v4107
        %v4445 = vsel %vm4333, %v4444, %v4111
        %v4446 = vsel %vm4335, %v4445, %v4115
        %v4447 = vsel %vm4337, %v4446, %v4119
        %v4448 = vsel %vm4339, %v4447, %v4123
        %v4449 = vsel %vm4341, %v4448, %v4127
        %v4450 = vsel %vm4343, %v4449, %v4131
        %v4451 = vsel %vm4345, %v4450, %v4135
        %v4452 = vsel %vm4347, %v4451, %v4139
        %v4453 = vsel %vm4349, %v4452, %v4143
        %v4454 = vsel %vm4351, %v4453, %v4147
        %v4455 = vsel %vm4353, %v4454, %v4151
        %v4456 = vsel %vm4355, %v4455, %v4155
        %v4457 = vsel %vm4357, %v4456, %v4159
        %v4458 = vsel %vm4359, %v4457, %v4163
        %v4459 = vsel %vm4361, %v4458, %v4167
        %v4460 = vsel %vm4363, %v4459, %v4171
        %v4461 = vsel %vm4365, %v4460, %v4175
        %v4462 = vsel %vm4367, %v4461, %v4179
        %v4463 = vsel %vm4369, %v4462, %v4183
        %v4464 = vsel %vm4371, %v4463, %v4187
        %v4465 = vsel %vm4373, %v4464, %v4191
        %v4466 = vsel %vm4375, %v4465, %v4195
        %v4467 = vsel %vm4377, %v4466, %v4199
        %v4468 = vsel %vm4379, %v4467, %v4203
        %v4469 = vsel %vm4381, %v4468, %v4207
        %v4470 = vsel %vm4383, %v4469, %v4211
        %v4471 = vsel %vm4385, %v4470, %v4215
        %v4472 = vsel %vm4387, %v4471, %v4219
        %v4473 = vsel %vm4389, %v4472, %v4223
        %v4474 = vsel %vm4391, %v4473, %v4227
        %v4475 = vsel %vm4393, %v4474, %v4231
        %v4476 = vsel %vm4395, %v4475, %v4235
        %v4477 = vsel %vm4397, %v4476, %v4239
        %v4478 = vsel %vm4399, %v4477, %v4243
        %v4479 = vsel %vm4401, %v4478, %v4247
        %v4480 = vsel %vm4403, %v4479, %v4251
        %v4481 = vsel %vm4405, %v4480, %v4255
        %v4482 = vsel %vm4407, %v4481, %v4259
        %v4483 = vsel %vm4409, %v4482, %v4263
        %v4484 = vsel %vm4411, %v4483, %v4267
        %v4485 = vsel %vm4413, %v4484, %v4271
        %v4486 = vsel %vm4415, %v4485, %v4275
        %v4487 = vsel %vm4417, %v4486, %v4279
        %v4488 = vsel %vm4419, %v4487, %v4283
        %v4489 = vsel %vm4421, %v4488, %v4287
        %v4490 = vsel %vm4423, %v4489, %v4291
        %v4491 = vsel %vm4425, %v4490, %v4295
        %v4492 = vsel %vm4427, %v4491, %v4299
        %v4493 = vsel %vm4429, %v4492, %v4303
        %4494 = vst [vmem:[%s297] sm:$0xff] %v4430
        %4495 = vst [vmem:[%s297 + $0x8] sm:$0xff] %v4493
        %s4496 = sand.u32 %s166, 1
        %s4497 = scalar_lea.sflag [#allocation9], %s4496
        %s4498 = sand.u32 %s166, 1
        %s4499 = smul.addr %s4498, 16
        %s4500 = scalar_lea.vmem [#allocation13], %s4499
        // Predicated region
        $region49: #{tpu_custom_call.1} parent=35 // pred_check
          %p4501 = pneg %p176
        $region50: #{tpu_custom_call.1} parent=35 // pred_check_branch
          %4503 = sbr.rel (%p4501) target = $region52
        $region51: #{tpu_custom_call.1} parent=35 // pred_region
          %s4505 = ssub.s32 256, 256
          %4506 = vsyncadd %s4497, %s4505
          %s4507 = smul.addr %s42, 2
          %s4508 = smul.addr %s43, 2
          %s4509 = sadd.s32 %s4507, %s4508
          %s4510 = smul.addr %s4509, 128
          %s4511 = scalar_lea.hbm %s8, %s4510
          %s4513 = sshll.u32 %s4500, 4
          %s4514 = int_to_ptr.vmem [resolvable:$true] %s4513
          %4516 = dma.vmem_to_hbm [thread:$0]  %s4514, 256, %s4511, %s4497
        $region52: #{tpu_custom_call.1} parent=35 // pred_fallthru
          _
      $region36: #{tpu_custom_call.1} parent=5 // pred_fallthru
        _
      %p4517 = scmp.le.s32.totalorder 2, %s33
      // Predicated region
      $region53: #{tpu_custom_call.1} parent=5 // pred_check
        %p4518 = pneg %p4517
      $region54: #{tpu_custom_call.1} parent=5 // pred_check_branch
        %4520 = sbr.rel (%p4518) target = $region56
      $region55: #{tpu_custom_call.1} parent=5 // pred_region
        %s4521 = ssub.s32 %s33, 2
        // Predicated region
        $region57: #{tpu_custom_call.1} parent=55 // pred_check
          %p4522 = pneg %p182
        $region58: #{tpu_custom_call.1} parent=55 // pred_check_branch
          %4524 = sbr.rel (%p4522) target = $region60
        $region59: #{tpu_custom_call.1} parent=55 // pred_region
          %s4525 = sand.u32 %s167, 1
          %s4526 = scalar_lea.sflag [#allocation9], %s4525
          %s4527 = sand.u32 %s167, 1
          %s4528 = smul.addr %s4527, 16
          %s4529 = scalar_lea.vmem [#allocation13], %s4528
          %4530 = dma.done %s4526, 256
        $region60: #{tpu_custom_call.1} parent=55 // pred_fallthru
          _
      $region56: #{tpu_custom_call.1} parent=5 // pred_fallthru
        _
    $region6: #{tpu_custom_call.1} parent=1 // loop_footer
      %s37 = sadd.s32 1, %s33
    $region7: #{tpu_custom_call.1} parent=1 // loop_footer_branch
      %32 = sbr.rel target = $region3
    $region8: #{tpu_custom_call.1} parent=1 // loop_exit
      _
    %4531 = vsyncpa [#allocation8], 1
    %s4532 = scalar_lea.sflag [#allocation8], 1
    %4533 = vsyncpa %s4532, 1
    %4534 = vsyncpa [#allocation11], 1
    %4535 = vsyncpa [#allocation9], 1
    %s4536 = scalar_lea.sflag [#allocation9], 1
    %4537 = vsyncpa %s4536, 1

// kernel: tpu_custom_call.1
$region0: #{tpu_custom_call.1}
  #allocation0 [shape = 'u32[]', space=smem, size = 0x4, offset = 0x4, fixed_abs, tag = 'smem constant byte address 0x4 - core index']
  #allocation1 [shape = 'u32[144,128]{1,0:T(1,128)}', space=vmem, size = 0x12000, scoped, tag = 'internal scratch']
  #allocation2 [shape = 's32[1]{0}', space=sflag, size = 0x4, scoped, tag = 'scoped memory for tpu_custom_call.1']
  #allocation3 [shape = 'u8[512]{0}', space=smem, size = 0x200, scoped, tag = 'prefetched SMEM operand 0']
  #allocation4 [shape = 'u8[512]{0}', space=smem, size = 0x200, scoped, tag = 'prefetched SMEM operand 1']
  #allocation5 [shape = 'u8[512]{0}', space=smem, size = 0x200, scoped, tag = 'prefetched SMEM operand 2']
  #allocation6 [shape = 'u8[512]{0}', space=smem, size = 0x200, scoped, tag = 'prefetched SMEM operand 3']
  %s0 = inlined_call_operand.hbm [shape: f32[2], index: 0, kind: input, shape index: {}]
  %s1 = inlined_call_operand.vmem [shape: f32[2], index: 1, kind: input, shape index: {}]
  %s2 = inlined_call_operand.hbm [shape: f32[2], index: 2, kind: input, shape index: {}]
  %s3 = inlined_call_operand.hbm [shape: f32[2], index: 3, kind: input, shape index: {}]
  %s4 = inlined_call_operand.hbm [shape: f32[2,8,128], index: 4, kind: input, shape index: {}]
  %s5 = inlined_call_operand.vmem [shape: f32[8,128], index: 5, kind: input, shape index: {}]
  %s6 = inlined_call_operand.hbm [shape: f32[8,128], index: 6, kind: input, shape index: {}]
  %s7 = inlined_call_operand.hbm [shape: f32[8,128], index: 7, kind: input, shape index: {}]
  %s8 = inlined_call_operand.hbm [shape: f32[2,8,128], index: 8, kind: output, shape index: {0}]
  %s9 = inlined_call_operand.hbm [shape: f32[2,8,128], index: 9, kind: output, shape index: {1}]
  %10 = xla_tuple %s8, %s9
  %s11 = sld [smem:[#allocation0]]
  $region69: #{tpu_custom_call.1} parent=0
    _
  %s13 = ssub.s32 1, %s11
  %s14 = scalar_select 0, %s13, %s11
  %16 = dma.hbm_to_smem %s0, 16, [#allocation3], [#allocation2]
  %s17 = sshll.u32 %s1, 4
  %s18 = int_to_ptr.vmem [resolvable:$true] %s17
  %20 = dma.vmem_to_smem %s18, 16, [#allocation4], [#allocation2]
  %22 = dma.hbm_to_smem %s2, 16, [#allocation5], [#allocation2]
  %24 = dma.hbm_to_smem %s3, 16, [#allocation6], [#allocation2]
  %25 = dma.done [#allocation2], 64
  %26 = sfence
  $region1: #{tpu_custom_call.1} parent=0
    #allocation7 [shape = 'u8[8192]{0}', space=vmem, size = 0x2000, scoped, tag = 'input window, operand 4']
    #allocation8 [shape = 's32[2]{0}', space=sflag, size = 0x8, scoped, tag = 'scoped memory for tpu_custom_call.1']
    #allocation9 [shape = 's32[2]{0}', space=sflag, size = 0x8, scoped, tag = 'scoped memory for tpu_custom_call.1']
    #allocation10 [shape = 'u8[4096]{0}', space=vmem, size = 0x1000, scoped, tag = 'input window, operand 6, single buffered']
    #allocation11 [shape = 's32[1]{0}', space=sflag, size = 0x4, scoped, tag = 'scoped memory for tpu_custom_call.1']
    #allocation12 [shape = 'u8[4096]{0}', space=vmem, size = 0x1000, scoped, tag = 'input window, operand 7, single buffered']
    #allocation13 [shape = 'u8[8192]{0}', space=vmem, size = 0x2000, scoped, tag = 'output window, operand 0']
    #allocation14 [shape = 'u8[8192]{0}', space=vmem, size = 0x2000, scoped, tag = 'output window, operand 1']
    #allocation15 [shape = 's32[2]{0}', space=sflag, size = 0x8, scoped, tag = 'scoped memory for tpu_custom_call.1']
    %27 = vsyncpa [#allocation8], 0
    %s28 = scalar_lea.sflag [#allocation8], 1
    %29 = vsyncpa %s28, 0
    %30 = vsyncpa [#allocation11], 0
    %31 = vsyncpa [#allocation9], 0
    %s32 = scalar_lea.sflag [#allocation9], 1
    %33 = vsyncpa %s32, 0
    %34 = vsyncpa [#allocation15], 0
    %s35 = scalar_lea.sflag [#allocation15], 1
    %36 = vsyncpa %s35, 0
    loop: start=0, step=1, limit=4
    $region2: #{tpu_custom_call.1} parent=1 // loop_pre_header
      _
    $region3: #{tpu_custom_call.1} parent=1 // loop_header
      %s38 = sphi 0, %s42
      %p39 = scmp.ge.s32.totalorder %s38, 4
      %s45 = sphi 0, %s57
      %s46 = sphi 0, %s53
      %s47 = sphi 0, %s45
      %s48 = sphi 0, %s46
      %s49 = sphi 0, %s47
      %s50 = sphi 0, %s48
      %s62 = sphi 0, %s64
      %s65 = sphi 0, %s62
      %s66 = sphi 0, %s65
      %s82 = sphi 0, %s66
      %s88 = sphi 0, %s90
      %s91 = sphi 0, %s88
      %s92 = sphi 0, %s91
      %s108 = sphi 0, %s92
      %s114 = sphi 0, %s116
      %s117 = sphi 0, %s114
      %s118 = sphi 0, %s117
      %s134 = sphi 0, %s118
      %s140 = sphi 0, %s142
      %s143 = sphi 0, %s140
      %s144 = sphi 0, %s143
      %s160 = sphi 0, %s144
      %s168 = sphi 0, %s170
      %s171 = sphi 0, %s168
      %s172 = sphi 0, %s171
      %s188 = sphi 0, %s172
      %s196 = sphi 0, %s198
      %s199 = sphi 0, %s196
      %s200 = sphi 0, %s199
      %s216 = sphi 0, %s200
    $region4: #{tpu_custom_call.1} parent=1 // loop_header_branch
      %41 = sbr.rel (%p39) target = $region8
    $region5: #{tpu_custom_call.1} parent=1 // loop_body
      %s43 = ssub.s32 %s38, 1
      %s44 = ssub.s32 %s38, 2
      %s51 = sadd.s32 1, %s46
      %p52 = scmp.ge.s32.totalorder %s51, 2
      %s53 = scalar_select %p52, 0, %s51
      %s54 = sadd.s32 1, %s45
      %s55 = scalar_select %p52, %s54, %s45
      %p56 = scmp.ge.s32.totalorder %s55, 1
      %s57 = scalar_select %p56, 0, %s55
      %s58 = ssub.s32 %s46, %s53
      %s59 = ssub.s32 %s45, %s57
      %s60 = sor.u32 %s58, %s59
      %p61 = scmp.eq.s32.totalorder %s60, 0
      %s63 = sadd.s32 %s62, 1
      %s64 = scalar_select %p61, %s62, %s63
      %p67 = pneg %p61
      %p68 = scmp.eq.s32.totalorder %s38, 1
      %p69 = por %p67, %p68
      %p70 = scmp.ne.s32.totalorder %s62, %s65
      %p71 = scmp.eq.s32.totalorder %s38, 0
      %p72 = por %p70, %p71
      %p73 = scmp.ne.s32.totalorder %s62, %s65
      %p74 = scmp.eq.s32.totalorder %s43, 1
      %p75 = por %p73, %p74
      %p76 = scmp.ne.s32.totalorder %s65, %s66
      %p77 = scmp.eq.s32.totalorder %s43, 0
      %p78 = por %p76, %p77
      %p79 = scmp.ne.s32.totalorder %s65, %s66
      %p80 = scmp.eq.s32.totalorder %s44, 1
      %p81 = por %p79, %p80
      %p83 = scmp.ne.s32.totalorder %s66, %s82
      %p84 = scmp.eq.s32.totalorder %s44, 0
      %p85 = por %p83, %p84
      %s86 = ssub.s32 %s45, %s57
      %p87 = scmp.eq.s32.totalorder %s86, 0
      %s89 = sadd.s32 %s88, 1
      %s90 = scalar_select %p87, %s88, %s89
      %p93 = pneg %p87
      %p94 = scmp.eq.s32.totalorder %s38, 1
      %p95 = por %p93, %p94
      %p96 = scmp.ne.s32.totalorder %s88, %s91
      %p97 = scmp.eq.s32.totalorder %s38, 0
      %p98 = por %p96, %p97
      %p99 = scmp.ne.s32.totalorder %s88, %s91
      %p100 = scmp.eq.s32.totalorder %s43, 1
      %p101 = por %p99, %p100
      %p102 = scmp.ne.s32.totalorder %s91, %s92
      %p103 = scmp.eq.s32.totalorder %s43, 0
      %p104 = por %p102, %p103
      %p105 = scmp.ne.s32.totalorder %s91, %s92
      %p106 = scmp.eq.s32.totalorder %s44, 1
      %p107 = por %p105, %p106
      %p109 = scmp.ne.s32.totalorder %s92, %s108
      %p110 = scmp.eq.s32.totalorder %s44, 0
      %p111 = por %p109, %p110
      %s112 = ssub.s32 %s45, %s57
      %p113 = scmp.eq.s32.totalorder %s112, 0
      %s115 = sadd.s32 %s114, 1
      %s116 = scalar_select %p113, %s114, %s115
      %p119 = pneg %p113
      %p120 = scmp.eq.s32.totalorder %s38, 1
      %p121 = por %p119, %p120
      %p122 = scmp.ne.s32.totalorder %s114, %s117
      %p123 = scmp.eq.s32.totalorder %s38, 0
      %p124 = por %p122, %p123
      %p125 = scmp.ne.s32.totalorder %s114, %s117
      %p126 = scmp.eq.s32.totalorder %s43, 1
      %p127 = por %p125, %p126
      %p128 = scmp.ne.s32.totalorder %s117, %s118
      %p129 = scmp.eq.s32.totalorder %s43, 0
      %p130 = por %p128, %p129
      %p131 = scmp.ne.s32.totalorder %s117, %s118
      %p132 = scmp.eq.s32.totalorder %s44, 1
      %p133 = por %p131, %p132
      %p135 = scmp.ne.s32.totalorder %s118, %s134
      %p136 = scmp.eq.s32.totalorder %s44, 0
      %p137 = por %p135, %p136
      %s138 = ssub.s32 %s45, %s57
      %p139 = scmp.eq.s32.totalorder %s138, 0
      %s141 = sadd.s32 %s140, 1
      %s142 = scalar_select %p139, %s140, %s141
      %p145 = pneg %p139
      %p146 = scmp.eq.s32.totalorder %s38, 1
      %p147 = por %p145, %p146
      %p148 = scmp.ne.s32.totalorder %s140, %s143
      %p149 = scmp.eq.s32.totalorder %s38, 0
      %p150 = por %p148, %p149
      %p151 = scmp.ne.s32.totalorder %s140, %s143
      %p152 = scmp.eq.s32.totalorder %s43, 1
      %p153 = por %p151, %p152
      %p154 = scmp.ne.s32.totalorder %s143, %s144
      %p155 = scmp.eq.s32.totalorder %s43, 0
      %p156 = por %p154, %p155
      %p157 = scmp.ne.s32.totalorder %s143, %s144
      %p158 = scmp.eq.s32.totalorder %s44, 1
      %p159 = por %p157, %p158
      %p161 = scmp.ne.s32.totalorder %s144, %s160
      %p162 = scmp.eq.s32.totalorder %s44, 0
      %p163 = por %p161, %p162
      %s164 = ssub.s32 %s46, %s53
      %s165 = ssub.s32 %s45, %s57
      %s166 = sor.u32 %s164, %s165
      %p167 = scmp.eq.s32.totalorder %s166, 0
      %s169 = sadd.s32 %s168, 1
      %s170 = scalar_select %p167, %s168, %s169
      %p173 = pneg %p167
      %p174 = scmp.eq.s32.totalorder %s38, 1
      %p175 = por %p173, %p174
      %p176 = scmp.ne.s32.totalorder %s168, %s171
      %p177 = scmp.eq.s32.totalorder %s38, 0
      %p178 = por %p176, %p177
      %p179 = scmp.ne.s32.totalorder %s168, %s171
      %p180 = scmp.eq.s32.totalorder %s43, 1
      %p181 = por %p179, %p180
      %p182 = scmp.ne.s32.totalorder %s171, %s172
      %p183 = scmp.eq.s32.totalorder %s43, 0
      %p184 = por %p182, %p183
      %p185 = scmp.ne.s32.totalorder %s171, %s172
      %p186 = scmp.eq.s32.totalorder %s44, 1
      %p187 = por %p185, %p186
      %p189 = scmp.ne.s32.totalorder %s172, %s188
      %p190 = scmp.eq.s32.totalorder %s44, 0
      %p191 = por %p189, %p190
      %s192 = ssub.s32 %s46, %s53
      %s193 = ssub.s32 %s45, %s57
      %s194 = sor.u32 %s192, %s193
      %p195 = scmp.eq.s32.totalorder %s194, 0
      %s197 = sadd.s32 %s196, 1
      %s198 = scalar_select %p195, %s196, %s197
      %p201 = pneg %p195
      %p202 = scmp.eq.s32.totalorder %s38, 1
      %p203 = por %p201, %p202
      %p204 = scmp.ne.s32.totalorder %s196, %s199
      %p205 = scmp.eq.s32.totalorder %s38, 0
      %p206 = por %p204, %p205
      %p207 = scmp.ne.s32.totalorder %s196, %s199
      %p208 = scmp.eq.s32.totalorder %s43, 1
      %p209 = por %p207, %p208
      %p210 = scmp.ne.s32.totalorder %s199, %s200
      %p211 = scmp.eq.s32.totalorder %s43, 0
      %p212 = por %p210, %p211
      %p213 = scmp.ne.s32.totalorder %s199, %s200
      %p214 = scmp.eq.s32.totalorder %s44, 1
      %p215 = por %p213, %p214
      %p217 = scmp.ne.s32.totalorder %s200, %s216
      %p218 = scmp.eq.s32.totalorder %s44, 0
      %p219 = por %p217, %p218
      %p220 = scmp.le.s32.totalorder 1, %s38
      %p221 = scmp.lt.s32.totalorder %s38, 3
      %p222 = pnand %p220, %p221
      %p223 = pneg %p222
      // Predicated region
      $region9: #{tpu_custom_call.1} parent=5 // pred_check
        _
      $region10: #{tpu_custom_call.1} parent=5 // pred_check_branch
        %225 = sbr.rel (%p222) target = $region12
      $region11: #{tpu_custom_call.1} parent=5 // pred_region
        %s226 = ssub.s32 %s38, 1
        // Predicated region
        $region13: #{tpu_custom_call.1} parent=11 // pred_check
          %p227 = pneg %p104
        $region14: #{tpu_custom_call.1} parent=11 // pred_check_branch
          %229 = sbr.rel (%p227) target = $region16
        $region15: #{tpu_custom_call.1} parent=11 // pred_region
          %p230 = scmp.lt.s32.totalorder %s47, 0
          %s231 = scalar_select %p230, %s47, 0
          %s232 = smul.addr %s231, 8
          %s233 = scalar_lea.vmem %s5, %s232
        $region16: #{tpu_custom_call.1} parent=11 // pred_fallthru
          _
        // Predicated region
        $region17: #{tpu_custom_call.1} parent=11 // pred_check
          %p234 = pneg %p130
        $region18: #{tpu_custom_call.1} parent=11 // pred_check_branch
          %236 = sbr.rel (%p234) target = $region20
        $region19: #{tpu_custom_call.1} parent=11 // pred_region
          %s238 = ssub.s32 128, 128
          %239 = vsyncadd [#allocation11], %s238
          %s240 = smul.addr %s47, 128
          %s241 = scalar_lea.hbm %s6, %s240
          %s243 = sshll.u32 [#allocation10], 4
          %s244 = int_to_ptr.vmem [resolvable:$true] %s243
          %246 = dma.hbm_to_vmem [thread:$0]  %s241, 128, %s244, [#allocation11]
        $region20: #{tpu_custom_call.1} parent=11 // pred_fallthru
          _
        // Predicated region
        $region21: #{tpu_custom_call.1} parent=11 // pred_check
          %p247 = pneg %p156
        $region22: #{tpu_custom_call.1} parent=11 // pred_check_branch
          %249 = sbr.rel (%p247) target = $region24
        $region23: #{tpu_custom_call.1} parent=11 // pred_region
          %s251 = ssub.s32 128, 128
          %252 = vsyncadd [#allocation11], %s251
          %s253 = smul.addr %s47, 128
          %s254 = scalar_lea.hbm %s7, %s253
          %s256 = sshll.u32 [#allocation12], 4
          %s257 = int_to_ptr.vmem [resolvable:$true] %s256
          %259 = dma.hbm_to_vmem [thread:$0]  %s254, 128, %s257, [#allocation11]
        $region24: #{tpu_custom_call.1} parent=11 // pred_fallthru
          _
      $region12: #{tpu_custom_call.1} parent=5 // pred_fallthru
        _
      %p260 = scmp.lt.s32.totalorder %s38, 2
      // Predicated region
      $region25: #{tpu_custom_call.1} parent=5 // pred_check
        %p261 = pneg %p260
      $region26: #{tpu_custom_call.1} parent=5 // pred_check_branch
        %263 = sbr.rel (%p261) target = $region28
      $region27: #{tpu_custom_call.1} parent=5 // pred_region
        // Predicated region
        $region29: #{tpu_custom_call.1} parent=27 // pred_check
          %p264 = pneg %p72
        $region30: #{tpu_custom_call.1} parent=27 // pred_check_branch
          %266 = sbr.rel (%p264) target = $region32
        $region31: #{tpu_custom_call.1} parent=27 // pred_region
          %s267 = sand.u32 %s62, 1
          %s268 = scalar_lea.sflag [#allocation8], %s267
          %s269 = sand.u32 %s62, 1
          %s270 = smul.addr %s269, 8
          %s271 = scalar_lea.vmem [#allocation7], %s270
          %s273 = ssub.s32 128, 128
          %274 = vsyncadd %s268, %s273
          %s275 = sadd.s32 %s45, %s46
          %s276 = smul.addr %s275, 128
          %s277 = scalar_lea.hbm %s4, %s276
          %s279 = sshll.u32 %s271, 4
          %s280 = int_to_ptr.vmem [resolvable:$true] %s279
          %282 = dma.hbm_to_vmem [thread:$0]  %s277, 128, %s280, %s268
        $region32: #{tpu_custom_call.1} parent=27 // pred_fallthru
          _
      $region28: #{tpu_custom_call.1} parent=5 // pred_fallthru
        _
      %p283 = scmp.le.s32.totalorder 1, %s38
      %p284 = scmp.lt.s32.totalorder %s38, 3
      %p285 = pnand %p283, %p284
      %p286 = pneg %p285
      // Predicated region
      $region33: #{tpu_custom_call.1} parent=5 // pred_check
        _
      $region34: #{tpu_custom_call.1} parent=5 // pred_check_branch
        %288 = sbr.rel (%p285) target = $region36
      $region35: #{tpu_custom_call.1} parent=5 // pred_region
        %s289 = ssub.s32 %s38, 1
        %s290 = sand.u32 %s65, 1
        %s291 = scalar_lea.sflag [#allocation8], %s290
        %s292 = sand.u32 %s65, 1
        %s293 = smul.addr %s292, 8
        %s294 = scalar_lea.vmem [#allocation7], %s293
        // Predicated region
        $region37: #{tpu_custom_call.1} parent=35 // pred_check
          %p295 = pneg %p78
        $region38: #{tpu_custom_call.1} parent=35 // pred_check_branch
          %297 = sbr.rel (%p295) target = $region40
        $region39: #{tpu_custom_call.1} parent=35 // pred_region
          %298 = dma.done %s291, 128
        $region40: #{tpu_custom_call.1} parent=35 // pred_fallthru
          _
        // Predicated region
        $region41: #{tpu_custom_call.1} parent=35 // pred_check
          %p299 = pneg %p130
        $region42: #{tpu_custom_call.1} parent=35 // pred_check_branch
          %301 = sbr.rel (%p299) target = $region44
        $region43: #{tpu_custom_call.1} parent=35 // pred_region
          %302 = dma.done [#allocation11], 128
        $region44: #{tpu_custom_call.1} parent=35 // pred_fallthru
          _
        // Predicated region
        $region45: #{tpu_custom_call.1} parent=35 // pred_check
          %p303 = pneg %p156
        $region46: #{tpu_custom_call.1} parent=35 // pred_check_branch
          %305 = sbr.rel (%p303) target = $region48
        $region47: #{tpu_custom_call.1} parent=35 // pred_region
          %306 = dma.done [#allocation11], 128
        $region48: #{tpu_custom_call.1} parent=35 // pred_fallthru
          _
        %s307 = sand.u32 %s65, 1
        %s308 = scalar_lea.sflag [#allocation8], %s307
        %s309 = sand.u32 %s65, 1
        %s310 = smul.addr %s309, 8
        %s311 = scalar_lea.vmem [#allocation7], %s310
        %p312 = pneg %p78
        %p313 = pneg %p75
        %p314 = scmp.lt.s32.totalorder %s47, 0
        %s315 = scalar_select %p314, %s47, 0
        %s316 = smul.addr %s315, 8
        %s317 = scalar_lea.vmem %s5, %s316
        %p318 = pneg %p104
        %p319 = pneg %p101
        %p320 = pneg %p130
        %p321 = pneg %p127
        %p322 = pneg %p156
        %p323 = pneg %p153
        %p324 = pneg %p184
        %p325 = pneg %p181
        %s326 = sand.u32 %s171, 1
        %s327 = scalar_lea.sflag [#allocation9], %s326
        %s328 = sand.u32 %s171, 1
        %s329 = smul.addr %s328, 8
        %s330 = scalar_lea.vmem [#allocation13], %s329
        %p331 = pneg %p212
        %p332 = pneg %p209
        %s333 = sand.u32 %s199, 1
        %s334 = scalar_lea.sflag [#allocation15], %s333
        %s335 = sand.u32 %s199, 1
        %s336 = smul.addr %s335, 8
        %s337 = scalar_lea.vmem [#allocation14], %s336
        %p338 = scmp.lt.s32.totalorder %s47, 0
        %s339 = scalar_select %p338, %s47, 0
        %s340 = smul.addr %s339, 8
        %s341 = scalar_lea.vmem %s5, %s340
        %v342 = vld [vmem:[%s294] sm:$0xff]
        %v343 = vld [vmem:[%s341] sm:$0xff]
        %v344 = vld [vmem:[#allocation10] sm:$0xff]
        %v345 = vld [vmem:[#allocation12] sm:$0xff]
        %s346 = sld [smem:[#allocation3 + %s48]]
        %s347 = sld [smem:[#allocation4 + %s48]]
        %s348 = sld [smem:[#allocation5 + %s48]]
        %s349 = sld [smem:[#allocation6 + %s48]]
        %v350 = vmul.f32 %v343, %v342
        %v351 = vstv %s346
        %v352 = vadd.f32 %v350, %v351
        %v353 = vmul.f32 %v344, %v342
        %v354 = vstv %s347
        %v355 = vadd.f32 %v353, %v354
        %v356 = vmul.f32 %v345, %v342
        %v357 = vstv %s348
        %v358 = vmul.f32 %v352, %v357
        %v359 = vstv %s349
        %v360 = vmul.f32 %v355, %v359
        %v361 = vsub.f32 %v358, %v360
        %v362 = vmul.f32 %v352, %v359
        %v363 = vmul.f32 %v355, %v357
        %v364 = vadd.f32 %v362, %v363
        %v365 = vmul.f32 %v361, %v361
        %v366 = vmul.f32 %v364, %v364
        %v367 = vadd.f32 %v365, %v366
        %v368 = vmul.f32 %v356, %v356
        %v369 = vadd.f32 %v367, %v368
        %v370 = vrsqrt.pop %v369
        %v371 = vmul.f32 %v369, %v370
        %vm372 = vcmp.eq.f32.partialorder %v369, inf
        %v373 = vsel %vm372, %v369, %v371
        %vm374 = vcmp.eq.f32.partialorder %v369, 0.0
        %v375 = vand.u32 %v369, 2147483648
        %v376 = vsel %vm374, %v375, %v373
        %v377 = vmul.f32 %v376, 2e-05
        %v378 = vadd.f32 %v367, %v377
        %v379 = vadd.f32 %v378, 1e-10
        %v380 = vrsqrt.pop %v379
        %v381 = vmul.f32 %v379, %v380
        %vm382 = vcmp.eq.f32.partialorder %v379, inf
        %v383 = vsel %vm382, %v379, %v381
        %vm384 = vcmp.eq.f32.partialorder %v379, 0.0
        %v385 = vand.u32 %v379, 2147483648
        %v386 = vsel %vm384, %v385, %v383
        %v387 = vand.u32 2147483647, %v356
        %v388 = vmul.f32 %v386, 2.4142137
        %vm389 = vcmp.gt.f32.partialorder %v387, %v388
        %v390 = vmul.f32 %v386, 0.41421357
        %vm391 = vcmp.gt.f32.partialorder %v387, %v390
        %v392 = vsub.f32 0.0, %v386
        %v393 = vsub.f32 %v387, %v386
        %v394 = vsel %vm391, %v393, %v387
        %v395 = vsel %vm389, %v392, %v394
        %v396 = vadd.f32 %v387, %v386
        %v397 = vsel %vm391, %v396, %v386
        %v398 = vsel %vm389, %v387, %v397
        %v399 = vrcp.pop %v398
        %v400 = vmul.f32 %v398, %v399
        %v401 = vsub.f32 2.0, %v400
        %v402 = vmul.f32 %v399, %v401
        %v403 = vmul.f32 %v395, %v402
        %v404 = vsel %vm391, 0.7853982, 0.0
        %v405 = vsel %vm389, 1.5707964, %v404
        %v406 = vmul.f32 %v403, %v403
        %v407 = vmul.f32 %v406, 0.080537446
        %v408 = vsub.f32 %v407, 0.13877685
        %v409 = vmul.f32 %v408, %v406
        %v410 = vadd.f32 %v409, 0.19977711
        %v411 = vmul.f32 %v410, %v406
        %v412 = vsub.f32 %v411, 0.3333295
        %v413 = vmul.f32 %v412, %v406
        %v414 = vmul.f32 %v413, %v403
        %v415 = vadd.f32 %v414, %v403
        %v416 = vadd.f32 %v405, %v415
        %vm417 = vcmp.lt.f32.partialorder %v356, 0.0
        %v418 = vsub.f32 0.0, %v416
        %v419 = vsel %vm417, %v418, %v416
        %v420 = vmul.f32 %v419, -0.63661975
        %v421 = vadd.f32 %v361, 1e-05
        %v422 = vand.u32 2147483647, %v364
        %v423 = vand.u32 2147483647, %v421
        %v424 = vmul.f32 %v423, 2.4142137
        %vm425 = vcmp.gt.f32.partialorder %v422, %v424
        %v426 = vmul.f32 %v423, 0.41421357
        %vm427 = vcmp.gt.f32.partialorder %v422, %v426
        %v428 = vsub.f32 0.0, %v423
        %v429 = vsub.f32 %v422, %v423
        %v430 = vsel %vm427, %v429, %v422
        %v431 = vsel %vm425, %v428, %v430
        %v432 = vadd.f32 %v422, %v423
        %v433 = vsel %vm427, %v432, %v423
        %v434 = vsel %vm425, %v422, %v433
        %v435 = vrcp.pop %v434
        %v436 = vmul.f32 %v434, %v435
        %v437 = vsub.f32 2.0, %v436
        %v438 = vmul.f32 %v435, %v437
        %v439 = vmul.f32 %v431, %v438
        %v440 = vsel %vm427, 0.7853982, 0.0
        %v441 = vsel %vm425, 1.5707964, %v440
        %v442 = vmul.f32 %v439, %v439
        %v443 = vmul.f32 %v442, 0.080537446
        %v444 = vsub.f32 %v443, 0.13877685
        %v445 = vmul.f32 %v444, %v442
        %v446 = vadd.f32 %v445, 0.19977711
        %v447 = vmul.f32 %v446, %v442
        %v448 = vsub.f32 %v447, 0.3333295
        %v449 = vmul.f32 %v448, %v442
        %v450 = vmul.f32 %v449, %v439
        %v451 = vadd.f32 %v450, %v439
        %v452 = vadd.f32 %v441, %v451
        %vm453 = vcmp.lt.f32.partialorder %v364, 0.0
        %vm454 = vcmp.lt.f32.partialorder %v421, 0.0
        %vm455 = vmxor %vm453, %vm454
        %v456 = vsub.f32 0.0, %v452
        %v457 = vsel %vm455, %v456, %v452
        %vm458 = vcmp.lt.f32.partialorder %v361, 0.0
        %vm459 = vcmp.ge.f32.partialorder %v364, 0.0
        %v460 = vsel %vm459, 3.1415927, -3.1415927
        %v461 = vsel %vm458, %v460, 0.0
        %v462 = vadd.f32 %v457, %v461
        %v463 = vmul.f32 %v462, 0.31830987
        %464 = vst [vmem:[%s330] sm:$0xff] %v420
        %465 = vst [vmem:[%s337] sm:$0xff] %v463
        %s466 = sand.u32 %s171, 1
        %s467 = scalar_lea.sflag [#allocation9], %s466
        %s468 = sand.u32 %s171, 1
        %s469 = smul.addr %s468, 8
        %s470 = scalar_lea.vmem [#allocation13], %s469
        %s471 = sand.u32 %s199, 1
        %s472 = scalar_lea.sflag [#allocation15], %s471
        %s473 = sand.u32 %s199, 1
        %s474 = smul.addr %s473, 8
        %s475 = scalar_lea.vmem [#allocation14], %s474
        // Predicated region
        $region49: #{tpu_custom_call.1} parent=35 // pred_check
          %p476 = pneg %p181
        $region50: #{tpu_custom_call.1} parent=35 // pred_check_branch
          %478 = sbr.rel (%p476) target = $region52
        $region51: #{tpu_custom_call.1} parent=35 // pred_region
          %s480 = ssub.s32 128, 128
          %481 = vsyncadd %s467, %s480
          %s482 = sadd.s32 %s47, %s48
          %s483 = smul.addr %s482, 128
          %s484 = scalar_lea.hbm %s8, %s483
          %s486 = sshll.u32 %s470, 4
          %s487 = int_to_ptr.vmem [resolvable:$true] %s486
          %489 = dma.vmem_to_hbm [thread:$0]  %s487, 128, %s484, %s467
        $region52: #{tpu_custom_call.1} parent=35 // pred_fallthru
          _
        // Predicated region
        $region53: #{tpu_custom_call.1} parent=35 // pred_check
          %p490 = pneg %p209
        $region54: #{tpu_custom_call.1} parent=35 // pred_check_branch
          %492 = sbr.rel (%p490) target = $region56
        $region55: #{tpu_custom_call.1} parent=35 // pred_region
          %s494 = ssub.s32 128, 128
          %495 = vsyncadd %s472, %s494
          %s496 = sadd.s32 %s47, %s48
          %s497 = smul.addr %s496, 128
          %s498 = scalar_lea.hbm %s9, %s497
          %s500 = sshll.u32 %s475, 4
          %s501 = int_to_ptr.vmem [resolvable:$true] %s500
          %503 = dma.vmem_to_hbm [thread:$0]  %s501, 128, %s498, %s472
        $region56: #{tpu_custom_call.1} parent=35 // pred_fallthru
          _
      $region36: #{tpu_custom_call.1} parent=5 // pred_fallthru
        _
      %p504 = scmp.le.s32.totalorder 2, %s38
      // Predicated region
      $region57: #{tpu_custom_call.1} parent=5 // pred_check
        %p505 = pneg %p504
      $region58: #{tpu_custom_call.1} parent=5 // pred_check_branch
        %507 = sbr.rel (%p505) target = $region60
      $region59: #{tpu_custom_call.1} parent=5 // pred_region
        %s508 = ssub.s32 %s38, 2
        // Predicated region
        $region61: #{tpu_custom_call.1} parent=59 // pred_check
          %p509 = pneg %p187
        $region62: #{tpu_custom_call.1} parent=59 // pred_check_branch
          %511 = sbr.rel (%p509) target = $region64
        $region63: #{tpu_custom_call.1} parent=59 // pred_region
          %s512 = sand.u32 %s172, 1
          %s513 = scalar_lea.sflag [#allocation9], %s512
          %s514 = sand.u32 %s172, 1
          %s515 = smul.addr %s514, 8
          %s516 = scalar_lea.vmem [#allocation13], %s515
          %517 = dma.done %s513, 128
        $region64: #{tpu_custom_call.1} parent=59 // pred_fallthru
          _
        // Predicated region
        $region65: #{tpu_custom_call.1} parent=59 // pred_check
          %p518 = pneg %p215
        $region66: #{tpu_custom_call.1} parent=59 // pred_check_branch
          %520 = sbr.rel (%p518) target = $region68
        $region67: #{tpu_custom_call.1} parent=59 // pred_region
          %s521 = sand.u32 %s200, 1
          %s522 = scalar_lea.sflag [#allocation15], %s521
          %s523 = sand.u32 %s200, 1
          %s524 = smul.addr %s523, 8
          %s525 = scalar_lea.vmem [#allocation14], %s524
          %526 = dma.done %s522, 128
        $region68: #{tpu_custom_call.1} parent=59 // pred_fallthru
          _
      $region60: #{tpu_custom_call.1} parent=5 // pred_fallthru
        _
    $region6: #{tpu_custom_call.1} parent=1 // loop_footer
      %s42 = sadd.s32 1, %s38
    $region7: #{tpu_custom_call.1} parent=1 // loop_footer_branch
      %37 = sbr.rel target = $region3
    $region8: #{tpu_custom_call.1} parent=1 // loop_exit
      _
    %527 = vsyncpa [#allocation8], 1
    %s528 = scalar_lea.sflag [#allocation8], 1
    %529 = vsyncpa %s528, 1
    %530 = vsyncpa [#allocation11], 1
    %531 = vsyncpa [#allocation9], 1
    %s532 = scalar_lea.sflag [#allocation9], 1
    %533 = vsyncpa %s532, 1
    %534 = vsyncpa [#allocation15], 1
    %s535 = scalar_lea.sflag [#allocation15], 1
    %536 = vsyncpa %s535, 1

</llo_original>
